<compile_context>
chip_gen: v6e
topology: v6e:2x2x1
jax: 0.10.0
libtpu: 0.0.40
codegen_flags: <defaults>
</compile_context>

<pallas_src>
import jax
import jax.numpy as jnp
from jax import lax
from jax.experimental import pallas as pl
from jax.experimental.pallas import tpu as pltpu


def _double_conv_kernel(x_ref, w1_ref, s1_ref, b1_ref, w2_ref, s2_ref, b2_ref,
                        o_ref, xpad, mpad, col1, col2):
    """Fused (conv3x3 -> BN -> ReLU) x 2 for one batch element.

    x_ref : (1, H, W, C_in)   input tile (f32, VMEM)
    w1_ref: (9*C_in,  C_mid)  conv1 weights, HWIO flattened to (tap*C_in+c, co), bf16
    w2_ref: (9*C_mid, C_out)  conv2 weights, bf16
    s*_ref/b*_ref: (1, C)     folded eval-mode BatchNorm scale / bias (f32)
    o_ref : (1, H*W, C_out)   output tile
    xpad  : VMEM (H+2, W+2, C_in)  f32   zero-padded input
    mpad  : VMEM (H+2, W+2, C_mid) f32   zero-padded mid activation (never in HBM)
    col1  : VMEM (H*W, 9*C_in)  bf16     im2col slab, stage 1
    col2  : VMEM (H*W, 9*C_mid) bf16     im2col slab, stage 2
    """
    H = x_ref.shape[1]
    W = x_ref.shape[2]
    C_in = x_ref.shape[3]
    C_mid = w1_ref.shape[1]
    C_out = w2_ref.shape[1]

    def im2col(pad_ref, col_ref, C):
        # Scatter the 9 shifted 3x3 taps into one (H*W, 9*C) slab so the conv
        # becomes a single MXU matmul with K = 9*C (cast to bf16 here).
        xp = pad_ref[...]                                   # (H+2, W+2, C) f32
        for dy in range(3):
            for dx in range(3):
                tap = dy * 3 + dx
                # W % 8 == 0 makes this reshape layout-preserving.
                patch = xp[dy:dy + H, dx:dx + W, :].reshape(H * W, C)
                col_ref[:, tap * C:(tap + 1) * C] = patch.astype(jnp.bfloat16)

    # ---- stage 1: conv3x3(C_in -> C_mid) + BN + ReLU --------------------
    # Zero halo built in VMEM (no host-side jnp.pad). Zeroed every grid step so
    # correctness does not depend on scratch persistence across cores.
    xpad[...] = jnp.zeros_like(xpad)
    xpad[1:H + 1, 1:W + 1, :] = x_ref[0]
    im2col(xpad, col1, C_in)
    y1 = jnp.dot(col1[...], w1_ref[...], preferred_element_type=jnp.float32)
    y1 = jnp.maximum(y1 * s1_ref[...] + b1_ref[...], 0.0)   # (H*W, C_mid) f32

    # ---- stage 2: conv3x3(C_mid -> C_out) + BN + ReLU -------------------
    # Mid activation stays in VMEM (fusion): pad it in place and reuse im2col.
    mpad[...] = jnp.zeros_like(mpad)
    mpad[1:H + 1, 1:W + 1, :] = y1.reshape(H, W, C_mid)
    im2col(mpad, col2, C_mid)
    y2 = jnp.dot(col2[...], w2_ref[...], preferred_element_type=jnp.float32)
    y2 = jnp.maximum(y2 * s2_ref[...] + b2_ref[...], 0.0)   # (H*W, C_out) f32

    o_ref[0] = y2.astype(o_ref.dtype)


def double_conv_nhwc(x_nhwc, params):
    """Fused DoubleConv on NHWC input via one Pallas call. Returns NHWC."""
    N, H, W, C_in = x_nhwc.shape
    C_mid = params["w1"].shape[-1]
    C_out = params["w2"].shape[-1]
    assert W % 8 == 0, "W must be a multiple of 8 (layout-preserving reshapes)"

    # Weights: HWIO -> (9*C, C_out), bf16 for the MXU. BN: folded scale/bias.
    w1 = params["w1"].reshape(9 * C_in, C_mid).astype(jnp.bfloat16)
    w2 = params["w2"].reshape(9 * C_mid, C_out).astype(jnp.bfloat16)
    s1 = params["bn1_scale"].reshape(1, C_mid).astype(jnp.float32)
    b1 = params["bn1_bias"].reshape(1, C_mid).astype(jnp.float32)
    s2 = params["bn2_scale"].reshape(1, C_out).astype(jnp.float32)
    b2 = params["bn2_bias"].reshape(1, C_out).astype(jnp.float32)

    out = pl.pallas_call(
        _double_conv_kernel,
        out_shape=jax.ShapeDtypeStruct((N, H * W, C_out), x_nhwc.dtype),
        grid_spec=pltpu.PrefetchScalarGridSpec(
            num_scalar_prefetch=0,
            grid=(N,),
            in_specs=[
                pl.BlockSpec((1, H, W, C_in), lambda n: (n, 0, 0, 0)),
                pl.BlockSpec((9 * C_in, C_mid), lambda n: (0, 0)),
                pl.BlockSpec((1, C_mid), lambda n: (0, 0)),
                pl.BlockSpec((1, C_mid), lambda n: (0, 0)),
                pl.BlockSpec((9 * C_mid, C_out), lambda n: (0, 0)),
                pl.BlockSpec((1, C_out), lambda n: (0, 0)),
                pl.BlockSpec((1, C_out), lambda n: (0, 0)),
            ],
            out_specs=pl.BlockSpec((1, H * W, C_out), lambda n: (n, 0, 0)),
            scratch_shapes=[
                pltpu.VMEM((H + 2, W + 2, C_in), jnp.float32),   # padded input
                pltpu.VMEM((H + 2, W + 2, C_mid), jnp.float32),  # padded mid act
                pltpu.VMEM((H * W, 9 * C_in), jnp.bfloat16),     # im2col stage 1
                pltpu.VMEM((H * W, 9 * C_mid), jnp.bfloat16),    # im2col stage 2
            ],
        ),
        compiler_params=pltpu.CompilerParams(
            dimension_semantics=("parallel",)),
    )(x_nhwc, w1, s1, b1, w2, s2, b2)

    return out.reshape(N, H, W, C_out)


@jax.jit
def double_conv_forward(x_nchw, params):
    """DoubleConv.forward with PyTorch NCHW in/out (transposes at boundary only)."""
    x = jnp.transpose(x_nchw, (0, 2, 3, 1))          # NCHW -> NHWC
    y = double_conv_nhwc(x, params)
    return jnp.transpose(y, (0, 3, 1, 2))            # NHWC -> NCHW


def make_double_conv_params(key, in_channels, out_channels, mid_channels=None):
    """Deterministic parameter init matching DoubleConv's __init__ shapes."""
    if not mid_channels:
        mid_channels = out_channels
    k1, k2 = jax.random.split(key)
    eps = 1e-5

    def conv_w(k, cin, cout):
        # He-style scale; stored HWIO = (3, 3, cin, cout)
        fan_in = cin * 9
        return (jax.random.normal(k, (3, 3, cin, cout), jnp.float32)
                * (2.0 / fan_in) ** 0.5)

    def bn_folded(c):
        gamma = jnp.ones((c,), jnp.float32)
        beta = jnp.zeros((c,), jnp.float32)
        running_mean = jnp.zeros((c,), jnp.float32)
        running_var = jnp.ones((c,), jnp.float32)
        scale = gamma / jnp.sqrt(running_var + eps)
        bias = beta - running_mean * scale
        return scale, bias

    s1, b1 = bn_folded(mid_channels)
    s2, b2 = bn_folded(out_channels)
    return {
        "w1": conv_w(k1, in_channels, mid_channels),
        "bn1_scale": s1, "bn1_bias": b1,
        "w2": conv_w(k2, mid_channels, out_channels),
        "bn2_scale": s2, "bn2_bias": b2,
    }


def _reference(x_nchw, params):
    """Plain-JAX reference mirroring the kernel's bf16 MXU operands / f32 acc."""
    x = jnp.transpose(x_nchw, (0, 2, 3, 1))

    def block(x, w, scale, bias):
        y = lax.conv_general_dilated(
            x.astype(jnp.bfloat16), w.astype(jnp.bfloat16),
            window_strides=(1, 1), padding="SAME",
            dimension_numbers=("NHWC", "HWIO", "NHWC"),
            preferred_element_type=jnp.float32)
        y = y * scale[None, None, None, :] + bias[None, None, None, :]
        return jnp.maximum(y, 0.0)

    y = block(x, params["w1"], params["bn1_scale"], params["bn1_bias"])
    y = block(y, params["w2"], params["bn2_scale"], params["bn2_bias"])
    return jnp.transpose(y, (0, 3, 1, 2))


if __name__ == "__main__":
    key = jax.random.PRNGKey(0)
    kx, kp = jax.random.split(key)

    N, C_in, H, W = 2, 4, 16, 16
    C_out = 8
    x = jax.random.normal(kx, (N, C_in, H, W), jnp.float32)
    params = make_double_conv_params(kp, C_in, C_out)

    out = jax.block_until_ready(double_conv_forward(x, params))
    ref = _reference(x, params)

    assert out.shape == (N, C_out, H, W), out.shape
    assert jnp.allclose(out, ref, atol=1e-2, rtol=1e-2), "mismatch vs reference"

    print("KERNEL_OK")
</pallas_src>

<mosaic_0001>
module attributes {stable_mosaic.version = 11 : i64} {
  func.func @_double_conv_kernel(%arg0: i32, %arg1: memref<1x16x16x4xf32, #tpu.memory_space<vmem>>, %arg2: memref<36x8xbf16, #tpu.memory_space<vmem>>, %arg3: memref<1x8xf32, #tpu.memory_space<vmem>>, %arg4: memref<1x8xf32, #tpu.memory_space<vmem>>, %arg5: memref<72x8xbf16, #tpu.memory_space<vmem>>, %arg6: memref<1x8xf32, #tpu.memory_space<vmem>>, %arg7: memref<1x8xf32, #tpu.memory_space<vmem>>, %arg8: memref<1x256x8xf32, #tpu.memory_space<vmem>>, %arg9: memref<18x18x4xf32, #tpu.memory_space<vmem>>, %arg10: memref<18x18x8xf32, #tpu.memory_space<vmem>>, %arg11: memref<256x36xbf16, #tpu.memory_space<vmem>>, %arg12: memref<256x72xbf16, #tpu.memory_space<vmem>>) attributes {dimension_semantics = [#tpu.dimension_semantics<parallel>], iteration_bounds = array<i64: 2>, scalar_prefetch = 0 : i64, scratch_operands = 4 : i64, tpu.core_type = #tpu.core_type<tc>, window_params = [{transform_indices = @transform_0, window_bounds = array<i64: 1, 16, 16, 4>}, {pipeline_mode = #tpu.pipeline_mode<synchronous>, transform_indices = @transform_1, window_bounds = array<i64: 36, 8>}, {pipeline_mode = #tpu.pipeline_mode<synchronous>, transform_indices = @transform_2, window_bounds = array<i64: 1, 8>}, {pipeline_mode = #tpu.pipeline_mode<synchronous>, transform_indices = @transform_3, window_bounds = array<i64: 1, 8>}, {pipeline_mode = #tpu.pipeline_mode<synchronous>, transform_indices = @transform_4, window_bounds = array<i64: 72, 8>}, {pipeline_mode = #tpu.pipeline_mode<synchronous>, transform_indices = @transform_5, window_bounds = array<i64: 1, 8>}, {pipeline_mode = #tpu.pipeline_mode<synchronous>, transform_indices = @transform_6, window_bounds = array<i64: 1, 8>}, {transform_indices = @transform_7, window_bounds = array<i64: 1, 256, 8>}]} {
    %cst = arith.constant 0.000000e+00 : f32
    %0 = vector.broadcast %cst : f32 to vector<18x18x4xf32>
    %c0 = arith.constant 0 : index
    %c0_0 = arith.constant 0 : index
    %c0_1 = arith.constant 0 : index
    %1 = vector.load %arg9[%c0, %c0_0, %c0_1] : memref<18x18x4xf32, #tpu.memory_space<vmem>>, vector<18x18x4xf32>
    tpu.vector_store %arg9[%c0, %c0_0, %c0_1], %0 {strides = array<i32>} : memref<18x18x4xf32, #tpu.memory_space<vmem>>, vector<18x18x4xf32>,
    %c0_2 = arith.constant 0 : index
    %c0_3 = arith.constant 0 : index
    %c0_4 = arith.constant 0 : index
    %c0_5 = arith.constant 0 : index
    %2 = vector.load %arg1[%c0_2, %c0_3, %c0_4, %c0_5] : memref<1x16x16x4xf32, #tpu.memory_space<vmem>>, vector<1x16x16x4xf32>
    %3 = vector.shape_cast %2 : vector<1x16x16x4xf32> to vector<16x16x4xf32>
    %c1 = arith.constant 1 : index
    %c1_6 = arith.constant 1 : index
    %c0_7 = arith.constant 0 : index
    %4 = vector.load %arg9[%c1, %c1_6, %c0_7] : memref<18x18x4xf32, #tpu.memory_space<vmem>>, vector<16x16x4xf32>
    tpu.vector_store %arg9[%c1, %c1_6, %c0_7], %3 {strides = array<i32>} : memref<18x18x4xf32, #tpu.memory_space<vmem>>, vector<16x16x4xf32>,
    %c0_8 = arith.constant 0 : index
    %c0_9 = arith.constant 0 : index
    %c0_10 = arith.constant 0 : index
    %5 = vector.load %arg9[%c0_8, %c0_9, %c0_10] : memref<18x18x4xf32, #tpu.memory_space<vmem>>, vector<18x18x4xf32>
    %6 = vector.extract_strided_slice %5 {offsets = [0, 0, 0], sizes = [16, 16, 4], strides = [1, 1, 1]} : vector<18x18x4xf32> to vector<16x16x4xf32>
    %7 = vector.shape_cast %6 : vector<16x16x4xf32> to vector<256x4xf32>
    %8 = arith.truncf %7 : vector<256x4xf32> to vector<256x4xbf16>
    %c0_11 = arith.constant 0 : index
    %c0_12 = arith.constant 0 : index
    %9 = vector.load %arg11[%c0_11, %c0_12] : memref<256x36xbf16, #tpu.memory_space<vmem>>, vector<256x4xbf16>
    tpu.vector_store %arg11[%c0_11, %c0_12], %8 {strides = array<i32>} : memref<256x36xbf16, #tpu.memory_space<vmem>>, vector<256x4xbf16>,
    %10 = vector.extract_strided_slice %5 {offsets = [0, 1, 0], sizes = [16, 16, 4], strides = [1, 1, 1]} : vector<18x18x4xf32> to vector<16x16x4xf32>
    %11 = vector.shape_cast %10 : vector<16x16x4xf32> to vector<256x4xf32>
    %12 = arith.truncf %11 : vector<256x4xf32> to vector<256x4xbf16>
    %c0_13 = arith.constant 0 : index
    %c4 = arith.constant 4 : index
    %13 = vector.load %arg11[%c0_13, %c4] : memref<256x36xbf16, #tpu.memory_space<vmem>>, vector<256x4xbf16>
    tpu.vector_store %arg11[%c0_13, %c4], %12 {strides = array<i32>} : memref<256x36xbf16, #tpu.memory_space<vmem>>, vector<256x4xbf16>,
    %14 = vector.extract_strided_slice %5 {offsets = [0, 2, 0], sizes = [16, 16, 4], strides = [1, 1, 1]} : vector<18x18x4xf32> to vector<16x16x4xf32>
    %15 = vector.shape_cast %14 : vector<16x16x4xf32> to vector<256x4xf32>
    %16 = arith.truncf %15 : vector<256x4xf32> to vector<256x4xbf16>
    %c0_14 = arith.constant 0 : index
    %c8 = arith.constant 8 : index
    %17 = vector.load %arg11[%c0_14, %c8] : memref<256x36xbf16, #tpu.memory_space<vmem>>, vector<256x4xbf16>
    tpu.vector_store %arg11[%c0_14, %c8], %16 {strides = array<i32>} : memref<256x36xbf16, #tpu.memory_space<vmem>>, vector<256x4xbf16>,
    %18 = vector.extract_strided_slice %5 {offsets = [1, 0, 0], sizes = [16, 16, 4], strides = [1, 1, 1]} : vector<18x18x4xf32> to vector<16x16x4xf32>
    %19 = vector.shape_cast %18 : vector<16x16x4xf32> to vector<256x4xf32>
    %20 = arith.truncf %19 : vector<256x4xf32> to vector<256x4xbf16>
    %c0_15 = arith.constant 0 : index
    %c12 = arith.constant 12 : index
    %21 = vector.load %arg11[%c0_15, %c12] : memref<256x36xbf16, #tpu.memory_space<vmem>>, vector<256x4xbf16>
    tpu.vector_store %arg11[%c0_15, %c12], %20 {strides = array<i32>} : memref<256x36xbf16, #tpu.memory_space<vmem>>, vector<256x4xbf16>,
    %22 = vector.extract_strided_slice %5 {offsets = [1, 1, 0], sizes = [16, 16, 4], strides = [1, 1, 1]} : vector<18x18x4xf32> to vector<16x16x4xf32>
    %23 = vector.shape_cast %22 : vector<16x16x4xf32> to vector<256x4xf32>
    %24 = arith.truncf %23 : vector<256x4xf32> to vector<256x4xbf16>
    %c0_16 = arith.constant 0 : index
    %c16 = arith.constant 16 : index
    %25 = vector.load %arg11[%c0_16, %c16] : memref<256x36xbf16, #tpu.memory_space<vmem>>, vector<256x4xbf16>
    tpu.vector_store %arg11[%c0_16, %c16], %24 {strides = array<i32>} : memref<256x36xbf16, #tpu.memory_space<vmem>>, vector<256x4xbf16>,
    %26 = vector.extract_strided_slice %5 {offsets = [1, 2, 0], sizes = [16, 16, 4], strides = [1, 1, 1]} : vector<18x18x4xf32> to vector<16x16x4xf32>
    %27 = vector.shape_cast %26 : vector<16x16x4xf32> to vector<256x4xf32>
    %28 = arith.truncf %27 : vector<256x4xf32> to vector<256x4xbf16>
    %c0_17 = arith.constant 0 : index
    %c20 = arith.constant 20 : index
    %29 = vector.load %arg11[%c0_17, %c20] : memref<256x36xbf16, #tpu.memory_space<vmem>>, vector<256x4xbf16>
    tpu.vector_store %arg11[%c0_17, %c20], %28 {strides = array<i32>} : memref<256x36xbf16, #tpu.memory_space<vmem>>, vector<256x4xbf16>,
    %30 = vector.extract_strided_slice %5 {offsets = [2, 0, 0], sizes = [16, 16, 4], strides = [1, 1, 1]} : vector<18x18x4xf32> to vector<16x16x4xf32>
    %31 = vector.shape_cast %30 : vector<16x16x4xf32> to vector<256x4xf32>
    %32 = arith.truncf %31 : vector<256x4xf32> to vector<256x4xbf16>
    %c0_18 = arith.constant 0 : index
    %c24 = arith.constant 24 : index
    %33 = vector.load %arg11[%c0_18, %c24] : memref<256x36xbf16, #tpu.memory_space<vmem>>, vector<256x4xbf16>
    tpu.vector_store %arg11[%c0_18, %c24], %32 {strides = array<i32>} : memref<256x36xbf16, #tpu.memory_space<vmem>>, vector<256x4xbf16>,
    %34 = vector.extract_strided_slice %5 {offsets = [2, 1, 0], sizes = [16, 16, 4], strides = [1, 1, 1]} : vector<18x18x4xf32> to vector<16x16x4xf32>
    %35 = vector.shape_cast %34 : vector<16x16x4xf32> to vector<256x4xf32>
    %36 = arith.truncf %35 : vector<256x4xf32> to vector<256x4xbf16>
    %c0_19 = arith.constant 0 : index
    %c28 = arith.constant 28 : index
    %37 = vector.load %arg11[%c0_19, %c28] : memref<256x36xbf16, #tpu.memory_space<vmem>>, vector<256x4xbf16>
    tpu.vector_store %arg11[%c0_19, %c28], %36 {strides = array<i32>} : memref<256x36xbf16, #tpu.memory_space<vmem>>, vector<256x4xbf16>,
    %38 = vector.extract_strided_slice %5 {offsets = [2, 2, 0], sizes = [16, 16, 4], strides = [1, 1, 1]} : vector<18x18x4xf32> to vector<16x16x4xf32>
    %39 = vector.shape_cast %38 : vector<16x16x4xf32> to vector<256x4xf32>
    %40 = arith.truncf %39 : vector<256x4xf32> to vector<256x4xbf16>
    %c0_20 = arith.constant 0 : index
    %c32 = arith.constant 32 : index
    %41 = vector.load %arg11[%c0_20, %c32] : memref<256x36xbf16, #tpu.memory_space<vmem>>, vector<256x4xbf16>
    tpu.vector_store %arg11[%c0_20, %c32], %40 {strides = array<i32>} : memref<256x36xbf16, #tpu.memory_space<vmem>>, vector<256x4xbf16>,
    %c0_21 = arith.constant 0 : index
    %c0_22 = arith.constant 0 : index
    %42 = vector.load %arg11[%c0_21, %c0_22] : memref<256x36xbf16, #tpu.memory_space<vmem>>, vector<256x36xbf16>
    %c0_23 = arith.constant 0 : index
    %c0_24 = arith.constant 0 : index
    %43 = vector.load %arg2[%c0_23, %c0_24] : memref<36x8xbf16, #tpu.memory_space<vmem>>, vector<36x8xbf16>
    %cst_25 = arith.constant dense<0.000000e+00> : vector<256x8xf32>
    %44 = tpu.matmul %42, %43, %cst_25 {dimension_numbers = #tpu.dot_dimension_numbers<[1], [0], [0], [1], [0, 0, 1, 1], [], []>} : vector<256x36xbf16>, vector<36x8xbf16>, vector<256x8xf32> -> vector<256x8xf32>
    %c0_26 = arith.constant 0 : index
    %c0_27 = arith.constant 0 : index
    %45 = vector.load %arg3[%c0_26, %c0_27] : memref<1x8xf32, #tpu.memory_space<vmem>>, vector<1x8xf32>
    %46 = vector.broadcast %45 : vector<1x8xf32> to vector<256x8xf32>
    %47 = arith.mulf %44, %46 : vector<256x8xf32>
    %c0_28 = arith.constant 0 : index
    %c0_29 = arith.constant 0 : index
    %48 = vector.load %arg4[%c0_28, %c0_29] : memref<1x8xf32, #tpu.memory_space<vmem>>, vector<1x8xf32>
    %49 = vector.broadcast %48 : vector<1x8xf32> to vector<256x8xf32>
    %50 = arith.addf %47, %49 : vector<256x8xf32>
    %cst_30 = arith.constant 0.000000e+00 : f32
    %51 = vector.broadcast %cst_30 : f32 to vector<256x8xf32>
    %52 = arith.maximumf %50, %51 : vector<256x8xf32>
    %cst_31 = arith.constant 0.000000e+00 : f32
    %53 = vector.broadcast %cst_31 : f32 to vector<18x18x8xf32>
    %c0_32 = arith.constant 0 : index
    %c0_33 = arith.constant 0 : index
    %c0_34 = arith.constant 0 : index
    %54 = vector.load %arg10[%c0_32, %c0_33, %c0_34] : memref<18x18x8xf32, #tpu.memory_space<vmem>>, vector<18x18x8xf32>
    tpu.vector_store %arg10[%c0_32, %c0_33, %c0_34], %53 {strides = array<i32>} : memref<18x18x8xf32, #tpu.memory_space<vmem>>, vector<18x18x8xf32>,
    %55 = vector.shape_cast %52 : vector<256x8xf32> to vector<16x16x8xf32>
    %c1_35 = arith.constant 1 : index
    %c1_36 = arith.constant 1 : index
    %c0_37 = arith.constant 0 : index
    %56 = vector.load %arg10[%c1_35, %c1_36, %c0_37] : memref<18x18x8xf32, #tpu.memory_space<vmem>>, vector<16x16x8xf32>
    tpu.vector_store %arg10[%c1_35, %c1_36, %c0_37], %55 {strides = array<i32>} : memref<18x18x8xf32, #tpu.memory_space<vmem>>, vector<16x16x8xf32>,
    %c0_38 = arith.constant 0 : index
    %c0_39 = arith.constant 0 : index
    %c0_40 = arith.constant 0 : index
    %57 = vector.load %arg10[%c0_38, %c0_39, %c0_40] : memref<18x18x8xf32, #tpu.memory_space<vmem>>, vector<18x18x8xf32>
    %58 = vector.extract_strided_slice %57 {offsets = [0, 0, 0], sizes = [16, 16, 8], strides = [1, 1, 1]} : vector<18x18x8xf32> to vector<16x16x8xf32>
    %59 = vector.shape_cast %58 : vector<16x16x8xf32> to vector<256x8xf32>
    %60 = arith.truncf %59 : vector<256x8xf32> to vector<256x8xbf16>
    %c0_41 = arith.constant 0 : index
    %c0_42 = arith.constant 0 : index
    %61 = vector.load %arg12[%c0_41, %c0_42] : memref<256x72xbf16, #tpu.memory_space<vmem>>, vector<256x8xbf16>
    tpu.vector_store %arg12[%c0_41, %c0_42], %60 {strides = array<i32>} : memref<256x72xbf16, #tpu.memory_space<vmem>>, vector<256x8xbf16>,
    %62 = vector.extract_strided_slice %57 {offsets = [0, 1, 0], sizes = [16, 16, 8], strides = [1, 1, 1]} : vector<18x18x8xf32> to vector<16x16x8xf32>
    %63 = vector.shape_cast %62 : vector<16x16x8xf32> to vector<256x8xf32>
    %64 = arith.truncf %63 : vector<256x8xf32> to vector<256x8xbf16>
    %c0_43 = arith.constant 0 : index
    %c8_44 = arith.constant 8 : index
    %65 = vector.load %arg12[%c0_43, %c8_44] : memref<256x72xbf16, #tpu.memory_space<vmem>>, vector<256x8xbf16>
    tpu.vector_store %arg12[%c0_43, %c8_44], %64 {strides = array<i32>} : memref<256x72xbf16, #tpu.memory_space<vmem>>, vector<256x8xbf16>,
    %66 = vector.extract_strided_slice %57 {offsets = [0, 2, 0], sizes = [16, 16, 8], strides = [1, 1, 1]} : vector<18x18x8xf32> to vector<16x16x8xf32>
    %67 = vector.shape_cast %66 : vector<16x16x8xf32> to vector<256x8xf32>
    %68 = arith.truncf %67 : vector<256x8xf32> to vector<256x8xbf16>
    %c0_45 = arith.constant 0 : index
    %c16_46 = arith.constant 16 : index
    %69 = vector.load %arg12[%c0_45, %c16_46] : memref<256x72xbf16, #tpu.memory_space<vmem>>, vector<256x8xbf16>
    tpu.vector_store %arg12[%c0_45, %c16_46], %68 {strides = array<i32>} : memref<256x72xbf16, #tpu.memory_space<vmem>>, vector<256x8xbf16>,
    %70 = vector.extract_strided_slice %57 {offsets = [1, 0, 0], sizes = [16, 16, 8], strides = [1, 1, 1]} : vector<18x18x8xf32> to vector<16x16x8xf32>
    %71 = vector.shape_cast %70 : vector<16x16x8xf32> to vector<256x8xf32>
    %72 = arith.truncf %71 : vector<256x8xf32> to vector<256x8xbf16>
    %c0_47 = arith.constant 0 : index
    %c24_48 = arith.constant 24 : index
    %73 = vector.load %arg12[%c0_47, %c24_48] : memref<256x72xbf16, #tpu.memory_space<vmem>>, vector<256x8xbf16>
    tpu.vector_store %arg12[%c0_47, %c24_48], %72 {strides = array<i32>} : memref<256x72xbf16, #tpu.memory_space<vmem>>, vector<256x8xbf16>,
    %74 = vector.extract_strided_slice %57 {offsets = [1, 1, 0], sizes = [16, 16, 8], strides = [1, 1, 1]} : vector<18x18x8xf32> to vector<16x16x8xf32>
    %75 = vector.shape_cast %74 : vector<16x16x8xf32> to vector<256x8xf32>
    %76 = arith.truncf %75 : vector<256x8xf32> to vector<256x8xbf16>
    %c0_49 = arith.constant 0 : index
    %c32_50 = arith.constant 32 : index
    %77 = vector.load %arg12[%c0_49, %c32_50] : memref<256x72xbf16, #tpu.memory_space<vmem>>, vector<256x8xbf16>
    tpu.vector_store %arg12[%c0_49, %c32_50], %76 {strides = array<i32>} : memref<256x72xbf16, #tpu.memory_space<vmem>>, vector<256x8xbf16>,
    %78 = vector.extract_strided_slice %57 {offsets = [1, 2, 0], sizes = [16, 16, 8], strides = [1, 1, 1]} : vector<18x18x8xf32> to vector<16x16x8xf32>
    %79 = vector.shape_cast %78 : vector<16x16x8xf32> to vector<256x8xf32>
    %80 = arith.truncf %79 : vector<256x8xf32> to vector<256x8xbf16>
    %c0_51 = arith.constant 0 : index
    %c40 = arith.constant 40 : index
    %81 = vector.load %arg12[%c0_51, %c40] : memref<256x72xbf16, #tpu.memory_space<vmem>>, vector<256x8xbf16>
    tpu.vector_store %arg12[%c0_51, %c40], %80 {strides = array<i32>} : memref<256x72xbf16, #tpu.memory_space<vmem>>, vector<256x8xbf16>,
    %82 = vector.extract_strided_slice %57 {offsets = [2, 0, 0], sizes = [16, 16, 8], strides = [1, 1, 1]} : vector<18x18x8xf32> to vector<16x16x8xf32>
    %83 = vector.shape_cast %82 : vector<16x16x8xf32> to vector<256x8xf32>
    %84 = arith.truncf %83 : vector<256x8xf32> to vector<256x8xbf16>
    %c0_52 = arith.constant 0 : index
    %c48 = arith.constant 48 : index
    %85 = vector.load %arg12[%c0_52, %c48] : memref<256x72xbf16, #tpu.memory_space<vmem>>, vector<256x8xbf16>
    tpu.vector_store %arg12[%c0_52, %c48], %84 {strides = array<i32>} : memref<256x72xbf16, #tpu.memory_space<vmem>>, vector<256x8xbf16>,
    %86 = vector.extract_strided_slice %57 {offsets = [2, 1, 0], sizes = [16, 16, 8], strides = [1, 1, 1]} : vector<18x18x8xf32> to vector<16x16x8xf32>
    %87 = vector.shape_cast %86 : vector<16x16x8xf32> to vector<256x8xf32>
    %88 = arith.truncf %87 : vector<256x8xf32> to vector<256x8xbf16>
    %c0_53 = arith.constant 0 : index
    %c56 = arith.constant 56 : index
    %89 = vector.load %arg12[%c0_53, %c56] : memref<256x72xbf16, #tpu.memory_space<vmem>>, vector<256x8xbf16>
    tpu.vector_store %arg12[%c0_53, %c56], %88 {strides = array<i32>} : memref<256x72xbf16, #tpu.memory_space<vmem>>, vector<256x8xbf16>,
    %90 = vector.extract_strided_slice %57 {offsets = [2, 2, 0], sizes = [16, 16, 8], strides = [1, 1, 1]} : vector<18x18x8xf32> to vector<16x16x8xf32>
    %91 = vector.shape_cast %90 : vector<16x16x8xf32> to vector<256x8xf32>
    %92 = arith.truncf %91 : vector<256x8xf32> to vector<256x8xbf16>
    %c0_54 = arith.constant 0 : index
    %c64 = arith.constant 64 : index
    %93 = vector.load %arg12[%c0_54, %c64] : memref<256x72xbf16, #tpu.memory_space<vmem>>, vector<256x8xbf16>
    tpu.vector_store %arg12[%c0_54, %c64], %92 {strides = array<i32>} : memref<256x72xbf16, #tpu.memory_space<vmem>>, vector<256x8xbf16>,
    %c0_55 = arith.constant 0 : index
    %c0_56 = arith.constant 0 : index
    %94 = vector.load %arg12[%c0_55, %c0_56] : memref<256x72xbf16, #tpu.memory_space<vmem>>, vector<256x72xbf16>
    %c0_57 = arith.constant 0 : index
    %c0_58 = arith.constant 0 : index
    %95 = vector.load %arg5[%c0_57, %c0_58] : memref<72x8xbf16, #tpu.memory_space<vmem>>, vector<72x8xbf16>
    %cst_59 = arith.constant dense<0.000000e+00> : vector<256x8xf32>
    %96 = tpu.matmul %94, %95, %cst_59 {dimension_numbers = #tpu.dot_dimension_numbers<[1], [0], [0], [1], [0, 0, 1, 1], [], []>} : vector<256x72xbf16>, vector<72x8xbf16>, vector<256x8xf32> -> vector<256x8xf32>
    %c0_60 = arith.constant 0 : index
    %c0_61 = arith.constant 0 : index
    %97 = vector.load %arg6[%c0_60, %c0_61] : memref<1x8xf32, #tpu.memory_space<vmem>>, vector<1x8xf32>
    %98 = vector.broadcast %97 : vector<1x8xf32> to vector<256x8xf32>
    %99 = arith.mulf %96, %98 : vector<256x8xf32>
    %c0_62 = arith.constant 0 : index
    %c0_63 = arith.constant 0 : index
    %100 = vector.load %arg7[%c0_62, %c0_63] : memref<1x8xf32, #tpu.memory_space<vmem>>, vector<1x8xf32>
    %101 = vector.broadcast %100 : vector<1x8xf32> to vector<256x8xf32>
    %102 = arith.addf %99, %101 : vector<256x8xf32>
    %cst_64 = arith.constant 0.000000e+00 : f32
    %103 = vector.broadcast %cst_64 : f32 to vector<256x8xf32>
    %104 = arith.maximumf %102, %103 : vector<256x8xf32>
    %c0_65 = arith.constant 0 : index
    %c0_66 = arith.constant 0 : index
    %c0_67 = arith.constant 0 : index
    %105 = vector.load %arg8[%c0_65, %c0_66, %c0_67] : memref<1x256x8xf32, #tpu.memory_space<vmem>>, vector<1x256x8xf32>
    %106 = vector.shape_cast %105 : vector<1x256x8xf32> to vector<256x8xf32>
    %107 = vector.shape_cast %104 : vector<256x8xf32> to vector<1x256x8xf32>
    tpu.vector_store %arg8[%c0_65, %c0_66, %c0_67], %107 {strides = array<i32>} : memref<1x256x8xf32, #tpu.memory_space<vmem>>, vector<1x256x8xf32>,
    return
  }
  func.func @transform_0(%arg0: i32) -> (i32, i32, i32, i32) {
    %c0_i32 = arith.constant 0 : i32
    %c0_i32_0 = arith.constant 0 : i32
    %c0_i32_1 = arith.constant 0 : i32
    %c0_i32_2 = arith.constant 0 : i32
    return %arg0, %c0_i32, %c0_i32_0, %c0_i32_1 : i32, i32, i32, i32
  }
  func.func @transform_1(%arg0: i32) -> (i32, i32) {
    %c0_i32 = arith.constant 0 : i32
    %c0_i32_0 = arith.constant 0 : i32
    %c0_i32_1 = arith.constant 0 : i32
    return %c0_i32, %c0_i32_0 : i32, i32
  }
  func.func @transform_2(%arg0: i32) -> (i32, i32) {
    %c0_i32 = arith.constant 0 : i32
    %c0_i32_0 = arith.constant 0 : i32
    %c0_i32_1 = arith.constant 0 : i32
    return %c0_i32, %c0_i32_0 : i32, i32
  }
  func.func @transform_3(%arg0: i32) -> (i32, i32) {
    %c0_i32 = arith.constant 0 : i32
    %c0_i32_0 = arith.constant 0 : i32
    %c0_i32_1 = arith.constant 0 : i32
    return %c0_i32, %c0_i32_0 : i32, i32
  }
  func.func @transform_4(%arg0: i32) -> (i32, i32) {
    %c0_i32 = arith.constant 0 : i32
    %c0_i32_0 = arith.constant 0 : i32
    %c0_i32_1 = arith.constant 0 : i32
    return %c0_i32, %c0_i32_0 : i32, i32
  }
  func.func @transform_5(%arg0: i32) -> (i32, i32) {
    %c0_i32 = arith.constant 0 : i32
    %c0_i32_0 = arith.constant 0 : i32
    %c0_i32_1 = arith.constant 0 : i32
    return %c0_i32, %c0_i32_0 : i32, i32
  }
  func.func @transform_6(%arg0: i32) -> (i32, i32) {
    %c0_i32 = arith.constant 0 : i32
    %c0_i32_0 = arith.constant 0 : i32
    %c0_i32_1 = arith.constant 0 : i32
    return %c0_i32, %c0_i32_0 : i32, i32
  }
  func.func @transform_7(%arg0: i32) -> (i32, i32, i32) {
    %c0_i32 = arith.constant 0 : i32
    %c0_i32_0 = arith.constant 0 : i32
    %c0_i32_1 = arith.constant 0 : i32
    return %arg0, %c0_i32, %c0_i32_0 : i32, i32, i32
  }
}

</mosaic_0001>

<llo_original>
// kernel: double_conv_forward.1
$region0: #{double_conv_forward.1}
  #allocation0 [shape = 'u32[]', space=smem, size = 0x4, offset = 0x4, fixed_abs, tag = 'smem constant byte address 0x4 - core index']
  #allocation1 [shape = 'u32[144,128]{1,0:T(1,128)}', space=vmem, size = 0x12000, scoped, tag = 'internal scratch']
  #allocation2 [shape = 'f32[18,18,4]{2,1,0:T(8,128)}', space=vmem, size = 0x36000, scoped, tag = 'scratch operand']
  #allocation3 [shape = 'f32[18,18,8]{2,1,0:T(8,128)}', space=vmem, size = 0x36000, scoped, tag = 'scratch operand']
  #allocation4 [shape = 'bf16[256,36]{1,0:T(8,128)(2,1)}', space=vmem, size = 0x10000, scoped, tag = 'scratch operand']
  #allocation5 [shape = 'bf16[256,72]{1,0:T(8,128)(2,1)}', space=vmem, size = 0x10000, scoped, tag = 'scratch operand']
  %s0 = inlined_call_operand.vmem [shape: f32[2,16,16,4], index: 0, kind: input, shape index: {}]
  %s1 = inlined_call_operand.vmem [shape: bf16[36,8], index: 1, kind: input, shape index: {}]
  %s2 = inlined_call_operand.vmem [shape: f32[1,8], index: 2, kind: input, shape index: {}]
  %s3 = inlined_call_operand.vmem [shape: f32[1,8], index: 3, kind: input, shape index: {}]
  %s4 = inlined_call_operand.vmem [shape: bf16[72,8], index: 4, kind: input, shape index: {}]
  %s5 = inlined_call_operand.vmem [shape: f32[1,8], index: 5, kind: input, shape index: {}]
  %s6 = inlined_call_operand.vmem [shape: f32[1,8], index: 6, kind: input, shape index: {}]
  %s7 = inlined_call_operand.vmem [shape: f32[2,256,8], index: 7, kind: output, shape index: {}]
  %s8 = sld [smem:[#allocation0]]
  $region61: #{double_conv_forward.1} parent=0
    _
  %s10 = ssub.s32 1, %s8
  %s11 = scalar_select 0, %s10, %s8
  loop: start=0, step=1, limit=4
  $region2: #{double_conv_forward.1} parent=0 // loop_pre_header
    _
  $region3: #{double_conv_forward.1} parent=0 // loop_header
    %s13 = sphi 0, %s17
    %p14 = scmp.ge.s32.totalorder %s13, 4
    %s23 = sphi 0, %s25
    %s26 = sphi 0, %s23
    %s27 = sphi 0, %s26
    %s43 = sphi 0, %s27
    %s47 = sphi 0, %s47
    %s49 = sphi 0, %s47
    %s50 = sphi 0, %s49
    %s64 = sphi 0, %s50
    %s68 = sphi 0, %s68
    %s70 = sphi 0, %s68
    %s71 = sphi 0, %s70
    %s85 = sphi 0, %s71
    %s89 = sphi 0, %s89
    %s91 = sphi 0, %s89
    %s92 = sphi 0, %s91
    %s106 = sphi 0, %s92
    %s110 = sphi 0, %s110
    %s112 = sphi 0, %s110
    %s113 = sphi 0, %s112
    %s127 = sphi 0, %s113
    %s131 = sphi 0, %s131
    %s133 = sphi 0, %s131
    %s134 = sphi 0, %s133
    %s148 = sphi 0, %s134
    %s152 = sphi 0, %s152
    %s154 = sphi 0, %s152
    %s155 = sphi 0, %s154
    %s169 = sphi 0, %s155
    %s175 = sphi 0, %s177
    %s178 = sphi 0, %s175
    %s179 = sphi 0, %s178
    %s195 = sphi 0, %s179
  $region4: #{double_conv_forward.1} parent=0 // loop_header_branch
    %16 = sbr.rel (%p14) target = $region8
  $region5: #{double_conv_forward.1} parent=0 // loop_body
    %s18 = ssub.s32 %s13, 1
    %s19 = ssub.s32 %s13, 2
    %s20 = sadd.s32 %s13, 1
    %s21 = ssub.s32 %s13, %s20
    %p22 = scmp.eq.s32.totalorder %s21, 0
    %s24 = sadd.s32 %s23, 1
    %s25 = scalar_select %p22, %s23, %s24
    %p28 = pneg %p22
    %p29 = scmp.eq.s32.totalorder %s13, 1
    %p30 = por %p28, %p29
    %p31 = scmp.ne.s32.totalorder %s23, %s26
    %p32 = scmp.eq.s32.totalorder %s13, 0
    %p33 = por %p31, %p32
    %p34 = scmp.ne.s32.totalorder %s23, %s26
    %p35 = scmp.eq.s32.totalorder %s18, 1
    %p36 = por %p34, %p35
    %p37 = scmp.ne.s32.totalorder %s26, %s27
    %p38 = scmp.eq.s32.totalorder %s18, 0
    %p39 = por %p37, %p38
    %p40 = scmp.ne.s32.totalorder %s26, %s27
    %p41 = scmp.eq.s32.totalorder %s19, 1
    %p42 = por %p40, %p41
    %p44 = scmp.ne.s32.totalorder %s27, %s43
    %p45 = scmp.eq.s32.totalorder %s19, 0
    %p46 = por %p44, %p45
    %s48 = sadd.s32 %s47, 1
    %p51 = scmp.eq.s32.totalorder %s13, 1
    %p52 = scmp.ne.s32.totalorder %s47, %s49
    %p53 = scmp.eq.s32.totalorder %s13, 0
    %p54 = por %p52, %p53
    %p55 = scmp.ne.s32.totalorder %s47, %s49
    %p56 = scmp.eq.s32.totalorder %s18, 1
    %p57 = por %p55, %p56
    %p58 = scmp.ne.s32.totalorder %s49, %s50
    %p59 = scmp.eq.s32.totalorder %s18, 0
    %p60 = por %p58, %p59
    %p61 = scmp.ne.s32.totalorder %s49, %s50
    %p62 = scmp.eq.s32.totalorder %s19, 1
    %p63 = por %p61, %p62
    %p65 = scmp.ne.s32.totalorder %s50, %s64
    %p66 = scmp.eq.s32.totalorder %s19, 0
    %p67 = por %p65, %p66
    %s69 = sadd.s32 %s68, 1
    %p72 = scmp.eq.s32.totalorder %s13, 1
    %p73 = scmp.ne.s32.totalorder %s68, %s70
    %p74 = scmp.eq.s32.totalorder %s13, 0
    %p75 = por %p73, %p74
    %p76 = scmp.ne.s32.totalorder %s68, %s70
    %p77 = scmp.eq.s32.totalorder %s18, 1
    %p78 = por %p76, %p77
    %p79 = scmp.ne.s32.totalorder %s70, %s71
    %p80 = scmp.eq.s32.totalorder %s18, 0
    %p81 = por %p79, %p80
    %p82 = scmp.ne.s32.totalorder %s70, %s71
    %p83 = scmp.eq.s32.totalorder %s19, 1
    %p84 = por %p82, %p83
    %p86 = scmp.ne.s32.totalorder %s71, %s85
    %p87 = scmp.eq.s32.totalorder %s19, 0
    %p88 = por %p86, %p87
    %s90 = sadd.s32 %s89, 1
    %p93 = scmp.eq.s32.totalorder %s13, 1
    %p94 = scmp.ne.s32.totalorder %s89, %s91
    %p95 = scmp.eq.s32.totalorder %s13, 0
    %p96 = por %p94, %p95
    %p97 = scmp.ne.s32.totalorder %s89, %s91
    %p98 = scmp.eq.s32.totalorder %s18, 1
    %p99 = por %p97, %p98
    %p100 = scmp.ne.s32.totalorder %s91, %s92
    %p101 = scmp.eq.s32.totalorder %s18, 0
    %p102 = por %p100, %p101
    %p103 = scmp.ne.s32.totalorder %s91, %s92
    %p104 = scmp.eq.s32.totalorder %s19, 1
    %p105 = por %p103, %p104
    %p107 = scmp.ne.s32.totalorder %s92, %s106
    %p108 = scmp.eq.s32.totalorder %s19, 0
    %p109 = por %p107, %p108
    %s111 = sadd.s32 %s110, 1
    %p114 = scmp.eq.s32.totalorder %s13, 1
    %p115 = scmp.ne.s32.totalorder %s110, %s112
    %p116 = scmp.eq.s32.totalorder %s13, 0
    %p117 = por %p115, %p116
    %p118 = scmp.ne.s32.totalorder %s110, %s112
    %p119 = scmp.eq.s32.totalorder %s18, 1
    %p120 = por %p118, %p119
    %p121 = scmp.ne.s32.totalorder %s112, %s113
    %p122 = scmp.eq.s32.totalorder %s18, 0
    %p123 = por %p121, %p122
    %p124 = scmp.ne.s32.totalorder %s112, %s113
    %p125 = scmp.eq.s32.totalorder %s19, 1
    %p126 = por %p124, %p125
    %p128 = scmp.ne.s32.totalorder %s113, %s127
    %p129 = scmp.eq.s32.totalorder %s19, 0
    %p130 = por %p128, %p129
    %s132 = sadd.s32 %s131, 1
    %p135 = scmp.eq.s32.totalorder %s13, 1
    %p136 = scmp.ne.s32.totalorder %s131, %s133
    %p137 = scmp.eq.s32.totalorder %s13, 0
    %p138 = por %p136, %p137
    %p139 = scmp.ne.s32.totalorder %s131, %s133
    %p140 = scmp.eq.s32.totalorder %s18, 1
    %p141 = por %p139, %p140
    %p142 = scmp.ne.s32.totalorder %s133, %s134
    %p143 = scmp.eq.s32.totalorder %s18, 0
    %p144 = por %p142, %p143
    %p145 = scmp.ne.s32.totalorder %s133, %s134
    %p146 = scmp.eq.s32.totalorder %s19, 1
    %p147 = por %p145, %p146
    %p149 = scmp.ne.s32.totalorder %s134, %s148
    %p150 = scmp.eq.s32.totalorder %s19, 0
    %p151 = por %p149, %p150
    %s153 = sadd.s32 %s152, 1
    %p156 = scmp.eq.s32.totalorder %s13, 1
    %p157 = scmp.ne.s32.totalorder %s152, %s154
    %p158 = scmp.eq.s32.totalorder %s13, 0
    %p159 = por %p157, %p158
    %p160 = scmp.ne.s32.totalorder %s152, %s154
    %p161 = scmp.eq.s32.totalorder %s18, 1
    %p162 = por %p160, %p161
    %p163 = scmp.ne.s32.totalorder %s154, %s155
    %p164 = scmp.eq.s32.totalorder %s18, 0
    %p165 = por %p163, %p164
    %p166 = scmp.ne.s32.totalorder %s154, %s155
    %p167 = scmp.eq.s32.totalorder %s19, 1
    %p168 = por %p166, %p167
    %p170 = scmp.ne.s32.totalorder %s155, %s169
    %p171 = scmp.eq.s32.totalorder %s19, 0
    %p172 = por %p170, %p171
    %s173 = ssub.s32 %s13, %s20
    %p174 = scmp.eq.s32.totalorder %s173, 0
    %s176 = sadd.s32 %s175, 1
    %s177 = scalar_select %p174, %s175, %s176
    %p180 = pneg %p174
    %p181 = scmp.eq.s32.totalorder %s13, 1
    %p182 = por %p180, %p181
    %p183 = scmp.ne.s32.totalorder %s175, %s178
    %p184 = scmp.eq.s32.totalorder %s13, 0
    %p185 = por %p183, %p184
    %p186 = scmp.ne.s32.totalorder %s175, %s178
    %p187 = scmp.eq.s32.totalorder %s18, 1
    %p188 = por %p186, %p187
    %p189 = scmp.ne.s32.totalorder %s178, %s179
    %p190 = scmp.eq.s32.totalorder %s18, 0
    %p191 = por %p189, %p190
    %p192 = scmp.ne.s32.totalorder %s178, %s179
    %p193 = scmp.eq.s32.totalorder %s19, 1
    %p194 = por %p192, %p193
    %p196 = scmp.ne.s32.totalorder %s179, %s195
    %p197 = scmp.eq.s32.totalorder %s19, 0
    %p198 = por %p196, %p197
    %p199 = scmp.le.s32.totalorder 1, %s13
    %p200 = scmp.lt.s32.totalorder %s13, 3
    %p201 = pnand %p199, %p200
    %p202 = pneg %p201
    // Predicated region
    $region9: #{double_conv_forward.1} parent=5 // pred_check
      _
    $region10: #{double_conv_forward.1} parent=5 // pred_check_branch
      %204 = sbr.rel (%p201) target = $region12
    $region11: #{double_conv_forward.1} parent=5 // pred_region
      %s205 = ssub.s32 %s13, 1
      // Predicated region
      $region13: #{double_conv_forward.1} parent=11 // pred_check
        %p206 = pneg %p60
      $region14: #{double_conv_forward.1} parent=11 // pred_check_branch
        %208 = sbr.rel (%p206) target = $region16
      $region15: #{double_conv_forward.1} parent=11 // pred_region
        _
      $region16: #{double_conv_forward.1} parent=11 // pred_fallthru
        _
      // Predicated region
      $region17: #{double_conv_forward.1} parent=11 // pred_check
        %p209 = pneg %p81
      $region18: #{double_conv_forward.1} parent=11 // pred_check_branch
        %211 = sbr.rel (%p209) target = $region20
      $region19: #{double_conv_forward.1} parent=11 // pred_region
        _
      $region20: #{double_conv_forward.1} parent=11 // pred_fallthru
        _
      // Predicated region
      $region21: #{double_conv_forward.1} parent=11 // pred_check
        %p212 = pneg %p102
      $region22: #{double_conv_forward.1} parent=11 // pred_check_branch
        %214 = sbr.rel (%p212) target = $region24
      $region23: #{double_conv_forward.1} parent=11 // pred_region
        _
      $region24: #{double_conv_forward.1} parent=11 // pred_fallthru
        _
      // Predicated region
      $region25: #{double_conv_forward.1} parent=11 // pred_check
        %p215 = pneg %p123
      $region26: #{double_conv_forward.1} parent=11 // pred_check_branch
        %217 = sbr.rel (%p215) target = $region28
      $region27: #{double_conv_forward.1} parent=11 // pred_region
        _
      $region28: #{double_conv_forward.1} parent=11 // pred_fallthru
        _
      // Predicated region
      $region29: #{double_conv_forward.1} parent=11 // pred_check
        %p218 = pneg %p144
      $region30: #{double_conv_forward.1} parent=11 // pred_check_branch
        %220 = sbr.rel (%p218) target = $region32
      $region31: #{double_conv_forward.1} parent=11 // pred_region
        _
      $region32: #{double_conv_forward.1} parent=11 // pred_fallthru
        _
      // Predicated region
      $region33: #{double_conv_forward.1} parent=11 // pred_check
        %p221 = pneg %p165
      $region34: #{double_conv_forward.1} parent=11 // pred_check_branch
        %223 = sbr.rel (%p221) target = $region36
      $region35: #{double_conv_forward.1} parent=11 // pred_region
        _
      $region36: #{double_conv_forward.1} parent=11 // pred_fallthru
        _
    $region12: #{double_conv_forward.1} parent=5 // pred_fallthru
      _
    %p224 = scmp.lt.s32.totalorder %s13, 2
    // Predicated region
    $region37: #{double_conv_forward.1} parent=5 // pred_check
      %p225 = pneg %p224
    $region38: #{double_conv_forward.1} parent=5 // pred_check_branch
      %227 = sbr.rel (%p225) target = $region40
    $region39: #{double_conv_forward.1} parent=5 // pred_region
      // Predicated region
      $region41: #{double_conv_forward.1} parent=39 // pred_check
        %p228 = pneg %p33
      $region42: #{double_conv_forward.1} parent=39 // pred_check_branch
        %230 = sbr.rel (%p228) target = $region44
      $region43: #{double_conv_forward.1} parent=39 // pred_region
        %p231 = scmp.lt.s32.totalorder %s13, 1
        %s232 = scalar_select %p231, %s13, 1
        %s233 = smul.addr %s232, 32
        %s234 = smul.addr %s233, 8
        %s235 = scalar_lea.vmem %s0, %s234
      $region44: #{double_conv_forward.1} parent=39 // pred_fallthru
        _
    $region40: #{double_conv_forward.1} parent=5 // pred_fallthru
      _
    %p236 = scmp.le.s32.totalorder 1, %s13
    %p237 = scmp.lt.s32.totalorder %s13, 3
    %p238 = pnand %p236, %p237
    %p239 = pneg %p238
    // Predicated region
    $region45: #{double_conv_forward.1} parent=5 // pred_check
      _
    $region46: #{double_conv_forward.1} parent=5 // pred_check_branch
      %241 = sbr.rel (%p238) target = $region48
    $region47: #{double_conv_forward.1} parent=5 // pred_region
      %s242 = ssub.s32 %s13, 1
      %p243 = scmp.lt.s32.totalorder %s18, 1
      %s244 = scalar_select %p243, %s18, 1
      %s245 = smul.addr %s244, 32
      %s246 = smul.addr %s245, 8
      %s247 = scalar_lea.vmem %s0, %s246
      %p248 = pneg %p39
      %p249 = pneg %p36
      %p250 = pneg %p60
      %p251 = pneg %p57
      %p252 = pneg %p81
      %p253 = pneg %p78
      %p254 = pneg %p102
      %p255 = pneg %p99
      %p256 = pneg %p123
      %p257 = pneg %p120
      %p258 = pneg %p144
      %p259 = pneg %p141
      %p260 = pneg %p165
      %p261 = pneg %p162
      %p262 = pneg %p191
      %p263 = pneg %p188
      %p264 = scmp.lt.s32.totalorder %s18, 1
      %s265 = scalar_select %p264, %s18, 1
      %s266 = smul.addr %s265, 32
      %s267 = smul.addr %s266, 8
      %s268 = scalar_lea.vmem %s7, %s267
      %p269 = scmp.lt.s32.totalorder %s18, 1
      %s270 = scalar_select %p269, %s18, 1
      %s271 = smul.addr %s270, 32
      %s272 = smul.addr %s271, 8
      %s273 = scalar_lea.vmem %s0, %s272
      %p274 = scmp.lt.s32.totalorder %s18, 1
      %s275 = scalar_select %p274, %s18, 1
      %s276 = smul.addr %s275, 32
      %s277 = smul.addr %s276, 8
      %s278 = scalar_lea.vmem %s7, %s277
      %vm280 = vcmask 31744
      %281 = vst.msk [vmem:[#allocation2] sm:$0xff] %vm280, 0.0
      %282 = vst.msk [vmem:[#allocation2 + $0x8] sm:$0xff] %vm280, 0.0
      %vm283 = vcmask 25600
      %284 = vst.msk [vmem:[#allocation2 + $0x10] sm:$0x3] %vm283, 0.0
      %285 = vst.msk [vmem:[#allocation2 + $0x18] sm:$0xff] %vm280, 0.0
      %286 = vst.msk [vmem:[#allocation2 + $0x20] sm:$0xff] %vm280, 0.0
      %287 = vst.msk [vmem:[#allocation2 + $0x28] sm:$0x3] %vm283, 0.0
      %288 = vst.msk [vmem:[#allocation2 + $0x30] sm:$0xff] %vm280, 0.0
      %289 = vst.msk [vmem:[#allocation2 + $0x38] sm:$0xff] %vm280, 0.0
      %290 = vst.msk [vmem:[#allocation2 + $0x40] sm:$0x3] %vm283, 0.0
      %291 = vst.msk [vmem:[#allocation2 + $0x48] sm:$0xff] %vm280, 0.0
      %292 = vst.msk [vmem:[#allocation2 + $0x50] sm:$0xff] %vm280, 0.0
      %293 = vst.msk [vmem:[#allocation2 + $0x58] sm:$0x3] %vm283, 0.0
      %294 = vst.msk [vmem:[#allocation2 + $0x60] sm:$0xff] %vm280, 0.0
      %295 = vst.msk [vmem:[#allocation2 + $0x68] sm:$0xff] %vm280, 0.0
      %296 = vst.msk [vmem:[#allocation2 + $0x70] sm:$0x3] %vm283, 0.0
      %297 = vst.msk [vmem:[#allocation2 + $0x78] sm:$0xff] %vm280, 0.0
      %298 = vst.msk [vmem:[#allocation2 + $0x80] sm:$0xff] %vm280, 0.0
      %299 = vst.msk [vmem:[#allocation2 + $0x88] sm:$0x3] %vm283, 0.0
      %300 = vst.msk [vmem:[#allocation2 + $0x90] sm:$0xff] %vm280, 0.0
      %301 = vst.msk [vmem:[#allocation2 + $0x98] sm:$0xff] %vm280, 0.0
      %302 = vst.msk [vmem:[#allocation2 + $0xa0] sm:$0x3] %vm283, 0.0
      %303 = vst.msk [vmem:[#allocation2 + $0xa8] sm:$0xff] %vm280, 0.0
      %304 = vst.msk [vmem:[#allocation2 + $0xb0] sm:$0xff] %vm280, 0.0
      %305 = vst.msk [vmem:[#allocation2 + $0xb8] sm:$0x3] %vm283, 0.0
      %306 = vst.msk [vmem:[#allocation2 + $0xc0] sm:$0xff] %vm280, 0.0
      %307 = vst.msk [vmem:[#allocation2 + $0xc8] sm:$0xff] %vm280, 0.0
      %308 = vst.msk [vmem:[#allocation2 + $0xd0] sm:$0x3] %vm283, 0.0
      %309 = vst.msk [vmem:[#allocation2 + $0xd8] sm:$0xff] %vm280, 0.0
      %310 = vst.msk [vmem:[#allocation2 + $0xe0] sm:$0xff] %vm280, 0.0
      %311 = vst.msk [vmem:[#allocation2 + $0xe8] sm:$0x3] %vm283, 0.0
      %312 = vst.msk [vmem:[#allocation2 + $0xf0] sm:$0xff] %vm280, 0.0
      %313 = vst.msk [vmem:[#allocation2 + $0xf8] sm:$0xff] %vm280, 0.0
      %314 = vst.msk [vmem:[#allocation2 + $0x100] sm:$0x3] %vm283, 0.0
      %315 = vst.msk [vmem:[#allocation2 + $0x108] sm:$0xff] %vm280, 0.0
      %316 = vst.msk [vmem:[#allocation2 + $0x110] sm:$0xff] %vm280, 0.0
      %317 = vst.msk [vmem:[#allocation2 + $0x118] sm:$0x3] %vm283, 0.0
      %318 = vst.msk [vmem:[#allocation2 + $0x120] sm:$0xff] %vm280, 0.0
      %319 = vst.msk [vmem:[#allocation2 + $0x128] sm:$0xff] %vm280, 0.0
      %320 = vst.msk [vmem:[#allocation2 + $0x130] sm:$0x3] %vm283, 0.0
      %321 = vst.msk [vmem:[#allocation2 + $0x138] sm:$0xff] %vm280, 0.0
      %322 = vst.msk [vmem:[#allocation2 + $0x140] sm:$0xff] %vm280, 0.0
      %323 = vst.msk [vmem:[#allocation2 + $0x148] sm:$0x3] %vm283, 0.0
      %324 = vst.msk [vmem:[#allocation2 + $0x150] sm:$0xff] %vm280, 0.0
      %325 = vst.msk [vmem:[#allocation2 + $0x158] sm:$0xff] %vm280, 0.0
      %326 = vst.msk [vmem:[#allocation2 + $0x160] sm:$0x3] %vm283, 0.0
      %327 = vst.msk [vmem:[#allocation2 + $0x168] sm:$0xff] %vm280, 0.0
      %328 = vst.msk [vmem:[#allocation2 + $0x170] sm:$0xff] %vm280, 0.0
      %329 = vst.msk [vmem:[#allocation2 + $0x178] sm:$0x3] %vm283, 0.0
      %330 = vst.msk [vmem:[#allocation2 + $0x180] sm:$0xff] %vm280, 0.0
      %331 = vst.msk [vmem:[#allocation2 + $0x188] sm:$0xff] %vm280, 0.0
      %332 = vst.msk [vmem:[#allocation2 + $0x190] sm:$0x3] %vm283, 0.0
      %333 = vst.msk [vmem:[#allocation2 + $0x198] sm:$0xff] %vm280, 0.0
      %334 = vst.msk [vmem:[#allocation2 + $0x1a0] sm:$0xff] %vm280, 0.0
      %335 = vst.msk [vmem:[#allocation2 + $0x1a8] sm:$0x3] %vm283, 0.0
      %v336 = vld [vmem:[%s273] sm:$0xff]
      %v337 = vld [vmem:[%s273 + $0x8] sm:$0xff]
      %v338 = vld [vmem:[%s273 + $0x10] sm:$0xff]
      %v339 = vld [vmem:[%s273 + $0x18] sm:$0xff]
      %v340 = vld [vmem:[%s273 + $0x20] sm:$0xff]
      %v341 = vld [vmem:[%s273 + $0x28] sm:$0xff]
      %v342 = vld [vmem:[%s273 + $0x30] sm:$0xff]
      %v343 = vld [vmem:[%s273 + $0x38] sm:$0xff]
      %v344 = vld [vmem:[%s273 + $0x40] sm:$0xff]
      %v345 = vld [vmem:[%s273 + $0x48] sm:$0xff]
      %v346 = vld [vmem:[%s273 + $0x50] sm:$0xff]
      %v347 = vld [vmem:[%s273 + $0x58] sm:$0xff]
      %v348 = vld [vmem:[%s273 + $0x60] sm:$0xff]
      %v349 = vld [vmem:[%s273 + $0x68] sm:$0xff]
      %v350 = vld [vmem:[%s273 + $0x70] sm:$0xff]
      %v351 = vld [vmem:[%s273 + $0x78] sm:$0xff]
      %v352 = vld [vmem:[%s273 + $0x80] sm:$0xff]
      %v353 = vld [vmem:[%s273 + $0x88] sm:$0xff]
      %v354 = vld [vmem:[%s273 + $0x90] sm:$0xff]
      %v355 = vld [vmem:[%s273 + $0x98] sm:$0xff]
      %v356 = vld [vmem:[%s273 + $0xa0] sm:$0xff]
      %v357 = vld [vmem:[%s273 + $0xa8] sm:$0xff]
      %v358 = vld [vmem:[%s273 + $0xb0] sm:$0xff]
      %v359 = vld [vmem:[%s273 + $0xb8] sm:$0xff]
      %v360 = vld [vmem:[%s273 + $0xc0] sm:$0xff]
      %v361 = vld [vmem:[%s273 + $0xc8] sm:$0xff]
      %v362 = vld [vmem:[%s273 + $0xd0] sm:$0xff]
      %v363 = vld [vmem:[%s273 + $0xd8] sm:$0xff]
      %v364 = vld [vmem:[%s273 + $0xe0] sm:$0xff]
      %v365 = vld [vmem:[%s273 + $0xe8] sm:$0xff]
      %v366 = vld [vmem:[%s273 + $0xf0] sm:$0xff]
      %v367 = vld [vmem:[%s273 + $0xf8] sm:$0xff]
      %s368 = scalar_lea.vmem [#allocation2], 24
      %369 = vst.msk [vmem:[%s368 + $0x1] sm:$0xff] %vm280, %v336
      %370 = vst.msk [vmem:[%s368 + $0x9] sm:$0xff] %vm280, %v337
      %371 = vst.msk [vmem:[%s368 + $0x19] sm:$0xff] %vm280, %v338
      %372 = vst.msk [vmem:[%s368 + $0x21] sm:$0xff] %vm280, %v339
      %373 = vst.msk [vmem:[%s368 + $0x31] sm:$0xff] %vm280, %v340
      %374 = vst.msk [vmem:[%s368 + $0x39] sm:$0xff] %vm280, %v341
      %375 = vst.msk [vmem:[%s368 + $0x49] sm:$0xff] %vm280, %v342
      %376 = vst.msk [vmem:[%s368 + $0x51] sm:$0xff] %vm280, %v343
      %377 = vst.msk [vmem:[%s368 + $0x61] sm:$0xff] %vm280, %v344
      %378 = vst.msk [vmem:[%s368 + $0x69] sm:$0xff] %vm280, %v345
      %379 = vst.msk [vmem:[%s368 + $0x79] sm:$0xff] %vm280, %v346
      %380 = vst.msk [vmem:[%s368 + $0x81] sm:$0xff] %vm280, %v347
      %381 = vst.msk [vmem:[%s368 + $0x91] sm:$0xff] %vm280, %v348
      %382 = vst.msk [vmem:[%s368 + $0x99] sm:$0xff] %vm280, %v349
      %383 = vst.msk [vmem:[%s368 + $0xa9] sm:$0xff] %vm280, %v350
      %384 = vst.msk [vmem:[%s368 + $0xb1] sm:$0xff] %vm280, %v351
      %385 = vst.msk [vmem:[%s368 + $0xc1] sm:$0xff] %vm280, %v352
      %386 = vst.msk [vmem:[%s368 + $0xc9] sm:$0xff] %vm280, %v353
      %387 = vst.msk [vmem:[%s368 + $0xd9] sm:$0xff] %vm280, %v354
      %388 = vst.msk [vmem:[%s368 + $0xe1] sm:$0xff] %vm280, %v355
      %389 = vst.msk [vmem:[%s368 + $0xf1] sm:$0xff] %vm280, %v356
      %390 = vst.msk [vmem:[%s368 + $0xf9] sm:$0xff] %vm280, %v357
      %391 = vst.msk [vmem:[%s368 + $0x109] sm:$0xff] %vm280, %v358
      %392 = vst.msk [vmem:[%s368 + $0x111] sm:$0xff] %vm280, %v359
      %393 = vst.msk [vmem:[%s368 + $0x121] sm:$0xff] %vm280, %v360
      %394 = vst.msk [vmem:[%s368 + $0x129] sm:$0xff] %vm280, %v361
      %395 = vst.msk [vmem:[%s368 + $0x139] sm:$0xff] %vm280, %v362
      %396 = vst.msk [vmem:[%s368 + $0x141] sm:$0xff] %vm280, %v363
      %397 = vst.msk [vmem:[%s368 + $0x151] sm:$0xff] %vm280, %v364
      %398 = vst.msk [vmem:[%s368 + $0x159] sm:$0xff] %vm280, %v365
      %399 = vst.msk [vmem:[%s368 + $0x169] sm:$0xff] %vm280, %v366
      %400 = vst.msk [vmem:[%s368 + $0x171] sm:$0xff] %vm280, %v367
      %v401 = vld [vmem:[#allocation2] sm:$0xff]
      %v402 = vld [vmem:[#allocation2 + $0x8] sm:$0xff]
      %v403 = vld [vmem:[#allocation2 + $0x10] sm:$0x3]
      %v404 = vld [vmem:[#allocation2 + $0x18] sm:$0xff]
      %v405 = vld [vmem:[#allocation2 + $0x20] sm:$0xff]
      %v406 = vld [vmem:[#allocation2 + $0x28] sm:$0x3]
      %v407 = vld [vmem:[#allocation2 + $0x30] sm:$0xff]
      %v408 = vld [vmem:[#allocation2 + $0x38] sm:$0xff]
      %v409 = vld [vmem:[#allocation2 + $0x40] sm:$0x3]
      %v410 = vld [vmem:[#allocation2 + $0x48] sm:$0xff]
      %v411 = vld [vmem:[#allocation2 + $0x50] sm:$0xff]
      %v412 = vld [vmem:[#allocation2 + $0x58] sm:$0x3]
      %v413 = vld [vmem:[#allocation2 + $0x60] sm:$0xff]
      %v414 = vld [vmem:[#allocation2 + $0x68] sm:$0xff]
      %v415 = vld [vmem:[#allocation2 + $0x70] sm:$0x3]
      %v416 = vld [vmem:[#allocation2 + $0x78] sm:$0xff]
      %v417 = vld [vmem:[#allocation2 + $0x80] sm:$0xff]
      %v418 = vld [vmem:[#allocation2 + $0x88] sm:$0x3]
      %v419 = vld [vmem:[#allocation2 + $0x90] sm:$0xff]
      %v420 = vld [vmem:[#allocation2 + $0x98] sm:$0xff]
      %v421 = vld [vmem:[#allocation2 + $0xa0] sm:$0x3]
      %v422 = vld [vmem:[#allocation2 + $0xa8] sm:$0xff]
      %v423 = vld [vmem:[#allocation2 + $0xb0] sm:$0xff]
      %v424 = vld [vmem:[#allocation2 + $0xb8] sm:$0x3]
      %v425 = vld [vmem:[#allocation2 + $0xc0] sm:$0xff]
      %v426 = vld [vmem:[#allocation2 + $0xc8] sm:$0xff]
      %v427 = vld [vmem:[#allocation2 + $0xd0] sm:$0x3]
      %v428 = vld [vmem:[#allocation2 + $0xd8] sm:$0xff]
      %v429 = vld [vmem:[#allocation2 + $0xe0] sm:$0xff]
      %v430 = vld [vmem:[#allocation2 + $0xe8] sm:$0x3]
      %v431 = vld [vmem:[#allocation2 + $0xf0] sm:$0xff]
      %v432 = vld [vmem:[#allocation2 + $0xf8] sm:$0xff]
      %v433 = vld [vmem:[#allocation2 + $0x100] sm:$0x3]
      %v434 = vld [vmem:[#allocation2 + $0x108] sm:$0xff]
      %v435 = vld [vmem:[#allocation2 + $0x110] sm:$0xff]
      %v436 = vld [vmem:[#allocation2 + $0x118] sm:$0x3]
      %v437 = vld [vmem:[#allocation2 + $0x120] sm:$0xff]
      %v438 = vld [vmem:[#allocation2 + $0x128] sm:$0xff]
      %v439 = vld [vmem:[#allocation2 + $0x130] sm:$0x3]
      %v440 = vld [vmem:[#allocation2 + $0x138] sm:$0xff]
      %v441 = vld [vmem:[#allocation2 + $0x140] sm:$0xff]
      %v442 = vld [vmem:[#allocation2 + $0x148] sm:$0x3]
      %v443 = vld [vmem:[#allocation2 + $0x150] sm:$0xff]
      %v444 = vld [vmem:[#allocation2 + $0x158] sm:$0xff]
      %v445 = vld [vmem:[#allocation2 + $0x160] sm:$0x3]
      %v446 = vld [vmem:[#allocation2 + $0x168] sm:$0xff]
      %v447 = vld [vmem:[#allocation2 + $0x170] sm:$0xff]
      %v448 = vld [vmem:[#allocation2 + $0x178] sm:$0x3]
      %v449 = vld [vmem:[#allocation2 + $0x180] sm:$0xff]
      %v450 = vld [vmem:[#allocation2 + $0x188] sm:$0xff]
      %v451 = vld [vmem:[#allocation2 + $0x190] sm:$0x3]
      %v452 = vld [vmem:[#allocation2 + $0x198] sm:$0xff]
      %v453 = vld [vmem:[#allocation2 + $0x1a0] sm:$0xff]
      %v454 = vld [vmem:[#allocation2 + $0x1a8] sm:$0x3]
      %v455 = vpack.c.bf16 %v402, %v401
      %v456 = vpack.c.bf16 %v405, %v404
      %v457 = vpack.c.bf16 %v408, %v407
      %v458 = vpack.c.bf16 %v411, %v410
      %v459 = vpack.c.bf16 %v414, %v413
      %v460 = vpack.c.bf16 %v417, %v416
      %v461 = vpack.c.bf16 %v420, %v419
      %v462 = vpack.c.bf16 %v423, %v422
      %v463 = vpack.c.bf16 %v426, %v425
      %v464 = vpack.c.bf16 %v429, %v428
      %v465 = vpack.c.bf16 %v432, %v431
      %v466 = vpack.c.bf16 %v435, %v434
      %v467 = vpack.c.bf16 %v438, %v437
      %v468 = vpack.c.bf16 %v441, %v440
      %v469 = vpack.c.bf16 %v444, %v443
      %v470 = vpack.c.bf16 %v447, %v446
      %v487 = vunpack.c.l.b16 %v455
      %v488 = vunpack.c.h.b16 %v455
      %v489 = vunpack.c.l.b16 %v456
      %v490 = vunpack.c.h.b16 %v456
      %v491 = vunpack.c.l.b16 %v457
      %v492 = vunpack.c.h.b16 %v457
      %v493 = vunpack.c.l.b16 %v458
      %v494 = vunpack.c.h.b16 %v458
      %v495 = vunpack.c.l.b16 %v459
      %v496 = vunpack.c.h.b16 %v459
      %v497 = vunpack.c.l.b16 %v460
      %v498 = vunpack.c.h.b16 %v460
      %v499 = vunpack.c.l.b16 %v461
      %v500 = vunpack.c.h.b16 %v461
      %v501 = vunpack.c.l.b16 %v462
      %v502 = vunpack.c.h.b16 %v462
      %v503 = vunpack.c.l.b16 %v463
      %v504 = vunpack.c.h.b16 %v463
      %v505 = vunpack.c.l.b16 %v464
      %v506 = vunpack.c.h.b16 %v464
      %v507 = vunpack.c.l.b16 %v465
      %v508 = vunpack.c.h.b16 %v465
      %v509 = vunpack.c.l.b16 %v466
      %v510 = vunpack.c.h.b16 %v466
      %v511 = vunpack.c.l.b16 %v467
      %v512 = vunpack.c.h.b16 %v467
      %v513 = vunpack.c.l.b16 %v468
      %v514 = vunpack.c.h.b16 %v468
      %v515 = vunpack.c.l.b16 %v469
      %v516 = vunpack.c.h.b16 %v469
      %v517 = vunpack.c.l.b16 %v470
      %v518 = vunpack.c.h.b16 %v470
      %v519 = vpack.c.b16 %v487, %v487
      %v520 = vpack.c.b16 %v488, %v488
      %v521 = vpack.c.b16 %v489, %v489
      %v522 = vpack.c.b16 %v490, %v490
      %v523 = vpack.c.b16 %v491, %v491
      %v524 = vpack.c.b16 %v492, %v492
      %v525 = vpack.c.b16 %v493, %v493
      %v526 = vpack.c.b16 %v494, %v494
      %v527 = vpack.c.b16 %v495, %v495
      %v528 = vpack.c.b16 %v496, %v496
      %v529 = vpack.c.b16 %v497, %v497
      %v530 = vpack.c.b16 %v498, %v498
      %v531 = vpack.c.b16 %v499, %v499
      %v532 = vpack.c.b16 %v500, %v500
      %v533 = vpack.c.b16 %v501, %v501
      %v534 = vpack.c.b16 %v502, %v502
      %v535 = vpack.c.b16 %v503, %v503
      %v536 = vpack.c.b16 %v504, %v504
      %v537 = vpack.c.b16 %v505, %v505
      %v538 = vpack.c.b16 %v506, %v506
      %v539 = vpack.c.b16 %v507, %v507
      %v540 = vpack.c.b16 %v508, %v508
      %v541 = vpack.c.b16 %v509, %v509
      %v542 = vpack.c.b16 %v510, %v510
      %v543 = vpack.c.b16 %v511, %v511
      %v544 = vpack.c.b16 %v512, %v512
      %v545 = vpack.c.b16 %v513, %v513
      %v546 = vpack.c.b16 %v514, %v514
      %v547 = vpack.c.b16 %v515, %v515
      %v548 = vpack.c.b16 %v516, %v516
      %v549 = vpack.c.b16 %v517, %v517
      %v550 = vpack.c.b16 %v518, %v518
      %vm583 = vcmask 27648
      %584 = vst.msk [vmem:[#allocation4] sm:$0xf] %vm583, %v519
      %585 = vst.msk [vmem:[#allocation4 + $0x4] sm:$0xf] %vm583, %v520
      %586 = vst.msk [vmem:[#allocation4 + $0x8] sm:$0xf] %vm583, %v521
      %587 = vst.msk [vmem:[#allocation4 + $0xc] sm:$0xf] %vm583, %v522
      %588 = vst.msk [vmem:[#allocation4 + $0x10] sm:$0xf] %vm583, %v523
      %589 = vst.msk [vmem:[#allocation4 + $0x14] sm:$0xf] %vm583, %v524
      %590 = vst.msk [vmem:[#allocation4 + $0x18] sm:$0xf] %vm583, %v525
      %591 = vst.msk [vmem:[#allocation4 + $0x1c] sm:$0xf] %vm583, %v526
      %592 = vst.msk [vmem:[#allocation4 + $0x20] sm:$0xf] %vm583, %v527
      %593 = vst.msk [vmem:[#allocation4 + $0x24] sm:$0xf] %vm583, %v528
      %594 = vst.msk [vmem:[#allocation4 + $0x28] sm:$0xf] %vm583, %v529
      %595 = vst.msk [vmem:[#allocation4 + $0x2c] sm:$0xf] %vm583, %v530
      %596 = vst.msk [vmem:[#allocation4 + $0x30] sm:$0xf] %vm583, %v531
      %597 = vst.msk [vmem:[#allocation4 + $0x34] sm:$0xf] %vm583, %v532
      %598 = vst.msk [vmem:[#allocation4 + $0x38] sm:$0xf] %vm583, %v533
      %599 = vst.msk [vmem:[#allocation4 + $0x3c] sm:$0xf] %vm583, %v534
      %600 = vst.msk [vmem:[#allocation4 + $0x40] sm:$0xf] %vm583, %v535
      %601 = vst.msk [vmem:[#allocation4 + $0x44] sm:$0xf] %vm583, %v536
      %602 = vst.msk [vmem:[#allocation4 + $0x48] sm:$0xf] %vm583, %v537
      %603 = vst.msk [vmem:[#allocation4 + $0x4c] sm:$0xf] %vm583, %v538
      %604 = vst.msk [vmem:[#allocation4 + $0x50] sm:$0xf] %vm583, %v539
      %605 = vst.msk [vmem:[#allocation4 + $0x54] sm:$0xf] %vm583, %v540
      %606 = vst.msk [vmem:[#allocation4 + $0x58] sm:$0xf] %vm583, %v541
      %607 = vst.msk [vmem:[#allocation4 + $0x5c] sm:$0xf] %vm583, %v542
      %608 = vst.msk [vmem:[#allocation4 + $0x60] sm:$0xf] %vm583, %v543
      %609 = vst.msk [vmem:[#allocation4 + $0x64] sm:$0xf] %vm583, %v544
      %610 = vst.msk [vmem:[#allocation4 + $0x68] sm:$0xf] %vm583, %v545
      %611 = vst.msk [vmem:[#allocation4 + $0x6c] sm:$0xf] %vm583, %v546
      %612 = vst.msk [vmem:[#allocation4 + $0x70] sm:$0xf] %vm583, %v547
      %613 = vst.msk [vmem:[#allocation4 + $0x74] sm:$0xf] %vm583, %v548
      %614 = vst.msk [vmem:[#allocation4 + $0x78] sm:$0xf] %vm583, %v549
      %615 = vst.msk [vmem:[#allocation4 + $0x7c] sm:$0xf] %vm583, %v550
      %vm664 = vcmask 1046528
      %v665 = vrot.slane %v401, 1
      %v666 = vrot.slane %v402, 1
      %v667 = vsel %vm664, %v665, %v666
      %v668 = vrot.slane %v403, 1
      %v669 = vsel %vm664, %v666, %v668
      %v670 = vrot.slane %v404, 1
      %v671 = vrot.slane %v405, 1
      %v672 = vsel %vm664, %v670, %v671
      %v673 = vrot.slane %v406, 1
      %v674 = vsel %vm664, %v671, %v673
      %v675 = vrot.slane %v407, 1
      %v676 = vrot.slane %v408, 1
      %v677 = vsel %vm664, %v675, %v676
      %v678 = vrot.slane %v409, 1
      %v679 = vsel %vm664, %v676, %v678
      %v680 = vrot.slane %v410, 1
      %v681 = vrot.slane %v411, 1
      %v682 = vsel %vm664, %v680, %v681
      %v683 = vrot.slane %v412, 1
      %v684 = vsel %vm664, %v681, %v683
      %v685 = vrot.slane %v413, 1
      %v686 = vrot.slane %v414, 1
      %v687 = vsel %vm664, %v685, %v686
      %v688 = vrot.slane %v415, 1
      %v689 = vsel %vm664, %v686, %v688
      %v690 = vrot.slane %v416, 1
      %v691 = vrot.slane %v417, 1
      %v692 = vsel %vm664, %v690, %v691
      %v693 = vrot.slane %v418, 1
      %v694 = vsel %vm664, %v691, %v693
      %v695 = vrot.slane %v419, 1
      %v696 = vrot.slane %v420, 1
      %v697 = vsel %vm664, %v695, %v696
      %v698 = vrot.slane %v421, 1
      %v699 = vsel %vm664, %v696, %v698
      %v700 = vrot.slane %v422, 1
      %v701 = vrot.slane %v423, 1
      %v702 = vsel %vm664, %v700, %v701
      %v703 = vrot.slane %v424, 1
      %v704 = vsel %vm664, %v701, %v703
      %v705 = vrot.slane %v425, 1
      %v706 = vrot.slane %v426, 1
      %v707 = vsel %vm664, %v705, %v706
      %v708 = vrot.slane %v427, 1
      %v709 = vsel %vm664, %v706, %v708
      %v710 = vrot.slane %v428, 1
      %v711 = vrot.slane %v429, 1
      %v712 = vsel %vm664, %v710, %v711
      %v713 = vrot.slane %v430, 1
      %v714 = vsel %vm664, %v711, %v713
      %v715 = vrot.slane %v431, 1
      %v716 = vrot.slane %v432, 1
      %v717 = vsel %vm664, %v715, %v716
      %v718 = vrot.slane %v433, 1
      %v719 = vsel %vm664, %v716, %v718
      %v720 = vrot.slane %v434, 1
      %v721 = vrot.slane %v435, 1
      %v722 = vsel %vm664, %v720, %v721
      %v723 = vrot.slane %v436, 1
      %v724 = vsel %vm664, %v721, %v723
      %v725 = vrot.slane %v437, 1
      %v726 = vrot.slane %v438, 1
      %v727 = vsel %vm664, %v725, %v726
      %v728 = vrot.slane %v439, 1
      %v729 = vsel %vm664, %v726, %v728
      %v730 = vrot.slane %v440, 1
      %v731 = vrot.slane %v441, 1
      %v732 = vsel %vm664, %v730, %v731
      %v733 = vrot.slane %v442, 1
      %v734 = vsel %vm664, %v731, %v733
      %v735 = vrot.slane %v443, 1
      %v736 = vrot.slane %v444, 1
      %v737 = vsel %vm664, %v735, %v736
      %v738 = vrot.slane %v445, 1
      %v739 = vsel %vm664, %v736, %v738
      %v740 = vrot.slane %v446, 1
      %v741 = vrot.slane %v447, 1
      %v742 = vsel %vm664, %v740, %v741
      %v743 = vrot.slane %v448, 1
      %v744 = vsel %vm664, %v741, %v743
      %v777 = vpack.c.bf16 %v669, %v667
      %v778 = vpack.c.bf16 %v674, %v672
      %v779 = vpack.c.bf16 %v679, %v677
      %v780 = vpack.c.bf16 %v684, %v682
      %v781 = vpack.c.bf16 %v689, %v687
      %v782 = vpack.c.bf16 %v694, %v692
      %v783 = vpack.c.bf16 %v699, %v697
      %v784 = vpack.c.bf16 %v704, %v702
      %v785 = vpack.c.bf16 %v709, %v707
      %v786 = vpack.c.bf16 %v714, %v712
      %v787 = vpack.c.bf16 %v719, %v717
      %v788 = vpack.c.bf16 %v724, %v722
      %v789 = vpack.c.bf16 %v729, %v727
      %v790 = vpack.c.bf16 %v734, %v732
      %v791 = vpack.c.bf16 %v739, %v737
      %v792 = vpack.c.bf16 %v744, %v742
      %v809 = vunpack.c.l.b16 %v777
      %v810 = vunpack.c.h.b16 %v777
      %v811 = vunpack.c.l.b16 %v778
      %v812 = vunpack.c.h.b16 %v778
      %v813 = vunpack.c.l.b16 %v779
      %v814 = vunpack.c.h.b16 %v779
      %v815 = vunpack.c.l.b16 %v780
      %v816 = vunpack.c.h.b16 %v780
      %v817 = vunpack.c.l.b16 %v781
      %v818 = vunpack.c.h.b16 %v781
      %v819 = vunpack.c.l.b16 %v782
      %v820 = vunpack.c.h.b16 %v782
      %v821 = vunpack.c.l.b16 %v783
      %v822 = vunpack.c.h.b16 %v783
      %v823 = vunpack.c.l.b16 %v784
      %v824 = vunpack.c.h.b16 %v784
      %v825 = vunpack.c.l.b16 %v785
      %v826 = vunpack.c.h.b16 %v785
      %v827 = vunpack.c.l.b16 %v786
      %v828 = vunpack.c.h.b16 %v786
      %v829 = vunpack.c.l.b16 %v787
      %v830 = vunpack.c.h.b16 %v787
      %v831 = vunpack.c.l.b16 %v788
      %v832 = vunpack.c.h.b16 %v788
      %v833 = vunpack.c.l.b16 %v789
      %v834 = vunpack.c.h.b16 %v789
      %v835 = vunpack.c.l.b16 %v790
      %v836 = vunpack.c.h.b16 %v790
      %v837 = vunpack.c.l.b16 %v791
      %v838 = vunpack.c.h.b16 %v791
      %v839 = vunpack.c.l.b16 %v792
      %v840 = vunpack.c.h.b16 %v792
      %v841 = vpack.c.b16 %v809, %v809
      %v842 = vpack.c.b16 %v810, %v810
      %v843 = vpack.c.b16 %v811, %v811
      %v844 = vpack.c.b16 %v812, %v812
      %v845 = vpack.c.b16 %v813, %v813
      %v846 = vpack.c.b16 %v814, %v814
      %v847 = vpack.c.b16 %v815, %v815
      %v848 = vpack.c.b16 %v816, %v816
      %v849 = vpack.c.b16 %v817, %v817
      %v850 = vpack.c.b16 %v818, %v818
      %v851 = vpack.c.b16 %v819, %v819
      %v852 = vpack.c.b16 %v820, %v820
      %v853 = vpack.c.b16 %v821, %v821
      %v854 = vpack.c.b16 %v822, %v822
      %v855 = vpack.c.b16 %v823, %v823
      %v856 = vpack.c.b16 %v824, %v824
      %v857 = vpack.c.b16 %v825, %v825
      %v858 = vpack.c.b16 %v826, %v826
      %v859 = vpack.c.b16 %v827, %v827
      %v860 = vpack.c.b16 %v828, %v828
      %v861 = vpack.c.b16 %v829, %v829
      %v862 = vpack.c.b16 %v830, %v830
      %v863 = vpack.c.b16 %v831, %v831
      %v864 = vpack.c.b16 %v832, %v832
      %v865 = vpack.c.b16 %v833, %v833
      %v866 = vpack.c.b16 %v834, %v834
      %v867 = vpack.c.b16 %v835, %v835
      %v868 = vpack.c.b16 %v836, %v836
      %v869 = vpack.c.b16 %v837, %v837
      %v870 = vpack.c.b16 %v838, %v838
      %v871 = vpack.c.b16 %v839, %v839
      %v872 = vpack.c.b16 %v840, %v840
      %873 = vrot.lane.b32.xlu0 %v841, 4
      %v874 = vpop.permute.xlu0 %873
      %875 = vrot.lane.b32.xlu0 %v842, 4
      %v876 = vpop.permute.xlu0 %875
      %877 = vrot.lane.b32.xlu0 %v843, 4
      %v878 = vpop.permute.xlu0 %877
      %879 = vrot.lane.b32.xlu0 %v844, 4
      %v880 = vpop.permute.xlu0 %879
      %881 = vrot.lane.b32.xlu0 %v845, 4
      %v882 = vpop.permute.xlu0 %881
      %883 = vrot.lane.b32.xlu0 %v846, 4
      %v884 = vpop.permute.xlu0 %883
      %885 = vrot.lane.b32.xlu0 %v847, 4
      %v886 = vpop.permute.xlu0 %885
      %887 = vrot.lane.b32.xlu0 %v848, 4
      %v888 = vpop.permute.xlu0 %887
      %889 = vrot.lane.b32.xlu0 %v849, 4
      %v890 = vpop.permute.xlu0 %889
      %891 = vrot.lane.b32.xlu0 %v850, 4
      %v892 = vpop.permute.xlu0 %891
      %893 = vrot.lane.b32.xlu0 %v851, 4
      %v894 = vpop.permute.xlu0 %893
      %895 = vrot.lane.b32.xlu0 %v852, 4
      %v896 = vpop.permute.xlu0 %895
      %897 = vrot.lane.b32.xlu0 %v853, 4
      %v898 = vpop.permute.xlu0 %897
      %899 = vrot.lane.b32.xlu0 %v854, 4
      %v900 = vpop.permute.xlu0 %899
      %901 = vrot.lane.b32.xlu0 %v855, 4
      %v902 = vpop.permute.xlu0 %901
      %903 = vrot.lane.b32.xlu0 %v856, 4
      %v904 = vpop.permute.xlu0 %903
      %905 = vrot.lane.b32.xlu0 %v857, 4
      %v906 = vpop.permute.xlu0 %905
      %907 = vrot.lane.b32.xlu0 %v858, 4
      %v908 = vpop.permute.xlu0 %907
      %909 = vrot.lane.b32.xlu0 %v859, 4
      %v910 = vpop.permute.xlu0 %909
      %911 = vrot.lane.b32.xlu0 %v860, 4
      %v912 = vpop.permute.xlu0 %911
      %913 = vrot.lane.b32.xlu0 %v861, 4
      %v914 = vpop.permute.xlu0 %913
      %915 = vrot.lane.b32.xlu0 %v862, 4
      %v916 = vpop.permute.xlu0 %915
      %917 = vrot.lane.b32.xlu0 %v863, 4
      %v918 = vpop.permute.xlu0 %917
      %919 = vrot.lane.b32.xlu0 %v864, 4
      %v920 = vpop.permute.xlu0 %919
      %921 = vrot.lane.b32.xlu0 %v865, 4
      %v922 = vpop.permute.xlu0 %921
      %923 = vrot.lane.b32.xlu0 %v866, 4
      %v924 = vpop.permute.xlu0 %923
      %925 = vrot.lane.b32.xlu0 %v867, 4
      %v926 = vpop.permute.xlu0 %925
      %927 = vrot.lane.b32.xlu0 %v868, 4
      %v928 = vpop.permute.xlu0 %927
      %929 = vrot.lane.b32.xlu0 %v869, 4
      %v930 = vpop.permute.xlu0 %929
      %931 = vrot.lane.b32.xlu0 %v870, 4
      %v932 = vpop.permute.xlu0 %931
      %933 = vrot.lane.b32.xlu0 %v871, 4
      %v934 = vpop.permute.xlu0 %933
      %935 = vrot.lane.b32.xlu0 %v872, 4
      %v936 = vpop.permute.xlu0 %935
      %vm969 = vcmask 60448
      %970 = vst.msk [vmem:[#allocation4] sm:$0xf] %vm969, %v874
      %971 = vst.msk [vmem:[#allocation4 + $0x4] sm:$0xf] %vm969, %v876
      %972 = vst.msk [vmem:[#allocation4 + $0x8] sm:$0xf] %vm969, %v878
      %973 = vst.msk [vmem:[#allocation4 + $0xc] sm:$0xf] %vm969, %v880
      %974 = vst.msk [vmem:[#allocation4 + $0x10] sm:$0xf] %vm969, %v882
      %975 = vst.msk [vmem:[#allocation4 + $0x14] sm:$0xf] %vm969, %v884
      %976 = vst.msk [vmem:[#allocation4 + $0x18] sm:$0xf] %vm969, %v886
      %977 = vst.msk [vmem:[#allocation4 + $0x1c] sm:$0xf] %vm969, %v888
      %978 = vst.msk [vmem:[#allocation4 + $0x20] sm:$0xf] %vm969, %v890
      %979 = vst.msk [vmem:[#allocation4 + $0x24] sm:$0xf] %vm969, %v892
      %980 = vst.msk [vmem:[#allocation4 + $0x28] sm:$0xf] %vm969, %v894
      %981 = vst.msk [vmem:[#allocation4 + $0x2c] sm:$0xf] %vm969, %v896
      %982 = vst.msk [vmem:[#allocation4 + $0x30] sm:$0xf] %vm969, %v898
      %983 = vst.msk [vmem:[#allocation4 + $0x34] sm:$0xf] %vm969, %v900
      %984 = vst.msk [vmem:[#allocation4 + $0x38] sm:$0xf] %vm969, %v902
      %985 = vst.msk [vmem:[#allocation4 + $0x3c] sm:$0xf] %vm969, %v904
      %986 = vst.msk [vmem:[#allocation4 + $0x40] sm:$0xf] %vm969, %v906
      %987 = vst.msk [vmem:[#allocation4 + $0x44] sm:$0xf] %vm969, %v908
      %988 = vst.msk [vmem:[#allocation4 + $0x48] sm:$0xf] %vm969, %v910
      %989 = vst.msk [vmem:[#allocation4 + $0x4c] sm:$0xf] %vm969, %v912
      %990 = vst.msk [vmem:[#allocation4 + $0x50] sm:$0xf] %vm969, %v914
      %991 = vst.msk [vmem:[#allocation4 + $0x54] sm:$0xf] %vm969, %v916
      %992 = vst.msk [vmem:[#allocation4 + $0x58] sm:$0xf] %vm969, %v918
      %993 = vst.msk [vmem:[#allocation4 + $0x5c] sm:$0xf] %vm969, %v920
      %994 = vst.msk [vmem:[#allocation4 + $0x60] sm:$0xf] %vm969, %v922
      %995 = vst.msk [vmem:[#allocation4 + $0x64] sm:$0xf] %vm969, %v924
      %996 = vst.msk [vmem:[#allocation4 + $0x68] sm:$0xf] %vm969, %v926
      %997 = vst.msk [vmem:[#allocation4 + $0x6c] sm:$0xf] %vm969, %v928
      %998 = vst.msk [vmem:[#allocation4 + $0x70] sm:$0xf] %vm969, %v930
      %999 = vst.msk [vmem:[#allocation4 + $0x74] sm:$0xf] %vm969, %v932
      %1000 = vst.msk [vmem:[#allocation4 + $0x78] sm:$0xf] %vm969, %v934
      %1001 = vst.msk [vmem:[#allocation4 + $0x7c] sm:$0xf] %vm969, %v936
      %vm1002 = vcmask 1045504
      %v1003 = vrot.slane %v401, 2
      %v1004 = vrot.slane %v402, 2
      %v1005 = vsel %vm1002, %v1003, %v1004
      %v1006 = vrot.slane %v403, 2
      %v1007 = vsel %vm1002, %v1004, %v1006
      %v1008 = vrot.slane %v404, 2
      %v1009 = vrot.slane %v405, 2
      %v1010 = vsel %vm1002, %v1008, %v1009
      %v1011 = vrot.slane %v406, 2
      %v1012 = vsel %vm1002, %v1009, %v1011
      %v1013 = vrot.slane %v407, 2
      %v1014 = vrot.slane %v408, 2
      %v1015 = vsel %vm1002, %v1013, %v1014
      %v1016 = vrot.slane %v409, 2
      %v1017 = vsel %vm1002, %v1014, %v1016
      %v1018 = vrot.slane %v410, 2
      %v1019 = vrot.slane %v411, 2
      %v1020 = vsel %vm1002, %v1018, %v1019
      %v1021 = vrot.slane %v412, 2
      %v1022 = vsel %vm1002, %v1019, %v1021
      %v1023 = vrot.slane %v413, 2
      %v1024 = vrot.slane %v414, 2
      %v1025 = vsel %vm1002, %v1023, %v1024
      %v1026 = vrot.slane %v415, 2
      %v1027 = vsel %vm1002, %v1024, %v1026
      %v1028 = vrot.slane %v416, 2
      %v1029 = vrot.slane %v417, 2
      %v1030 = vsel %vm1002, %v1028, %v1029
      %v1031 = vrot.slane %v418, 2
      %v1032 = vsel %vm1002, %v1029, %v1031
      %v1033 = vrot.slane %v419, 2
      %v1034 = vrot.slane %v420, 2
      %v1035 = vsel %vm1002, %v1033, %v1034
      %v1036 = vrot.slane %v421, 2
      %v1037 = vsel %vm1002, %v1034, %v1036
      %v1038 = vrot.slane %v422, 2
      %v1039 = vrot.slane %v423, 2
      %v1040 = vsel %vm1002, %v1038, %v1039
      %v1041 = vrot.slane %v424, 2
      %v1042 = vsel %vm1002, %v1039, %v1041
      %v1043 = vrot.slane %v425, 2
      %v1044 = vrot.slane %v426, 2
      %v1045 = vsel %vm1002, %v1043, %v1044
      %v1046 = vrot.slane %v427, 2
      %v1047 = vsel %vm1002, %v1044, %v1046
      %v1048 = vrot.slane %v428, 2
      %v1049 = vrot.slane %v429, 2
      %v1050 = vsel %vm1002, %v1048, %v1049
      %v1051 = vrot.slane %v430, 2
      %v1052 = vsel %vm1002, %v1049, %v1051
      %v1053 = vrot.slane %v431, 2
      %v1054 = vrot.slane %v432, 2
      %v1055 = vsel %vm1002, %v1053, %v1054
      %v1056 = vrot.slane %v433, 2
      %v1057 = vsel %vm1002, %v1054, %v1056
      %v1058 = vrot.slane %v434, 2
      %v1059 = vrot.slane %v435, 2
      %v1060 = vsel %vm1002, %v1058, %v1059
      %v1061 = vrot.slane %v436, 2
      %v1062 = vsel %vm1002, %v1059, %v1061
      %v1063 = vrot.slane %v437, 2
      %v1064 = vrot.slane %v438, 2
      %v1065 = vsel %vm1002, %v1063, %v1064
      %v1066 = vrot.slane %v439, 2
      %v1067 = vsel %vm1002, %v1064, %v1066
      %v1068 = vrot.slane %v440, 2
      %v1069 = vrot.slane %v441, 2
      %v1070 = vsel %vm1002, %v1068, %v1069
      %v1071 = vrot.slane %v442, 2
      %v1072 = vsel %vm1002, %v1069, %v1071
      %v1073 = vrot.slane %v443, 2
      %v1074 = vrot.slane %v444, 2
      %v1075 = vsel %vm1002, %v1073, %v1074
      %v1076 = vrot.slane %v445, 2
      %v1077 = vsel %vm1002, %v1074, %v1076
      %v1078 = vrot.slane %v446, 2
      %v1079 = vrot.slane %v447, 2
      %v1080 = vsel %vm1002, %v1078, %v1079
      %v1081 = vrot.slane %v448, 2
      %v1082 = vsel %vm1002, %v1079, %v1081
      %v1115 = vpack.c.bf16 %v1007, %v1005
      %v1116 = vpack.c.bf16 %v1012, %v1010
      %v1117 = vpack.c.bf16 %v1017, %v1015
      %v1118 = vpack.c.bf16 %v1022, %v1020
      %v1119 = vpack.c.bf16 %v1027, %v1025
      %v1120 = vpack.c.bf16 %v1032, %v1030
      %v1121 = vpack.c.bf16 %v1037, %v1035
      %v1122 = vpack.c.bf16 %v1042, %v1040
      %v1123 = vpack.c.bf16 %v1047, %v1045
      %v1124 = vpack.c.bf16 %v1052, %v1050
      %v1125 = vpack.c.bf16 %v1057, %v1055
      %v1126 = vpack.c.bf16 %v1062, %v1060
      %v1127 = vpack.c.bf16 %v1067, %v1065
      %v1128 = vpack.c.bf16 %v1072, %v1070
      %v1129 = vpack.c.bf16 %v1077, %v1075
      %v1130 = vpack.c.bf16 %v1082, %v1080
      %v1147 = vunpack.c.l.b16 %v1115
      %v1148 = vunpack.c.h.b16 %v1115
      %v1149 = vunpack.c.l.b16 %v1116
      %v1150 = vunpack.c.h.b16 %v1116
      %v1151 = vunpack.c.l.b16 %v1117
      %v1152 = vunpack.c.h.b16 %v1117
      %v1153 = vunpack.c.l.b16 %v1118
      %v1154 = vunpack.c.h.b16 %v1118
      %v1155 = vunpack.c.l.b16 %v1119
      %v1156 = vunpack.c.h.b16 %v1119
      %v1157 = vunpack.c.l.b16 %v1120
      %v1158 = vunpack.c.h.b16 %v1120
      %v1159 = vunpack.c.l.b16 %v1121
      %v1160 = vunpack.c.h.b16 %v1121
      %v1161 = vunpack.c.l.b16 %v1122
      %v1162 = vunpack.c.h.b16 %v1122
      %v1163 = vunpack.c.l.b16 %v1123
      %v1164 = vunpack.c.h.b16 %v1123
      %v1165 = vunpack.c.l.b16 %v1124
      %v1166 = vunpack.c.h.b16 %v1124
      %v1167 = vunpack.c.l.b16 %v1125
      %v1168 = vunpack.c.h.b16 %v1125
      %v1169 = vunpack.c.l.b16 %v1126
      %v1170 = vunpack.c.h.b16 %v1126
      %v1171 = vunpack.c.l.b16 %v1127
      %v1172 = vunpack.c.h.b16 %v1127
      %v1173 = vunpack.c.l.b16 %v1128
      %v1174 = vunpack.c.h.b16 %v1128
      %v1175 = vunpack.c.l.b16 %v1129
      %v1176 = vunpack.c.h.b16 %v1129
      %v1177 = vunpack.c.l.b16 %v1130
      %v1178 = vunpack.c.h.b16 %v1130
      %v1179 = vpack.c.b16 %v1147, %v1147
      %v1180 = vpack.c.b16 %v1148, %v1148
      %v1181 = vpack.c.b16 %v1149, %v1149
      %v1182 = vpack.c.b16 %v1150, %v1150
      %v1183 = vpack.c.b16 %v1151, %v1151
      %v1184 = vpack.c.b16 %v1152, %v1152
      %v1185 = vpack.c.b16 %v1153, %v1153
      %v1186 = vpack.c.b16 %v1154, %v1154
      %v1187 = vpack.c.b16 %v1155, %v1155
      %v1188 = vpack.c.b16 %v1156, %v1156
      %v1189 = vpack.c.b16 %v1157, %v1157
      %v1190 = vpack.c.b16 %v1158, %v1158
      %v1191 = vpack.c.b16 %v1159, %v1159
      %v1192 = vpack.c.b16 %v1160, %v1160
      %v1193 = vpack.c.b16 %v1161, %v1161
      %v1194 = vpack.c.b16 %v1162, %v1162
      %v1195 = vpack.c.b16 %v1163, %v1163
      %v1196 = vpack.c.b16 %v1164, %v1164
      %v1197 = vpack.c.b16 %v1165, %v1165
      %v1198 = vpack.c.b16 %v1166, %v1166
      %v1199 = vpack.c.b16 %v1167, %v1167
      %v1200 = vpack.c.b16 %v1168, %v1168
      %v1201 = vpack.c.b16 %v1169, %v1169
      %v1202 = vpack.c.b16 %v1170, %v1170
      %v1203 = vpack.c.b16 %v1171, %v1171
      %v1204 = vpack.c.b16 %v1172, %v1172
      %v1205 = vpack.c.b16 %v1173, %v1173
      %v1206 = vpack.c.b16 %v1174, %v1174
      %v1207 = vpack.c.b16 %v1175, %v1175
      %v1208 = vpack.c.b16 %v1176, %v1176
      %v1209 = vpack.c.b16 %v1177, %v1177
      %v1210 = vpack.c.b16 %v1178, %v1178
      %1211 = vrot.lane.b32.xlu0 %v1179, 8
      %v1212 = vpop.permute.xlu0 %1211
      %1213 = vrot.lane.b32.xlu0 %v1180, 8
      %v1214 = vpop.permute.xlu0 %1213
      %1215 = vrot.lane.b32.xlu0 %v1181, 8
      %v1216 = vpop.permute.xlu0 %1215
      %1217 = vrot.lane.b32.xlu0 %v1182, 8
      %v1218 = vpop.permute.xlu0 %1217
      %1219 = vrot.lane.b32.xlu0 %v1183, 8
      %v1220 = vpop.permute.xlu0 %1219
      %1221 = vrot.lane.b32.xlu0 %v1184, 8
      %v1222 = vpop.permute.xlu0 %1221
      %1223 = vrot.lane.b32.xlu0 %v1185, 8
      %v1224 = vpop.permute.xlu0 %1223
      %1225 = vrot.lane.b32.xlu0 %v1186, 8
      %v1226 = vpop.permute.xlu0 %1225
      %1227 = vrot.lane.b32.xlu0 %v1187, 8
      %v1228 = vpop.permute.xlu0 %1227
      %1229 = vrot.lane.b32.xlu0 %v1188, 8
      %v1230 = vpop.permute.xlu0 %1229
      %1231 = vrot.lane.b32.xlu0 %v1189, 8
      %v1232 = vpop.permute.xlu0 %1231
      %1233 = vrot.lane.b32.xlu0 %v1190, 8
      %v1234 = vpop.permute.xlu0 %1233
      %1235 = vrot.lane.b32.xlu0 %v1191, 8
      %v1236 = vpop.permute.xlu0 %1235
      %1237 = vrot.lane.b32.xlu0 %v1192, 8
      %v1238 = vpop.permute.xlu0 %1237
      %1239 = vrot.lane.b32.xlu0 %v1193, 8
      %v1240 = vpop.permute.xlu0 %1239
      %1241 = vrot.lane.b32.xlu0 %v1194, 8
      %v1242 = vpop.permute.xlu0 %1241
      %1243 = vrot.lane.b32.xlu0 %v1195, 8
      %v1244 = vpop.permute.xlu0 %1243
      %1245 = vrot.lane.b32.xlu0 %v1196, 8
      %v1246 = vpop.permute.xlu0 %1245
      %1247 = vrot.lane.b32.xlu0 %v1197, 8
      %v1248 = vpop.permute.xlu0 %1247
      %1249 = vrot.lane.b32.xlu0 %v1198, 8
      %v1250 = vpop.permute.xlu0 %1249
      %1251 = vrot.lane.b32.xlu0 %v1199, 8
      %v1252 = vpop.permute.xlu0 %1251
      %1253 = vrot.lane.b32.xlu0 %v1200, 8
      %v1254 = vpop.permute.xlu0 %1253
      %1255 = vrot.lane.b32.xlu0 %v1201, 8
      %v1256 = vpop.permute.xlu0 %1255
      %1257 = vrot.lane.b32.xlu0 %v1202, 8
      %v1258 = vpop.permute.xlu0 %1257
      %1259 = vrot.lane.b32.xlu0 %v1203, 8
      %v1260 = vpop.permute.xlu0 %1259
      %1261 = vrot.lane.b32.xlu0 %v1204, 8
      %v1262 = vpop.permute.xlu0 %1261
      %1263 = vrot.lane.b32.xlu0 %v1205, 8
      %v1264 = vpop.permute.xlu0 %1263
      %1265 = vrot.lane.b32.xlu0 %v1206, 8
      %v1266 = vpop.permute.xlu0 %1265
      %1267 = vrot.lane.b32.xlu0 %v1207, 8
      %v1268 = vpop.permute.xlu0 %1267
      %1269 = vrot.lane.b32.xlu0 %v1208, 8
      %v1270 = vpop.permute.xlu0 %1269
      %1271 = vrot.lane.b32.xlu0 %v1209, 8
      %v1272 = vpop.permute.xlu0 %1271
      %1273 = vrot.lane.b32.xlu0 %v1210, 8
      %v1274 = vpop.permute.xlu0 %1273
      %vm1307 = vcmask 93248
      %1308 = vst.msk [vmem:[#allocation4] sm:$0xf] %vm1307, %v1212
      %1309 = vst.msk [vmem:[#allocation4 + $0x4] sm:$0xf] %vm1307, %v1214
      %1310 = vst.msk [vmem:[#allocation4 + $0x8] sm:$0xf] %vm1307, %v1216
      %1311 = vst.msk [vmem:[#allocation4 + $0xc] sm:$0xf] %vm1307, %v1218
      %1312 = vst.msk [vmem:[#allocation4 + $0x10] sm:$0xf] %vm1307, %v1220
      %1313 = vst.msk [vmem:[#allocation4 + $0x14] sm:$0xf] %vm1307, %v1222
      %1314 = vst.msk [vmem:[#allocation4 + $0x18] sm:$0xf] %vm1307, %v1224
      %1315 = vst.msk [vmem:[#allocation4 + $0x1c] sm:$0xf] %vm1307, %v1226
      %1316 = vst.msk [vmem:[#allocation4 + $0x20] sm:$0xf] %vm1307, %v1228
      %1317 = vst.msk [vmem:[#allocation4 + $0x24] sm:$0xf] %vm1307, %v1230
      %1318 = vst.msk [vmem:[#allocation4 + $0x28] sm:$0xf] %vm1307, %v1232
      %1319 = vst.msk [vmem:[#allocation4 + $0x2c] sm:$0xf] %vm1307, %v1234
      %1320 = vst.msk [vmem:[#allocation4 + $0x30] sm:$0xf] %vm1307, %v1236
      %1321 = vst.msk [vmem:[#allocation4 + $0x34] sm:$0xf] %vm1307, %v1238
      %1322 = vst.msk [vmem:[#allocation4 + $0x38] sm:$0xf] %vm1307, %v1240
      %1323 = vst.msk [vmem:[#allocation4 + $0x3c] sm:$0xf] %vm1307, %v1242
      %1324 = vst.msk [vmem:[#allocation4 + $0x40] sm:$0xf] %vm1307, %v1244
      %1325 = vst.msk [vmem:[#allocation4 + $0x44] sm:$0xf] %vm1307, %v1246
      %1326 = vst.msk [vmem:[#allocation4 + $0x48] sm:$0xf] %vm1307, %v1248
      %1327 = vst.msk [vmem:[#allocation4 + $0x4c] sm:$0xf] %vm1307, %v1250
      %1328 = vst.msk [vmem:[#allocation4 + $0x50] sm:$0xf] %vm1307, %v1252
      %1329 = vst.msk [vmem:[#allocation4 + $0x54] sm:$0xf] %vm1307, %v1254
      %1330 = vst.msk [vmem:[#allocation4 + $0x58] sm:$0xf] %vm1307, %v1256
      %1331 = vst.msk [vmem:[#allocation4 + $0x5c] sm:$0xf] %vm1307, %v1258
      %1332 = vst.msk [vmem:[#allocation4 + $0x60] sm:$0xf] %vm1307, %v1260
      %1333 = vst.msk [vmem:[#allocation4 + $0x64] sm:$0xf] %vm1307, %v1262
      %1334 = vst.msk [vmem:[#allocation4 + $0x68] sm:$0xf] %vm1307, %v1264
      %1335 = vst.msk [vmem:[#allocation4 + $0x6c] sm:$0xf] %vm1307, %v1266
      %1336 = vst.msk [vmem:[#allocation4 + $0x70] sm:$0xf] %vm1307, %v1268
      %1337 = vst.msk [vmem:[#allocation4 + $0x74] sm:$0xf] %vm1307, %v1270
      %1338 = vst.msk [vmem:[#allocation4 + $0x78] sm:$0xf] %vm1307, %v1272
      %1339 = vst.msk [vmem:[#allocation4 + $0x7c] sm:$0xf] %vm1307, %v1274
      %v1340 = vpack.c.bf16 %v450, %v449
      %v1342 = vunpack.c.l.b16 %v1340
      %v1343 = vunpack.c.h.b16 %v1340
      %v1344 = vpack.c.b16 %v1342, %v1342
      %v1345 = vpack.c.b16 %v1343, %v1343
      %1346 = vrot.lane.b32.xlu0 %v521, 12
      %v1347 = vpop.permute.xlu0 %1346
      %1348 = vrot.lane.b32.xlu0 %v522, 12
      %v1349 = vpop.permute.xlu0 %1348
      %1350 = vrot.lane.b32.xlu0 %v523, 12
      %v1351 = vpop.permute.xlu0 %1350
      %1352 = vrot.lane.b32.xlu0 %v524, 12
      %v1353 = vpop.permute.xlu0 %1352
      %1354 = vrot.lane.b32.xlu0 %v525, 12
      %v1355 = vpop.permute.xlu0 %1354
      %1356 = vrot.lane.b32.xlu0 %v526, 12
      %v1357 = vpop.permute.xlu0 %1356
      %1358 = vrot.lane.b32.xlu0 %v527, 12
      %v1359 = vpop.permute.xlu0 %1358
      %1360 = vrot.lane.b32.xlu0 %v528, 12
      %v1361 = vpop.permute.xlu0 %1360
      %1362 = vrot.lane.b32.xlu0 %v529, 12
      %v1363 = vpop.permute.xlu0 %1362
      %1364 = vrot.lane.b32.xlu0 %v530, 12
      %v1365 = vpop.permute.xlu0 %1364
      %1366 = vrot.lane.b32.xlu0 %v531, 12
      %v1367 = vpop.permute.xlu0 %1366
      %1368 = vrot.lane.b32.xlu0 %v532, 12
      %v1369 = vpop.permute.xlu0 %1368
      %1370 = vrot.lane.b32.xlu0 %v533, 12
      %v1371 = vpop.permute.xlu0 %1370
      %1372 = vrot.lane.b32.xlu0 %v534, 12
      %v1373 = vpop.permute.xlu0 %1372
      %1374 = vrot.lane.b32.xlu0 %v535, 12
      %v1375 = vpop.permute.xlu0 %1374
      %1376 = vrot.lane.b32.xlu0 %v536, 12
      %v1377 = vpop.permute.xlu0 %1376
      %1378 = vrot.lane.b32.xlu0 %v537, 12
      %v1379 = vpop.permute.xlu0 %1378
      %1380 = vrot.lane.b32.xlu0 %v538, 12
      %v1381 = vpop.permute.xlu0 %1380
      %1382 = vrot.lane.b32.xlu0 %v539, 12
      %v1383 = vpop.permute.xlu0 %1382
      %1384 = vrot.lane.b32.xlu0 %v540, 12
      %v1385 = vpop.permute.xlu0 %1384
      %1386 = vrot.lane.b32.xlu0 %v541, 12
      %v1387 = vpop.permute.xlu0 %1386
      %1388 = vrot.lane.b32.xlu0 %v542, 12
      %v1389 = vpop.permute.xlu0 %1388
      %1390 = vrot.lane.b32.xlu0 %v543, 12
      %v1391 = vpop.permute.xlu0 %1390
      %1392 = vrot.lane.b32.xlu0 %v544, 12
      %v1393 = vpop.permute.xlu0 %1392
      %1394 = vrot.lane.b32.xlu0 %v545, 12
      %v1395 = vpop.permute.xlu0 %1394
      %1396 = vrot.lane.b32.xlu0 %v546, 12
      %v1397 = vpop.permute.xlu0 %1396
      %1398 = vrot.lane.b32.xlu0 %v547, 12
      %v1399 = vpop.permute.xlu0 %1398
      %1400 = vrot.lane.b32.xlu0 %v548, 12
      %v1401 = vpop.permute.xlu0 %1400
      %1402 = vrot.lane.b32.xlu0 %v549, 12
      %v1403 = vpop.permute.xlu0 %1402
      %1404 = vrot.lane.b32.xlu0 %v550, 12
      %v1405 = vpop.permute.xlu0 %1404
      %1406 = vrot.lane.b32.xlu0 %v1344, 12
      %v1407 = vpop.permute.xlu0 %1406
      %1408 = vrot.lane.b32.xlu0 %v1345, 12
      %v1409 = vpop.permute.xlu0 %1408
      %vm1442 = vcmask 126048
      %1443 = vst.msk [vmem:[#allocation4] sm:$0xf] %vm1442, %v1347
      %1444 = vst.msk [vmem:[#allocation4 + $0x4] sm:$0xf] %vm1442, %v1349
      %1445 = vst.msk [vmem:[#allocation4 + $0x8] sm:$0xf] %vm1442, %v1351
      %1446 = vst.msk [vmem:[#allocation4 + $0xc] sm:$0xf] %vm1442, %v1353
      %1447 = vst.msk [vmem:[#allocation4 + $0x10] sm:$0xf] %vm1442, %v1355
      %1448 = vst.msk [vmem:[#allocation4 + $0x14] sm:$0xf] %vm1442, %v1357
      %1449 = vst.msk [vmem:[#allocation4 + $0x18] sm:$0xf] %vm1442, %v1359
      %1450 = vst.msk [vmem:[#allocation4 + $0x1c] sm:$0xf] %vm1442, %v1361
      %1451 = vst.msk [vmem:[#allocation4 + $0x20] sm:$0xf] %vm1442, %v1363
      %1452 = vst.msk [vmem:[#allocation4 + $0x24] sm:$0xf] %vm1442, %v1365
      %1453 = vst.msk [vmem:[#allocation4 + $0x28] sm:$0xf] %vm1442, %v1367
      %1454 = vst.msk [vmem:[#allocation4 + $0x2c] sm:$0xf] %vm1442, %v1369
      %1455 = vst.msk [vmem:[#allocation4 + $0x30] sm:$0xf] %vm1442, %v1371
      %1456 = vst.msk [vmem:[#allocation4 + $0x34] sm:$0xf] %vm1442, %v1373
      %1457 = vst.msk [vmem:[#allocation4 + $0x38] sm:$0xf] %vm1442, %v1375
      %1458 = vst.msk [vmem:[#allocation4 + $0x3c] sm:$0xf] %vm1442, %v1377
      %1459 = vst.msk [vmem:[#allocation4 + $0x40] sm:$0xf] %vm1442, %v1379
      %1460 = vst.msk [vmem:[#allocation4 + $0x44] sm:$0xf] %vm1442, %v1381
      %1461 = vst.msk [vmem:[#allocation4 + $0x48] sm:$0xf] %vm1442, %v1383
      %1462 = vst.msk [vmem:[#allocation4 + $0x4c] sm:$0xf] %vm1442, %v1385
      %1463 = vst.msk [vmem:[#allocation4 + $0x50] sm:$0xf] %vm1442, %v1387
      %1464 = vst.msk [vmem:[#allocation4 + $0x54] sm:$0xf] %vm1442, %v1389
      %1465 = vst.msk [vmem:[#allocation4 + $0x58] sm:$0xf] %vm1442, %v1391
      %1466 = vst.msk [vmem:[#allocation4 + $0x5c] sm:$0xf] %vm1442, %v1393
      %1467 = vst.msk [vmem:[#allocation4 + $0x60] sm:$0xf] %vm1442, %v1395
      %1468 = vst.msk [vmem:[#allocation4 + $0x64] sm:$0xf] %vm1442, %v1397
      %1469 = vst.msk [vmem:[#allocation4 + $0x68] sm:$0xf] %vm1442, %v1399
      %1470 = vst.msk [vmem:[#allocation4 + $0x6c] sm:$0xf] %vm1442, %v1401
      %1471 = vst.msk [vmem:[#allocation4 + $0x70] sm:$0xf] %vm1442, %v1403
      %1472 = vst.msk [vmem:[#allocation4 + $0x74] sm:$0xf] %vm1442, %v1405
      %1473 = vst.msk [vmem:[#allocation4 + $0x78] sm:$0xf] %vm1442, %v1407
      %1474 = vst.msk [vmem:[#allocation4 + $0x7c] sm:$0xf] %vm1442, %v1409
      %v1478 = vrot.slane %v449, 1
      %v1479 = vrot.slane %v450, 1
      %v1480 = vsel %vm664, %v1478, %v1479
      %v1481 = vrot.slane %v451, 1
      %v1482 = vsel %vm664, %v1479, %v1481
      %v1485 = vpack.c.bf16 %v1482, %v1480
      %v1487 = vunpack.c.l.b16 %v1485
      %v1488 = vunpack.c.h.b16 %v1485
      %v1489 = vpack.c.b16 %v1487, %v1487
      %v1490 = vpack.c.b16 %v1488, %v1488
      %1491 = vrot.lane.b32.xlu0 %v843, 16
      %v1492 = vpop.permute.xlu0 %1491
      %1493 = vrot.lane.b32.xlu0 %v844, 16
      %v1494 = vpop.permute.xlu0 %1493
      %1495 = vrot.lane.b32.xlu0 %v845, 16
      %v1496 = vpop.permute.xlu0 %1495
      %1497 = vrot.lane.b32.xlu0 %v846, 16
      %v1498 = vpop.permute.xlu0 %1497
      %1499 = vrot.lane.b32.xlu0 %v847, 16
      %v1500 = vpop.permute.xlu0 %1499
      %1501 = vrot.lane.b32.xlu0 %v848, 16
      %v1502 = vpop.permute.xlu0 %1501
      %1503 = vrot.lane.b32.xlu0 %v849, 16
      %v1504 = vpop.permute.xlu0 %1503
      %1505 = vrot.lane.b32.xlu0 %v850, 16
      %v1506 = vpop.permute.xlu0 %1505
      %1507 = vrot.lane.b32.xlu0 %v851, 16
      %v1508 = vpop.permute.xlu0 %1507
      %1509 = vrot.lane.b32.xlu0 %v852, 16
      %v1510 = vpop.permute.xlu0 %1509
      %1511 = vrot.lane.b32.xlu0 %v853, 16
      %v1512 = vpop.permute.xlu0 %1511
      %1513 = vrot.lane.b32.xlu0 %v854, 16
      %v1514 = vpop.permute.xlu0 %1513
      %1515 = vrot.lane.b32.xlu0 %v855, 16
      %v1516 = vpop.permute.xlu0 %1515
      %1517 = vrot.lane.b32.xlu0 %v856, 16
      %v1518 = vpop.permute.xlu0 %1517
      %1519 = vrot.lane.b32.xlu0 %v857, 16
      %v1520 = vpop.permute.xlu0 %1519
      %1521 = vrot.lane.b32.xlu0 %v858, 16
      %v1522 = vpop.permute.xlu0 %1521
      %1523 = vrot.lane.b32.xlu0 %v859, 16
      %v1524 = vpop.permute.xlu0 %1523
      %1525 = vrot.lane.b32.xlu0 %v860, 16
      %v1526 = vpop.permute.xlu0 %1525
      %1527 = vrot.lane.b32.xlu0 %v861, 16
      %v1528 = vpop.permute.xlu0 %1527
      %1529 = vrot.lane.b32.xlu0 %v862, 16
      %v1530 = vpop.permute.xlu0 %1529
      %1531 = vrot.lane.b32.xlu0 %v863, 16
      %v1532 = vpop.permute.xlu0 %1531
      %1533 = vrot.lane.b32.xlu0 %v864, 16
      %v1534 = vpop.permute.xlu0 %1533
      %1535 = vrot.lane.b32.xlu0 %v865, 16
      %v1536 = vpop.permute.xlu0 %1535
      %1537 = vrot.lane.b32.xlu0 %v866, 16
      %v1538 = vpop.permute.xlu0 %1537
      %1539 = vrot.lane.b32.xlu0 %v867, 16
      %v1540 = vpop.permute.xlu0 %1539
      %1541 = vrot.lane.b32.xlu0 %v868, 16
      %v1542 = vpop.permute.xlu0 %1541
      %1543 = vrot.lane.b32.xlu0 %v869, 16
      %v1544 = vpop.permute.xlu0 %1543
      %1545 = vrot.lane.b32.xlu0 %v870, 16
      %v1546 = vpop.permute.xlu0 %1545
      %1547 = vrot.lane.b32.xlu0 %v871, 16
      %v1548 = vpop.permute.xlu0 %1547
      %1549 = vrot.lane.b32.xlu0 %v872, 16
      %v1550 = vpop.permute.xlu0 %1549
      %1551 = vrot.lane.b32.xlu0 %v1489, 16
      %v1552 = vpop.permute.xlu0 %1551
      %1553 = vrot.lane.b32.xlu0 %v1490, 16
      %v1554 = vpop.permute.xlu0 %1553
      %vm1587 = vcmask 158848
      %1588 = vst.msk [vmem:[#allocation4] sm:$0xf] %vm1587, %v1492
      %1589 = vst.msk [vmem:[#allocation4 + $0x4] sm:$0xf] %vm1587, %v1494
      %1590 = vst.msk [vmem:[#allocation4 + $0x8] sm:$0xf] %vm1587, %v1496
      %1591 = vst.msk [vmem:[#allocation4 + $0xc] sm:$0xf] %vm1587, %v1498
      %1592 = vst.msk [vmem:[#allocation4 + $0x10] sm:$0xf] %vm1587, %v1500
      %1593 = vst.msk [vmem:[#allocation4 + $0x14] sm:$0xf] %vm1587, %v1502
      %1594 = vst.msk [vmem:[#allocation4 + $0x18] sm:$0xf] %vm1587, %v1504
      %1595 = vst.msk [vmem:[#allocation4 + $0x1c] sm:$0xf] %vm1587, %v1506
      %1596 = vst.msk [vmem:[#allocation4 + $0x20] sm:$0xf] %vm1587, %v1508
      %1597 = vst.msk [vmem:[#allocation4 + $0x24] sm:$0xf] %vm1587, %v1510
      %1598 = vst.msk [vmem:[#allocation4 + $0x28] sm:$0xf] %vm1587, %v1512
      %1599 = vst.msk [vmem:[#allocation4 + $0x2c] sm:$0xf] %vm1587, %v1514
      %1600 = vst.msk [vmem:[#allocation4 + $0x30] sm:$0xf] %vm1587, %v1516
      %1601 = vst.msk [vmem:[#allocation4 + $0x34] sm:$0xf] %vm1587, %v1518
      %1602 = vst.msk [vmem:[#allocation4 + $0x38] sm:$0xf] %vm1587, %v1520
      %1603 = vst.msk [vmem:[#allocation4 + $0x3c] sm:$0xf] %vm1587, %v1522
      %1604 = vst.msk [vmem:[#allocation4 + $0x40] sm:$0xf] %vm1587, %v1524
      %1605 = vst.msk [vmem:[#allocation4 + $0x44] sm:$0xf] %vm1587, %v1526
      %1606 = vst.msk [vmem:[#allocation4 + $0x48] sm:$0xf] %vm1587, %v1528
      %1607 = vst.msk [vmem:[#allocation4 + $0x4c] sm:$0xf] %vm1587, %v1530
      %1608 = vst.msk [vmem:[#allocation4 + $0x50] sm:$0xf] %vm1587, %v1532
      %1609 = vst.msk [vmem:[#allocation4 + $0x54] sm:$0xf] %vm1587, %v1534
      %1610 = vst.msk [vmem:[#allocation4 + $0x58] sm:$0xf] %vm1587, %v1536
      %1611 = vst.msk [vmem:[#allocation4 + $0x5c] sm:$0xf] %vm1587, %v1538
      %1612 = vst.msk [vmem:[#allocation4 + $0x60] sm:$0xf] %vm1587, %v1540
      %1613 = vst.msk [vmem:[#allocation4 + $0x64] sm:$0xf] %vm1587, %v1542
      %1614 = vst.msk [vmem:[#allocation4 + $0x68] sm:$0xf] %vm1587, %v1544
      %1615 = vst.msk [vmem:[#allocation4 + $0x6c] sm:$0xf] %vm1587, %v1546
      %1616 = vst.msk [vmem:[#allocation4 + $0x70] sm:$0xf] %vm1587, %v1548
      %1617 = vst.msk [vmem:[#allocation4 + $0x74] sm:$0xf] %vm1587, %v1550
      %1618 = vst.msk [vmem:[#allocation4 + $0x78] sm:$0xf] %vm1587, %v1552
      %1619 = vst.msk [vmem:[#allocation4 + $0x7c] sm:$0xf] %vm1587, %v1554
      %v1620 = vrot.slane %v449, 2
      %v1621 = vrot.slane %v450, 2
      %v1622 = vsel %vm1002, %v1620, %v1621
      %v1623 = vrot.slane %v451, 2
      %v1624 = vsel %vm1002, %v1621, %v1623
      %v1627 = vpack.c.bf16 %v1624, %v1622
      %v1629 = vunpack.c.l.b16 %v1627
      %v1630 = vunpack.c.h.b16 %v1627
      %v1631 = vpack.c.b16 %v1629, %v1629
      %v1632 = vpack.c.b16 %v1630, %v1630
      %1633 = vrot.lane.b32.xlu0 %v1181, 20
      %v1634 = vpop.permute.xlu0 %1633
      %1635 = vrot.lane.b32.xlu0 %v1182, 20
      %v1636 = vpop.permute.xlu0 %1635
      %1637 = vrot.lane.b32.xlu0 %v1183, 20
      %v1638 = vpop.permute.xlu0 %1637
      %1639 = vrot.lane.b32.xlu0 %v1184, 20
      %v1640 = vpop.permute.xlu0 %1639
      %1641 = vrot.lane.b32.xlu0 %v1185, 20
      %v1642 = vpop.permute.xlu0 %1641
      %1643 = vrot.lane.b32.xlu0 %v1186, 20
      %v1644 = vpop.permute.xlu0 %1643
      %1645 = vrot.lane.b32.xlu0 %v1187, 20
      %v1646 = vpop.permute.xlu0 %1645
      %1647 = vrot.lane.b32.xlu0 %v1188, 20
      %v1648 = vpop.permute.xlu0 %1647
      %1649 = vrot.lane.b32.xlu0 %v1189, 20
      %v1650 = vpop.permute.xlu0 %1649
      %1651 = vrot.lane.b32.xlu0 %v1190, 20
      %v1652 = vpop.permute.xlu0 %1651
      %1653 = vrot.lane.b32.xlu0 %v1191, 20
      %v1654 = vpop.permute.xlu0 %1653
      %1655 = vrot.lane.b32.xlu0 %v1192, 20
      %v1656 = vpop.permute.xlu0 %1655
      %1657 = vrot.lane.b32.xlu0 %v1193, 20
      %v1658 = vpop.permute.xlu0 %1657
      %1659 = vrot.lane.b32.xlu0 %v1194, 20
      %v1660 = vpop.permute.xlu0 %1659
      %1661 = vrot.lane.b32.xlu0 %v1195, 20
      %v1662 = vpop.permute.xlu0 %1661
      %1663 = vrot.lane.b32.xlu0 %v1196, 20
      %v1664 = vpop.permute.xlu0 %1663
      %1665 = vrot.lane.b32.xlu0 %v1197, 20
      %v1666 = vpop.permute.xlu0 %1665
      %1667 = vrot.lane.b32.xlu0 %v1198, 20
      %v1668 = vpop.permute.xlu0 %1667
      %1669 = vrot.lane.b32.xlu0 %v1199, 20
      %v1670 = vpop.permute.xlu0 %1669
      %1671 = vrot.lane.b32.xlu0 %v1200, 20
      %v1672 = vpop.permute.xlu0 %1671
      %1673 = vrot.lane.b32.xlu0 %v1201, 20
      %v1674 = vpop.permute.xlu0 %1673
      %1675 = vrot.lane.b32.xlu0 %v1202, 20
      %v1676 = vpop.permute.xlu0 %1675
      %1677 = vrot.lane.b32.xlu0 %v1203, 20
      %v1678 = vpop.permute.xlu0 %1677
      %1679 = vrot.lane.b32.xlu0 %v1204, 20
      %v1680 = vpop.permute.xlu0 %1679
      %1681 = vrot.lane.b32.xlu0 %v1205, 20
      %v1682 = vpop.permute.xlu0 %1681
      %1683 = vrot.lane.b32.xlu0 %v1206, 20
      %v1684 = vpop.permute.xlu0 %1683
      %1685 = vrot.lane.b32.xlu0 %v1207, 20
      %v1686 = vpop.permute.xlu0 %1685
      %1687 = vrot.lane.b32.xlu0 %v1208, 20
      %v1688 = vpop.permute.xlu0 %1687
      %1689 = vrot.lane.b32.xlu0 %v1209, 20
      %v1690 = vpop.permute.xlu0 %1689
      %1691 = vrot.lane.b32.xlu0 %v1210, 20
      %v1692 = vpop.permute.xlu0 %1691
      %1693 = vrot.lane.b32.xlu0 %v1631, 20
      %v1694 = vpop.permute.xlu0 %1693
      %1695 = vrot.lane.b32.xlu0 %v1632, 20
      %v1696 = vpop.permute.xlu0 %1695
      %vm1729 = vcmask 191648
      %1730 = vst.msk [vmem:[#allocation4] sm:$0xf] %vm1729, %v1634
      %1731 = vst.msk [vmem:[#allocation4 + $0x4] sm:$0xf] %vm1729, %v1636
      %1732 = vst.msk [vmem:[#allocation4 + $0x8] sm:$0xf] %vm1729, %v1638
      %1733 = vst.msk [vmem:[#allocation4 + $0xc] sm:$0xf] %vm1729, %v1640
      %1734 = vst.msk [vmem:[#allocation4 + $0x10] sm:$0xf] %vm1729, %v1642
      %1735 = vst.msk [vmem:[#allocation4 + $0x14] sm:$0xf] %vm1729, %v1644
      %1736 = vst.msk [vmem:[#allocation4 + $0x18] sm:$0xf] %vm1729, %v1646
      %1737 = vst.msk [vmem:[#allocation4 + $0x1c] sm:$0xf] %vm1729, %v1648
      %1738 = vst.msk [vmem:[#allocation4 + $0x20] sm:$0xf] %vm1729, %v1650
      %1739 = vst.msk [vmem:[#allocation4 + $0x24] sm:$0xf] %vm1729, %v1652
      %1740 = vst.msk [vmem:[#allocation4 + $0x28] sm:$0xf] %vm1729, %v1654
      %1741 = vst.msk [vmem:[#allocation4 + $0x2c] sm:$0xf] %vm1729, %v1656
      %1742 = vst.msk [vmem:[#allocation4 + $0x30] sm:$0xf] %vm1729, %v1658
      %1743 = vst.msk [vmem:[#allocation4 + $0x34] sm:$0xf] %vm1729, %v1660
      %1744 = vst.msk [vmem:[#allocation4 + $0x38] sm:$0xf] %vm1729, %v1662
      %1745 = vst.msk [vmem:[#allocation4 + $0x3c] sm:$0xf] %vm1729, %v1664
      %1746 = vst.msk [vmem:[#allocation4 + $0x40] sm:$0xf] %vm1729, %v1666
      %1747 = vst.msk [vmem:[#allocation4 + $0x44] sm:$0xf] %vm1729, %v1668
      %1748 = vst.msk [vmem:[#allocation4 + $0x48] sm:$0xf] %vm1729, %v1670
      %1749 = vst.msk [vmem:[#allocation4 + $0x4c] sm:$0xf] %vm1729, %v1672
      %1750 = vst.msk [vmem:[#allocation4 + $0x50] sm:$0xf] %vm1729, %v1674
      %1751 = vst.msk [vmem:[#allocation4 + $0x54] sm:$0xf] %vm1729, %v1676
      %1752 = vst.msk [vmem:[#allocation4 + $0x58] sm:$0xf] %vm1729, %v1678
      %1753 = vst.msk [vmem:[#allocation4 + $0x5c] sm:$0xf] %vm1729, %v1680
      %1754 = vst.msk [vmem:[#allocation4 + $0x60] sm:$0xf] %vm1729, %v1682
      %1755 = vst.msk [vmem:[#allocation4 + $0x64] sm:$0xf] %vm1729, %v1684
      %1756 = vst.msk [vmem:[#allocation4 + $0x68] sm:$0xf] %vm1729, %v1686
      %1757 = vst.msk [vmem:[#allocation4 + $0x6c] sm:$0xf] %vm1729, %v1688
      %1758 = vst.msk [vmem:[#allocation4 + $0x70] sm:$0xf] %vm1729, %v1690
      %1759 = vst.msk [vmem:[#allocation4 + $0x74] sm:$0xf] %vm1729, %v1692
      %1760 = vst.msk [vmem:[#allocation4 + $0x78] sm:$0xf] %vm1729, %v1694
      %1761 = vst.msk [vmem:[#allocation4 + $0x7c] sm:$0xf] %vm1729, %v1696
      %v1762 = vpack.c.bf16 %v453, %v452
      %v1764 = vunpack.c.l.b16 %v1762
      %v1765 = vunpack.c.h.b16 %v1762
      %v1766 = vpack.c.b16 %v1764, %v1764
      %v1767 = vpack.c.b16 %v1765, %v1765
      %1768 = vrot.lane.b32.xlu0 %v523, 24
      %v1769 = vpop.permute.xlu0 %1768
      %1770 = vrot.lane.b32.xlu0 %v524, 24
      %v1771 = vpop.permute.xlu0 %1770
      %1772 = vrot.lane.b32.xlu0 %v525, 24
      %v1773 = vpop.permute.xlu0 %1772
      %1774 = vrot.lane.b32.xlu0 %v526, 24
      %v1775 = vpop.permute.xlu0 %1774
      %1776 = vrot.lane.b32.xlu0 %v527, 24
      %v1777 = vpop.permute.xlu0 %1776
      %1778 = vrot.lane.b32.xlu0 %v528, 24
      %v1779 = vpop.permute.xlu0 %1778
      %1780 = vrot.lane.b32.xlu0 %v529, 24
      %v1781 = vpop.permute.xlu0 %1780
      %1782 = vrot.lane.b32.xlu0 %v530, 24
      %v1783 = vpop.permute.xlu0 %1782
      %1784 = vrot.lane.b32.xlu0 %v531, 24
      %v1785 = vpop.permute.xlu0 %1784
      %1786 = vrot.lane.b32.xlu0 %v532, 24
      %v1787 = vpop.permute.xlu0 %1786
      %1788 = vrot.lane.b32.xlu0 %v533, 24
      %v1789 = vpop.permute.xlu0 %1788
      %1790 = vrot.lane.b32.xlu0 %v534, 24
      %v1791 = vpop.permute.xlu0 %1790
      %1792 = vrot.lane.b32.xlu0 %v535, 24
      %v1793 = vpop.permute.xlu0 %1792
      %1794 = vrot.lane.b32.xlu0 %v536, 24
      %v1795 = vpop.permute.xlu0 %1794
      %1796 = vrot.lane.b32.xlu0 %v537, 24
      %v1797 = vpop.permute.xlu0 %1796
      %1798 = vrot.lane.b32.xlu0 %v538, 24
      %v1799 = vpop.permute.xlu0 %1798
      %1800 = vrot.lane.b32.xlu0 %v539, 24
      %v1801 = vpop.permute.xlu0 %1800
      %1802 = vrot.lane.b32.xlu0 %v540, 24
      %v1803 = vpop.permute.xlu0 %1802
      %1804 = vrot.lane.b32.xlu0 %v541, 24
      %v1805 = vpop.permute.xlu0 %1804
      %1806 = vrot.lane.b32.xlu0 %v542, 24
      %v1807 = vpop.permute.xlu0 %1806
      %1808 = vrot.lane.b32.xlu0 %v543, 24
      %v1809 = vpop.permute.xlu0 %1808
      %1810 = vrot.lane.b32.xlu0 %v544, 24
      %v1811 = vpop.permute.xlu0 %1810
      %1812 = vrot.lane.b32.xlu0 %v545, 24
      %v1813 = vpop.permute.xlu0 %1812
      %1814 = vrot.lane.b32.xlu0 %v546, 24
      %v1815 = vpop.permute.xlu0 %1814
      %1816 = vrot.lane.b32.xlu0 %v547, 24
      %v1817 = vpop.permute.xlu0 %1816
      %1818 = vrot.lane.b32.xlu0 %v548, 24
      %v1819 = vpop.permute.xlu0 %1818
      %1820 = vrot.lane.b32.xlu0 %v549, 24
      %v1821 = vpop.permute.xlu0 %1820
      %1822 = vrot.lane.b32.xlu0 %v550, 24
      %v1823 = vpop.permute.xlu0 %1822
      %1824 = vrot.lane.b32.xlu0 %v1344, 24
      %v1825 = vpop.permute.xlu0 %1824
      %1826 = vrot.lane.b32.xlu0 %v1345, 24
      %v1827 = vpop.permute.xlu0 %1826
      %1828 = vrot.lane.b32.xlu0 %v1766, 24
      %v1829 = vpop.permute.xlu0 %1828
      %1830 = vrot.lane.b32.xlu0 %v1767, 24
      %v1831 = vpop.permute.xlu0 %1830
      %vm1864 = vcmask 224448
      %1865 = vst.msk [vmem:[#allocation4] sm:$0xf] %vm1864, %v1769
      %1866 = vst.msk [vmem:[#allocation4 + $0x4] sm:$0xf] %vm1864, %v1771
      %1867 = vst.msk [vmem:[#allocation4 + $0x8] sm:$0xf] %vm1864, %v1773
      %1868 = vst.msk [vmem:[#allocation4 + $0xc] sm:$0xf] %vm1864, %v1775
      %1869 = vst.msk [vmem:[#allocation4 + $0x10] sm:$0xf] %vm1864, %v1777
      %1870 = vst.msk [vmem:[#allocation4 + $0x14] sm:$0xf] %vm1864, %v1779
      %1871 = vst.msk [vmem:[#allocation4 + $0x18] sm:$0xf] %vm1864, %v1781
      %1872 = vst.msk [vmem:[#allocation4 + $0x1c] sm:$0xf] %vm1864, %v1783
      %1873 = vst.msk [vmem:[#allocation4 + $0x20] sm:$0xf] %vm1864, %v1785
      %1874 = vst.msk [vmem:[#allocation4 + $0x24] sm:$0xf] %vm1864, %v1787
      %1875 = vst.msk [vmem:[#allocation4 + $0x28] sm:$0xf] %vm1864, %v1789
      %1876 = vst.msk [vmem:[#allocation4 + $0x2c] sm:$0xf] %vm1864, %v1791
      %1877 = vst.msk [vmem:[#allocation4 + $0x30] sm:$0xf] %vm1864, %v1793
      %1878 = vst.msk [vmem:[#allocation4 + $0x34] sm:$0xf] %vm1864, %v1795
      %1879 = vst.msk [vmem:[#allocation4 + $0x38] sm:$0xf] %vm1864, %v1797
      %1880 = vst.msk [vmem:[#allocation4 + $0x3c] sm:$0xf] %vm1864, %v1799
      %1881 = vst.msk [vmem:[#allocation4 + $0x40] sm:$0xf] %vm1864, %v1801
      %1882 = vst.msk [vmem:[#allocation4 + $0x44] sm:$0xf] %vm1864, %v1803
      %1883 = vst.msk [vmem:[#allocation4 + $0x48] sm:$0xf] %vm1864, %v1805
      %1884 = vst.msk [vmem:[#allocation4 + $0x4c] sm:$0xf] %vm1864, %v1807
      %1885 = vst.msk [vmem:[#allocation4 + $0x50] sm:$0xf] %vm1864, %v1809
      %1886 = vst.msk [vmem:[#allocation4 + $0x54] sm:$0xf] %vm1864, %v1811
      %1887 = vst.msk [vmem:[#allocation4 + $0x58] sm:$0xf] %vm1864, %v1813
      %1888 = vst.msk [vmem:[#allocation4 + $0x5c] sm:$0xf] %vm1864, %v1815
      %1889 = vst.msk [vmem:[#allocation4 + $0x60] sm:$0xf] %vm1864, %v1817
      %1890 = vst.msk [vmem:[#allocation4 + $0x64] sm:$0xf] %vm1864, %v1819
      %1891 = vst.msk [vmem:[#allocation4 + $0x68] sm:$0xf] %vm1864, %v1821
      %1892 = vst.msk [vmem:[#allocation4 + $0x6c] sm:$0xf] %vm1864, %v1823
      %1893 = vst.msk [vmem:[#allocation4 + $0x70] sm:$0xf] %vm1864, %v1825
      %1894 = vst.msk [vmem:[#allocation4 + $0x74] sm:$0xf] %vm1864, %v1827
      %1895 = vst.msk [vmem:[#allocation4 + $0x78] sm:$0xf] %vm1864, %v1829
      %1896 = vst.msk [vmem:[#allocation4 + $0x7c] sm:$0xf] %vm1864, %v1831
      %v1900 = vrot.slane %v452, 1
      %v1901 = vrot.slane %v453, 1
      %v1902 = vsel %vm664, %v1900, %v1901
      %v1903 = vrot.slane %v454, 1
      %v1904 = vsel %vm664, %v1901, %v1903
      %v1907 = vpack.c.bf16 %v1904, %v1902
      %v1909 = vunpack.c.l.b16 %v1907
      %v1910 = vunpack.c.h.b16 %v1907
      %v1911 = vpack.c.b16 %v1909, %v1909
      %v1912 = vpack.c.b16 %v1910, %v1910
      %1913 = vrot.lane.b32.xlu0 %v845, 28
      %v1914 = vpop.permute.xlu0 %1913
      %1915 = vrot.lane.b32.xlu0 %v846, 28
      %v1916 = vpop.permute.xlu0 %1915
      %1917 = vrot.lane.b32.xlu0 %v847, 28
      %v1918 = vpop.permute.xlu0 %1917
      %1919 = vrot.lane.b32.xlu0 %v848, 28
      %v1920 = vpop.permute.xlu0 %1919
      %1921 = vrot.lane.b32.xlu0 %v849, 28
      %v1922 = vpop.permute.xlu0 %1921
      %1923 = vrot.lane.b32.xlu0 %v850, 28
      %v1924 = vpop.permute.xlu0 %1923
      %1925 = vrot.lane.b32.xlu0 %v851, 28
      %v1926 = vpop.permute.xlu0 %1925
      %1927 = vrot.lane.b32.xlu0 %v852, 28
      %v1928 = vpop.permute.xlu0 %1927
      %1929 = vrot.lane.b32.xlu0 %v853, 28
      %v1930 = vpop.permute.xlu0 %1929
      %1931 = vrot.lane.b32.xlu0 %v854, 28
      %v1932 = vpop.permute.xlu0 %1931
      %1933 = vrot.lane.b32.xlu0 %v855, 28
      %v1934 = vpop.permute.xlu0 %1933
      %1935 = vrot.lane.b32.xlu0 %v856, 28
      %v1936 = vpop.permute.xlu0 %1935
      %1937 = vrot.lane.b32.xlu0 %v857, 28
      %v1938 = vpop.permute.xlu0 %1937
      %1939 = vrot.lane.b32.xlu0 %v858, 28
      %v1940 = vpop.permute.xlu0 %1939
      %1941 = vrot.lane.b32.xlu0 %v859, 28
      %v1942 = vpop.permute.xlu0 %1941
      %1943 = vrot.lane.b32.xlu0 %v860, 28
      %v1944 = vpop.permute.xlu0 %1943
      %1945 = vrot.lane.b32.xlu0 %v861, 28
      %v1946 = vpop.permute.xlu0 %1945
      %1947 = vrot.lane.b32.xlu0 %v862, 28
      %v1948 = vpop.permute.xlu0 %1947
      %1949 = vrot.lane.b32.xlu0 %v863, 28
      %v1950 = vpop.permute.xlu0 %1949
      %1951 = vrot.lane.b32.xlu0 %v864, 28
      %v1952 = vpop.permute.xlu0 %1951
      %1953 = vrot.lane.b32.xlu0 %v865, 28
      %v1954 = vpop.permute.xlu0 %1953
      %1955 = vrot.lane.b32.xlu0 %v866, 28
      %v1956 = vpop.permute.xlu0 %1955
      %1957 = vrot.lane.b32.xlu0 %v867, 28
      %v1958 = vpop.permute.xlu0 %1957
      %1959 = vrot.lane.b32.xlu0 %v868, 28
      %v1960 = vpop.permute.xlu0 %1959
      %1961 = vrot.lane.b32.xlu0 %v869, 28
      %v1962 = vpop.permute.xlu0 %1961
      %1963 = vrot.lane.b32.xlu0 %v870, 28
      %v1964 = vpop.permute.xlu0 %1963
      %1965 = vrot.lane.b32.xlu0 %v871, 28
      %v1966 = vpop.permute.xlu0 %1965
      %1967 = vrot.lane.b32.xlu0 %v872, 28
      %v1968 = vpop.permute.xlu0 %1967
      %1969 = vrot.lane.b32.xlu0 %v1489, 28
      %v1970 = vpop.permute.xlu0 %1969
      %1971 = vrot.lane.b32.xlu0 %v1490, 28
      %v1972 = vpop.permute.xlu0 %1971
      %1973 = vrot.lane.b32.xlu0 %v1911, 28
      %v1974 = vpop.permute.xlu0 %1973
      %1975 = vrot.lane.b32.xlu0 %v1912, 28
      %v1976 = vpop.permute.xlu0 %1975
      %vm2009 = vcmask 257248
      %2010 = vst.msk [vmem:[#allocation4] sm:$0xf] %vm2009, %v1914
      %2011 = vst.msk [vmem:[#allocation4 + $0x4] sm:$0xf] %vm2009, %v1916
      %2012 = vst.msk [vmem:[#allocation4 + $0x8] sm:$0xf] %vm2009, %v1918
      %2013 = vst.msk [vmem:[#allocation4 + $0xc] sm:$0xf] %vm2009, %v1920
      %2014 = vst.msk [vmem:[#allocation4 + $0x10] sm:$0xf] %vm2009, %v1922
      %2015 = vst.msk [vmem:[#allocation4 + $0x14] sm:$0xf] %vm2009, %v1924
      %2016 = vst.msk [vmem:[#allocation4 + $0x18] sm:$0xf] %vm2009, %v1926
      %2017 = vst.msk [vmem:[#allocation4 + $0x1c] sm:$0xf] %vm2009, %v1928
      %2018 = vst.msk [vmem:[#allocation4 + $0x20] sm:$0xf] %vm2009, %v1930
      %2019 = vst.msk [vmem:[#allocation4 + $0x24] sm:$0xf] %vm2009, %v1932
      %2020 = vst.msk [vmem:[#allocation4 + $0x28] sm:$0xf] %vm2009, %v1934
      %2021 = vst.msk [vmem:[#allocation4 + $0x2c] sm:$0xf] %vm2009, %v1936
      %2022 = vst.msk [vmem:[#allocation4 + $0x30] sm:$0xf] %vm2009, %v1938
      %2023 = vst.msk [vmem:[#allocation4 + $0x34] sm:$0xf] %vm2009, %v1940
      %2024 = vst.msk [vmem:[#allocation4 + $0x38] sm:$0xf] %vm2009, %v1942
      %2025 = vst.msk [vmem:[#allocation4 + $0x3c] sm:$0xf] %vm2009, %v1944
      %2026 = vst.msk [vmem:[#allocation4 + $0x40] sm:$0xf] %vm2009, %v1946
      %2027 = vst.msk [vmem:[#allocation4 + $0x44] sm:$0xf] %vm2009, %v1948
      %2028 = vst.msk [vmem:[#allocation4 + $0x48] sm:$0xf] %vm2009, %v1950
      %2029 = vst.msk [vmem:[#allocation4 + $0x4c] sm:$0xf] %vm2009, %v1952
      %2030 = vst.msk [vmem:[#allocation4 + $0x50] sm:$0xf] %vm2009, %v1954
      %2031 = vst.msk [vmem:[#allocation4 + $0x54] sm:$0xf] %vm2009, %v1956
      %2032 = vst.msk [vmem:[#allocation4 + $0x58] sm:$0xf] %vm2009, %v1958
      %2033 = vst.msk [vmem:[#allocation4 + $0x5c] sm:$0xf] %vm2009, %v1960
      %2034 = vst.msk [vmem:[#allocation4 + $0x60] sm:$0xf] %vm2009, %v1962
      %2035 = vst.msk [vmem:[#allocation4 + $0x64] sm:$0xf] %vm2009, %v1964
      %2036 = vst.msk [vmem:[#allocation4 + $0x68] sm:$0xf] %vm2009, %v1966
      %2037 = vst.msk [vmem:[#allocation4 + $0x6c] sm:$0xf] %vm2009, %v1968
      %2038 = vst.msk [vmem:[#allocation4 + $0x70] sm:$0xf] %vm2009, %v1970
      %2039 = vst.msk [vmem:[#allocation4 + $0x74] sm:$0xf] %vm2009, %v1972
      %2040 = vst.msk [vmem:[#allocation4 + $0x78] sm:$0xf] %vm2009, %v1974
      %2041 = vst.msk [vmem:[#allocation4 + $0x7c] sm:$0xf] %vm2009, %v1976
      %v2042 = vrot.slane %v452, 2
      %v2043 = vrot.slane %v453, 2
      %v2044 = vsel %vm1002, %v2042, %v2043
      %v2045 = vrot.slane %v454, 2
      %v2046 = vsel %vm1002, %v2043, %v2045
      %v2049 = vpack.c.bf16 %v2046, %v2044
      %v2051 = vunpack.c.l.b16 %v2049
      %v2052 = vunpack.c.h.b16 %v2049
      %v2053 = vpack.c.b16 %v2051, %v2051
      %v2054 = vpack.c.b16 %v2052, %v2052
      %2055 = vrot.lane.b32.xlu0 %v1183, 32
      %v2056 = vpop.permute.xlu0 %2055
      %2057 = vrot.lane.b32.xlu0 %v1184, 32
      %v2058 = vpop.permute.xlu0 %2057
      %2059 = vrot.lane.b32.xlu0 %v1185, 32
      %v2060 = vpop.permute.xlu0 %2059
      %2061 = vrot.lane.b32.xlu0 %v1186, 32
      %v2062 = vpop.permute.xlu0 %2061
      %2063 = vrot.lane.b32.xlu0 %v1187, 32
      %v2064 = vpop.permute.xlu0 %2063
      %2065 = vrot.lane.b32.xlu0 %v1188, 32
      %v2066 = vpop.permute.xlu0 %2065
      %2067 = vrot.lane.b32.xlu0 %v1189, 32
      %v2068 = vpop.permute.xlu0 %2067
      %2069 = vrot.lane.b32.xlu0 %v1190, 32
      %v2070 = vpop.permute.xlu0 %2069
      %2071 = vrot.lane.b32.xlu0 %v1191, 32
      %v2072 = vpop.permute.xlu0 %2071
      %2073 = vrot.lane.b32.xlu0 %v1192, 32
      %v2074 = vpop.permute.xlu0 %2073
      %2075 = vrot.lane.b32.xlu0 %v1193, 32
      %v2076 = vpop.permute.xlu0 %2075
      %2077 = vrot.lane.b32.xlu0 %v1194, 32
      %v2078 = vpop.permute.xlu0 %2077
      %2079 = vrot.lane.b32.xlu0 %v1195, 32
      %v2080 = vpop.permute.xlu0 %2079
      %2081 = vrot.lane.b32.xlu0 %v1196, 32
      %v2082 = vpop.permute.xlu0 %2081
      %2083 = vrot.lane.b32.xlu0 %v1197, 32
      %v2084 = vpop.permute.xlu0 %2083
      %2085 = vrot.lane.b32.xlu0 %v1198, 32
      %v2086 = vpop.permute.xlu0 %2085
      %2087 = vrot.lane.b32.xlu0 %v1199, 32
      %v2088 = vpop.permute.xlu0 %2087
      %2089 = vrot.lane.b32.xlu0 %v1200, 32
      %v2090 = vpop.permute.xlu0 %2089
      %2091 = vrot.lane.b32.xlu0 %v1201, 32
      %v2092 = vpop.permute.xlu0 %2091
      %2093 = vrot.lane.b32.xlu0 %v1202, 32
      %v2094 = vpop.permute.xlu0 %2093
      %2095 = vrot.lane.b32.xlu0 %v1203, 32
      %v2096 = vpop.permute.xlu0 %2095
      %2097 = vrot.lane.b32.xlu0 %v1204, 32
      %v2098 = vpop.permute.xlu0 %2097
      %2099 = vrot.lane.b32.xlu0 %v1205, 32
      %v2100 = vpop.permute.xlu0 %2099
      %2101 = vrot.lane.b32.xlu0 %v1206, 32
      %v2102 = vpop.permute.xlu0 %2101
      %2103 = vrot.lane.b32.xlu0 %v1207, 32
      %v2104 = vpop.permute.xlu0 %2103
      %2105 = vrot.lane.b32.xlu0 %v1208, 32
      %v2106 = vpop.permute.xlu0 %2105
      %2107 = vrot.lane.b32.xlu0 %v1209, 32
      %v2108 = vpop.permute.xlu0 %2107
      %2109 = vrot.lane.b32.xlu0 %v1210, 32
      %v2110 = vpop.permute.xlu0 %2109
      %2111 = vrot.lane.b32.xlu0 %v1631, 32
      %v2112 = vpop.permute.xlu0 %2111
      %2113 = vrot.lane.b32.xlu0 %v1632, 32
      %v2114 = vpop.permute.xlu0 %2113
      %2115 = vrot.lane.b32.xlu0 %v2053, 32
      %v2116 = vpop.permute.xlu0 %2115
      %2117 = vrot.lane.b32.xlu0 %v2054, 32
      %v2118 = vpop.permute.xlu0 %2117
      %vm2151 = vcmask 290048
      %2152 = vst.msk [vmem:[#allocation4] sm:$0xf] %vm2151, %v2056
      %2153 = vst.msk [vmem:[#allocation4 + $0x4] sm:$0xf] %vm2151, %v2058
      %2154 = vst.msk [vmem:[#allocation4 + $0x8] sm:$0xf] %vm2151, %v2060
      %2155 = vst.msk [vmem:[#allocation4 + $0xc] sm:$0xf] %vm2151, %v2062
      %2156 = vst.msk [vmem:[#allocation4 + $0x10] sm:$0xf] %vm2151, %v2064
      %2157 = vst.msk [vmem:[#allocation4 + $0x14] sm:$0xf] %vm2151, %v2066
      %2158 = vst.msk [vmem:[#allocation4 + $0x18] sm:$0xf] %vm2151, %v2068
      %2159 = vst.msk [vmem:[#allocation4 + $0x1c] sm:$0xf] %vm2151, %v2070
      %2160 = vst.msk [vmem:[#allocation4 + $0x20] sm:$0xf] %vm2151, %v2072
      %2161 = vst.msk [vmem:[#allocation4 + $0x24] sm:$0xf] %vm2151, %v2074
      %2162 = vst.msk [vmem:[#allocation4 + $0x28] sm:$0xf] %vm2151, %v2076
      %2163 = vst.msk [vmem:[#allocation4 + $0x2c] sm:$0xf] %vm2151, %v2078
      %2164 = vst.msk [vmem:[#allocation4 + $0x30] sm:$0xf] %vm2151, %v2080
      %2165 = vst.msk [vmem:[#allocation4 + $0x34] sm:$0xf] %vm2151, %v2082
      %2166 = vst.msk [vmem:[#allocation4 + $0x38] sm:$0xf] %vm2151, %v2084
      %2167 = vst.msk [vmem:[#allocation4 + $0x3c] sm:$0xf] %vm2151, %v2086
      %2168 = vst.msk [vmem:[#allocation4 + $0x40] sm:$0xf] %vm2151, %v2088
      %2169 = vst.msk [vmem:[#allocation4 + $0x44] sm:$0xf] %vm2151, %v2090
      %2170 = vst.msk [vmem:[#allocation4 + $0x48] sm:$0xf] %vm2151, %v2092
      %2171 = vst.msk [vmem:[#allocation4 + $0x4c] sm:$0xf] %vm2151, %v2094
      %2172 = vst.msk [vmem:[#allocation4 + $0x50] sm:$0xf] %vm2151, %v2096
      %2173 = vst.msk [vmem:[#allocation4 + $0x54] sm:$0xf] %vm2151, %v2098
      %2174 = vst.msk [vmem:[#allocation4 + $0x58] sm:$0xf] %vm2151, %v2100
      %2175 = vst.msk [vmem:[#allocation4 + $0x5c] sm:$0xf] %vm2151, %v2102
      %2176 = vst.msk [vmem:[#allocation4 + $0x60] sm:$0xf] %vm2151, %v2104
      %2177 = vst.msk [vmem:[#allocation4 + $0x64] sm:$0xf] %vm2151, %v2106
      %2178 = vst.msk [vmem:[#allocation4 + $0x68] sm:$0xf] %vm2151, %v2108
      %2179 = vst.msk [vmem:[#allocation4 + $0x6c] sm:$0xf] %vm2151, %v2110
      %2180 = vst.msk [vmem:[#allocation4 + $0x70] sm:$0xf] %vm2151, %v2112
      %2181 = vst.msk [vmem:[#allocation4 + $0x74] sm:$0xf] %vm2151, %v2114
      %2182 = vst.msk [vmem:[#allocation4 + $0x78] sm:$0xf] %vm2151, %v2116
      %2183 = vst.msk [vmem:[#allocation4 + $0x7c] sm:$0xf] %vm2151, %v2118
      %v2184 = vld [vmem:[#allocation4] sm:$0xf]
      %v2185 = vld [vmem:[#allocation4 + $0x4] sm:$0xf]
      %v2186 = vld [vmem:[#allocation4 + $0x8] sm:$0xf]
      %v2187 = vld [vmem:[#allocation4 + $0xc] sm:$0xf]
      %v2188 = vld [vmem:[#allocation4 + $0x10] sm:$0xf]
      %v2189 = vld [vmem:[#allocation4 + $0x14] sm:$0xf]
      %v2190 = vld [vmem:[#allocation4 + $0x18] sm:$0xf]
      %v2191 = vld [vmem:[#allocation4 + $0x1c] sm:$0xf]
      %v2192 = vld [vmem:[#allocation4 + $0x20] sm:$0xf]
      %v2193 = vld [vmem:[#allocation4 + $0x24] sm:$0xf]
      %v2194 = vld [vmem:[#allocation4 + $0x28] sm:$0xf]
      %v2195 = vld [vmem:[#allocation4 + $0x2c] sm:$0xf]
      %v2196 = vld [vmem:[#allocation4 + $0x30] sm:$0xf]
      %v2197 = vld [vmem:[#allocation4 + $0x34] sm:$0xf]
      %v2198 = vld [vmem:[#allocation4 + $0x38] sm:$0xf]
      %v2199 = vld [vmem:[#allocation4 + $0x3c] sm:$0xf]
      %v2200 = vld [vmem:[#allocation4 + $0x40] sm:$0xf]
      %v2201 = vld [vmem:[#allocation4 + $0x44] sm:$0xf]
      %v2202 = vld [vmem:[#allocation4 + $0x48] sm:$0xf]
      %v2203 = vld [vmem:[#allocation4 + $0x4c] sm:$0xf]
      %v2204 = vld [vmem:[#allocation4 + $0x50] sm:$0xf]
      %v2205 = vld [vmem:[#allocation4 + $0x54] sm:$0xf]
      %v2206 = vld [vmem:[#allocation4 + $0x58] sm:$0xf]
      %v2207 = vld [vmem:[#allocation4 + $0x5c] sm:$0xf]
      %v2208 = vld [vmem:[#allocation4 + $0x60] sm:$0xf]
      %v2209 = vld [vmem:[#allocation4 + $0x64] sm:$0xf]
      %v2210 = vld [vmem:[#allocation4 + $0x68] sm:$0xf]
      %v2211 = vld [vmem:[#allocation4 + $0x6c] sm:$0xf]
      %v2212 = vld [vmem:[#allocation4 + $0x70] sm:$0xf]
      %v2213 = vld [vmem:[#allocation4 + $0x74] sm:$0xf]
      %v2214 = vld [vmem:[#allocation4 + $0x78] sm:$0xf]
      %v2215 = vld [vmem:[#allocation4 + $0x7c] sm:$0xf]
      %v2216 = vld [vmem:[%s1] sm:$0xf]
      %v2217 = vld [vmem:[%s1 + $0x4] sm:$0xf]
      %v2218 = vld [vmem:[%s1 + $0x8] sm:$0xf]
      %v2219 = vld [vmem:[%s1 + $0xc] sm:$0xf]
      %v2220 = vld [vmem:[%s1 + $0x10] sm:$0x3]
      %v2253 = vunpack.c.l.b16 %v2184
      %v2254 = vunpack.c.l.b16 %v2185
      %v2255 = vunpack.c.l.b16 %v2186
      %v2256 = vunpack.c.l.b16 %v2187
      %v2257 = vunpack.c.l.b16 %v2188
      %v2258 = vunpack.c.l.b16 %v2189
      %v2259 = vunpack.c.l.b16 %v2190
      %v2260 = vunpack.c.l.b16 %v2191
      %v2261 = vunpack.c.l.b16 %v2192
      %v2262 = vunpack.c.l.b16 %v2193
      %v2263 = vunpack.c.l.b16 %v2194
      %v2264 = vunpack.c.l.b16 %v2195
      %v2265 = vunpack.c.l.b16 %v2196
      %v2266 = vunpack.c.l.b16 %v2197
      %v2267 = vunpack.c.l.b16 %v2198
      %v2268 = vunpack.c.l.b16 %v2199
      %v2269 = vunpack.c.l.b16 %v2200
      %v2270 = vunpack.c.l.b16 %v2201
      %v2271 = vunpack.c.l.b16 %v2202
      %v2272 = vunpack.c.l.b16 %v2203
      %v2273 = vunpack.c.l.b16 %v2204
      %v2274 = vunpack.c.l.b16 %v2205
      %v2275 = vunpack.c.l.b16 %v2206
      %v2276 = vunpack.c.l.b16 %v2207
      %v2277 = vunpack.c.l.b16 %v2208
      %v2278 = vunpack.c.l.b16 %v2209
      %v2279 = vunpack.c.l.b16 %v2210
      %v2280 = vunpack.c.l.b16 %v2211
      %v2281 = vunpack.c.l.b16 %v2212
      %v2282 = vunpack.c.l.b16 %v2213
      %v2283 = vunpack.c.l.b16 %v2214
      %v2284 = vunpack.c.l.b16 %v2215
      %v2285 = vpack.c.b16 %v2254, %v2253
      %v2286 = vpack.c.b16 %v2256, %v2255
      %v2287 = vpack.c.b16 %v2258, %v2257
      %v2288 = vpack.c.b16 %v2260, %v2259
      %v2289 = vpack.c.b16 %v2262, %v2261
      %v2290 = vpack.c.b16 %v2264, %v2263
      %v2291 = vpack.c.b16 %v2266, %v2265
      %v2292 = vpack.c.b16 %v2268, %v2267
      %v2293 = vpack.c.b16 %v2270, %v2269
      %v2294 = vpack.c.b16 %v2272, %v2271
      %v2295 = vpack.c.b16 %v2274, %v2273
      %v2296 = vpack.c.b16 %v2276, %v2275
      %v2297 = vpack.c.b16 %v2278, %v2277
      %v2298 = vpack.c.b16 %v2280, %v2279
      %v2299 = vpack.c.b16 %v2282, %v2281
      %v2300 = vpack.c.b16 %v2284, %v2283
      %v2306 = vunpack.c.l.b16 %v2216
      %v2307 = vunpack.c.l.b16 %v2217
      %v2308 = vunpack.c.l.b16 %v2218
      %v2309 = vunpack.c.l.b16 %v2219
      %v2310 = vunpack.c.l.b16 %v2220
      %v2311 = vpack.c.b16 %v2307, %v2306
      %v2312 = vpack.c.b16 %v2309, %v2308
      %v2313 = vpack.c.b16 %v2310, %v2310
      %vm2316 = vcmask 293888
      %v2318 = vsel %vm2316, %v2285, 0
      %v2321 = vsel %vm2316, %v2286, 0
      %v2324 = vsel %vm2316, %v2287, 0
      %v2327 = vsel %vm2316, %v2288, 0
      %v2330 = vsel %vm2316, %v2289, 0
      %v2333 = vsel %vm2316, %v2290, 0
      %v2336 = vsel %vm2316, %v2291, 0
      %v2339 = vsel %vm2316, %v2292, 0
      %v2342 = vsel %vm2316, %v2293, 0
      %v2345 = vsel %vm2316, %v2294, 0
      %v2348 = vsel %vm2316, %v2295, 0
      %v2351 = vsel %vm2316, %v2296, 0
      %v2354 = vsel %vm2316, %v2297, 0
      %v2357 = vsel %vm2316, %v2298, 0
      %v2360 = vsel %vm2316, %v2299, 0
      %v2363 = vsel %vm2316, %v2300, 0
      %vm2365 = vcmask 1041408
      %v2367 = vsel %vm2365, %v2313, 0
      %2369 = vmatprep.subr.bf16.mxu0 0
      %2370 = vmatpush1.bf16.msra.mxu0 0
      %2371 = vmatprep.subr.bf16.mxu0 0
      %2372 = vmatpush1.bf16.msra.mxu0 0
      %2373 = vmatprep.subr.bf16.mxu0 0
      %2374 = vmatpush1.bf16.msra.mxu0 0
      %2375 = vmatprep.subr.bf16.mxu0 0
      %2376 = vmatpush1.bf16.msra.mxu0 0
      %2377 = vmatprep.subr.bf16.mxu0 0
      %2378 = vmatpush1.bf16.msra.mxu0 0
      %2379 = vmatprep.subr.bf16.mxu0 0
      %2380 = vmatpush1.bf16.msra.mxu0 %v2367
      %2381 = vmatprep.subr.bf16.mxu0 0
      %2382 = vmatpush1.bf16.msra.mxu0 %v2312
      %2383 = vmatprep.subr.bf16.mxu0 0
      %2384 = vmatpush1.bf16.msra.mxu0 %v2311
      %2385 = vmatprep.subr.bf16.mxu0 0
      %2386 = vmatpush2.bf16.msra.mxu0 0
      %2387 = vmatprep.subr.bf16.mxu0 0
      %2388 = vmatpush2.bf16.msra.mxu0 0
      %2389 = vmatprep.subr.bf16.mxu0 0
      %2390 = vmatpush2.bf16.msra.mxu0 0
      %2391 = vmatprep.subr.bf16.mxu0 0
      %2392 = vmatpush2.bf16.msra.mxu0 0
      %2393 = vmatprep.subr.bf16.mxu0 0
      %2394 = vmatpush2.bf16.msra.mxu0 0
      %2395 = vmatprep.subr.bf16.mxu0 0
      %2396 = vmatpush2.bf16.msra.mxu0 0
      %2397 = vmatprep.subr.bf16.mxu0 0
      %2398 = vmatpush2.bf16.msra.mxu0 0
      %2399 = vmatprep.subr.bf16.mxu0 0
      %2400 = vmatpush2.bf16.msra.mxu0 0
      %2401 = vmatprep.mubr.bf16.mxu0 0
      %2402 = vmatmul.mubr.bf16.gmra.mxu0 %v2318
      %v2403 = vpop.f32.mrf.mxu0
      %v2404 = vadd.f32 0.0, %v2403
      %v2405 = vpop.f32.mrf.mxu0
      %v2406 = vpop.f32.mrf.mxu0
      %v2407 = vadd.f32 0.0, %v2406
      %v2408 = vpop.f32.mrf.mxu0
      %2409 = vmatprep.mubr.bf16.mxu0 0
      %2410 = vmatmul.mubr.bf16.gmra.mxu0 %v2321
      %v2411 = vpop.f32.mrf.mxu0
      %v2412 = vadd.f32 0.0, %v2411
      %v2413 = vpop.f32.mrf.mxu0
      %v2414 = vpop.f32.mrf.mxu0
      %v2415 = vadd.f32 0.0, %v2414
      %v2416 = vpop.f32.mrf.mxu0
      %2417 = vmatprep.mubr.bf16.mxu0 0
      %2418 = vmatmul.mubr.bf16.gmra.mxu0 %v2324
      %v2419 = vpop.f32.mrf.mxu0
      %v2420 = vadd.f32 0.0, %v2419
      %v2421 = vpop.f32.mrf.mxu0
      %v2422 = vpop.f32.mrf.mxu0
      %v2423 = vadd.f32 0.0, %v2422
      %v2424 = vpop.f32.mrf.mxu0
      %2425 = vmatprep.mubr.bf16.mxu0 0
      %2426 = vmatmul.mubr.bf16.gmra.mxu0 %v2327
      %v2427 = vpop.f32.mrf.mxu0
      %v2428 = vadd.f32 0.0, %v2427
      %v2429 = vpop.f32.mrf.mxu0
      %v2430 = vpop.f32.mrf.mxu0
      %v2431 = vadd.f32 0.0, %v2430
      %v2432 = vpop.f32.mrf.mxu0
      %2433 = vmatprep.mubr.bf16.mxu0 0
      %2434 = vmatmul.mubr.bf16.gmra.mxu0 %v2330
      %v2435 = vpop.f32.mrf.mxu0
      %v2436 = vadd.f32 0.0, %v2435
      %v2437 = vpop.f32.mrf.mxu0
      %v2438 = vpop.f32.mrf.mxu0
      %v2439 = vadd.f32 0.0, %v2438
      %v2440 = vpop.f32.mrf.mxu0
      %2441 = vmatprep.mubr.bf16.mxu0 0
      %2442 = vmatmul.mubr.bf16.gmra.mxu0 %v2333
      %v2443 = vpop.f32.mrf.mxu0
      %v2444 = vadd.f32 0.0, %v2443
      %v2445 = vpop.f32.mrf.mxu0
      %v2446 = vpop.f32.mrf.mxu0
      %v2447 = vadd.f32 0.0, %v2446
      %v2448 = vpop.f32.mrf.mxu0
      %2449 = vmatprep.mubr.bf16.mxu0 0
      %2450 = vmatmul.mubr.bf16.gmra.mxu0 %v2336
      %v2451 = vpop.f32.mrf.mxu0
      %v2452 = vadd.f32 0.0, %v2451
      %v2453 = vpop.f32.mrf.mxu0
      %v2454 = vpop.f32.mrf.mxu0
      %v2455 = vadd.f32 0.0, %v2454
      %v2456 = vpop.f32.mrf.mxu0
      %2457 = vmatprep.mubr.bf16.mxu0 0
      %2458 = vmatmul.mubr.bf16.gmra.mxu0 %v2339
      %v2459 = vpop.f32.mrf.mxu0
      %v2460 = vadd.f32 0.0, %v2459
      %v2461 = vpop.f32.mrf.mxu0
      %v2462 = vpop.f32.mrf.mxu0
      %v2463 = vadd.f32 0.0, %v2462
      %v2464 = vpop.f32.mrf.mxu0
      %2465 = vmatprep.mubr.bf16.mxu0 0
      %2466 = vmatmul.mubr.bf16.gmra.mxu0 %v2342
      %v2467 = vpop.f32.mrf.mxu0
      %v2468 = vadd.f32 0.0, %v2467
      %v2469 = vpop.f32.mrf.mxu0
      %v2470 = vpop.f32.mrf.mxu0
      %v2471 = vadd.f32 0.0, %v2470
      %v2472 = vpop.f32.mrf.mxu0
      %2473 = vmatprep.mubr.bf16.mxu0 0
      %2474 = vmatmul.mubr.bf16.gmra.mxu0 %v2345
      %v2475 = vpop.f32.mrf.mxu0
      %v2476 = vadd.f32 0.0, %v2475
      %v2477 = vpop.f32.mrf.mxu0
      %v2478 = vpop.f32.mrf.mxu0
      %v2479 = vadd.f32 0.0, %v2478
      %v2480 = vpop.f32.mrf.mxu0
      %2481 = vmatprep.mubr.bf16.mxu0 0
      %2482 = vmatmul.mubr.bf16.gmra.mxu0 %v2348
      %v2483 = vpop.f32.mrf.mxu0
      %v2484 = vadd.f32 0.0, %v2483
      %v2485 = vpop.f32.mrf.mxu0
      %v2486 = vpop.f32.mrf.mxu0
      %v2487 = vadd.f32 0.0, %v2486
      %v2488 = vpop.f32.mrf.mxu0
      %2489 = vmatprep.mubr.bf16.mxu0 0
      %2490 = vmatmul.mubr.bf16.gmra.mxu0 %v2351
      %v2491 = vpop.f32.mrf.mxu0
      %v2492 = vadd.f32 0.0, %v2491
      %v2493 = vpop.f32.mrf.mxu0
      %v2494 = vpop.f32.mrf.mxu0
      %v2495 = vadd.f32 0.0, %v2494
      %v2496 = vpop.f32.mrf.mxu0
      %2497 = vmatprep.mubr.bf16.mxu0 0
      %2498 = vmatmul.mubr.bf16.gmra.mxu0 %v2354
      %v2499 = vpop.f32.mrf.mxu0
      %v2500 = vadd.f32 0.0, %v2499
      %v2501 = vpop.f32.mrf.mxu0
      %v2502 = vpop.f32.mrf.mxu0
      %v2503 = vadd.f32 0.0, %v2502
      %v2504 = vpop.f32.mrf.mxu0
      %2505 = vmatprep.mubr.bf16.mxu0 0
      %2506 = vmatmul.mubr.bf16.gmra.mxu0 %v2357
      %v2507 = vpop.f32.mrf.mxu0
      %v2508 = vadd.f32 0.0, %v2507
      %v2509 = vpop.f32.mrf.mxu0
      %v2510 = vpop.f32.mrf.mxu0
      %v2511 = vadd.f32 0.0, %v2510
      %v2512 = vpop.f32.mrf.mxu0
      %2513 = vmatprep.mubr.bf16.mxu0 0
      %2514 = vmatmul.mubr.bf16.gmra.mxu0 %v2360
      %v2515 = vpop.f32.mrf.mxu0
      %v2516 = vadd.f32 0.0, %v2515
      %v2517 = vpop.f32.mrf.mxu0
      %v2518 = vpop.f32.mrf.mxu0
      %v2519 = vadd.f32 0.0, %v2518
      %v2520 = vpop.f32.mrf.mxu0
      %2521 = vmatprep.mubr.bf16.mxu0 0
      %2522 = vmatmul.mubr.bf16.gmra.mxu0 %v2363
      %v2523 = vpop.f32.mrf.mxu0
      %v2524 = vadd.f32 0.0, %v2523
      %v2525 = vpop.f32.mrf.mxu0
      %v2526 = vpop.f32.mrf.mxu0
      %v2527 = vadd.f32 0.0, %v2526
      %v2528 = vpop.f32.mrf.mxu0
      %2529 = vdwg.mxu0
      %v2530 = vld [vmem:[%s2] sm:$0x1]
      %v2532 = vlaneseq
      %v2533 = vshrl.u32 %v2532, 7
      %v2534 = vsub.s32 0, %v2533
      %v2535 = vrot.slane %v2530, %v2534
      %v2537 = vmul.f32 %v2404, %v2535
      %v2538 = vmul.f32 %v2407, %v2535
      %v2539 = vmul.f32 %v2412, %v2535
      %v2540 = vmul.f32 %v2415, %v2535
      %v2541 = vmul.f32 %v2420, %v2535
      %v2542 = vmul.f32 %v2423, %v2535
      %v2543 = vmul.f32 %v2428, %v2535
      %v2544 = vmul.f32 %v2431, %v2535
      %v2545 = vmul.f32 %v2436, %v2535
      %v2546 = vmul.f32 %v2439, %v2535
      %v2547 = vmul.f32 %v2444, %v2535
      %v2548 = vmul.f32 %v2447, %v2535
      %v2549 = vmul.f32 %v2452, %v2535
      %v2550 = vmul.f32 %v2455, %v2535
      %v2551 = vmul.f32 %v2460, %v2535
      %v2552 = vmul.f32 %v2463, %v2535
      %v2553 = vmul.f32 %v2468, %v2535
      %v2554 = vmul.f32 %v2471, %v2535
      %v2555 = vmul.f32 %v2476, %v2535
      %v2556 = vmul.f32 %v2479, %v2535
      %v2557 = vmul.f32 %v2484, %v2535
      %v2558 = vmul.f32 %v2487, %v2535
      %v2559 = vmul.f32 %v2492, %v2535
      %v2560 = vmul.f32 %v2495, %v2535
      %v2561 = vmul.f32 %v2500, %v2535
      %v2562 = vmul.f32 %v2503, %v2535
      %v2563 = vmul.f32 %v2508, %v2535
      %v2564 = vmul.f32 %v2511, %v2535
      %v2565 = vmul.f32 %v2516, %v2535
      %v2566 = vmul.f32 %v2519, %v2535
      %v2567 = vmul.f32 %v2524, %v2535
      %v2568 = vmul.f32 %v2527, %v2535
      %v2569 = vld [vmem:[%s3] sm:$0x1]
      %v2571 = vlaneseq
      %v2572 = vshrl.u32 %v2571, 7
      %v2573 = vsub.s32 0, %v2572
      %v2574 = vrot.slane %v2569, %v2573
      %v2576 = vadd.f32 %v2537, %v2574
      %v2577 = vadd.f32 %v2538, %v2574
      %v2578 = vadd.f32 %v2539, %v2574
      %v2579 = vadd.f32 %v2540, %v2574
      %v2580 = vadd.f32 %v2541, %v2574
      %v2581 = vadd.f32 %v2542, %v2574
      %v2582 = vadd.f32 %v2543, %v2574
      %v2583 = vadd.f32 %v2544, %v2574
      %v2584 = vadd.f32 %v2545, %v2574
      %v2585 = vadd.f32 %v2546, %v2574
      %v2586 = vadd.f32 %v2547, %v2574
      %v2587 = vadd.f32 %v2548, %v2574
      %v2588 = vadd.f32 %v2549, %v2574
      %v2589 = vadd.f32 %v2550, %v2574
      %v2590 = vadd.f32 %v2551, %v2574
      %v2591 = vadd.f32 %v2552, %v2574
      %v2592 = vadd.f32 %v2553, %v2574
      %v2593 = vadd.f32 %v2554, %v2574
      %v2594 = vadd.f32 %v2555, %v2574
      %v2595 = vadd.f32 %v2556, %v2574
      %v2596 = vadd.f32 %v2557, %v2574
      %v2597 = vadd.f32 %v2558, %v2574
      %v2598 = vadd.f32 %v2559, %v2574
      %v2599 = vadd.f32 %v2560, %v2574
      %v2600 = vadd.f32 %v2561, %v2574
      %v2601 = vadd.f32 %v2562, %v2574
      %v2602 = vadd.f32 %v2563, %v2574
      %v2603 = vadd.f32 %v2564, %v2574
      %v2604 = vadd.f32 %v2565, %v2574
      %v2605 = vadd.f32 %v2566, %v2574
      %v2606 = vadd.f32 %v2567, %v2574
      %v2607 = vadd.f32 %v2568, %v2574
      %v2608 = vmax.f32 %v2576, 0.0
      %v2609 = vmax.f32 %v2577, 0.0
      %v2610 = vmax.f32 %v2578, 0.0
      %v2611 = vmax.f32 %v2579, 0.0
      %v2612 = vmax.f32 %v2580, 0.0
      %v2613 = vmax.f32 %v2581, 0.0
      %v2614 = vmax.f32 %v2582, 0.0
      %v2615 = vmax.f32 %v2583, 0.0
      %v2616 = vmax.f32 %v2584, 0.0
      %v2617 = vmax.f32 %v2585, 0.0
      %v2618 = vmax.f32 %v2586, 0.0
      %v2619 = vmax.f32 %v2587, 0.0
      %v2620 = vmax.f32 %v2588, 0.0
      %v2621 = vmax.f32 %v2589, 0.0
      %v2622 = vmax.f32 %v2590, 0.0
      %v2623 = vmax.f32 %v2591, 0.0
      %v2624 = vmax.f32 %v2592, 0.0
      %v2625 = vmax.f32 %v2593, 0.0
      %v2626 = vmax.f32 %v2594, 0.0
      %v2627 = vmax.f32 %v2595, 0.0
      %v2628 = vmax.f32 %v2596, 0.0
      %v2629 = vmax.f32 %v2597, 0.0
      %v2630 = vmax.f32 %v2598, 0.0
      %v2631 = vmax.f32 %v2599, 0.0
      %v2632 = vmax.f32 %v2600, 0.0
      %v2633 = vmax.f32 %v2601, 0.0
      %v2634 = vmax.f32 %v2602, 0.0
      %v2635 = vmax.f32 %v2603, 0.0
      %v2636 = vmax.f32 %v2604, 0.0
      %v2637 = vmax.f32 %v2605, 0.0
      %v2638 = vmax.f32 %v2606, 0.0
      %v2639 = vmax.f32 %v2607, 0.0
      %vm2640 = vcmask 64512
      %2641 = vst.msk [vmem:[#allocation3] sm:$0xff] %vm2640, 0.0
      %2642 = vst.msk [vmem:[#allocation3 + $0x8] sm:$0xff] %vm2640, 0.0
      %vm2643 = vcmask 58368
      %2644 = vst.msk [vmem:[#allocation3 + $0x10] sm:$0x3] %vm2643, 0.0
      %2645 = vst.msk [vmem:[#allocation3 + $0x18] sm:$0xff] %vm2640, 0.0
      %2646 = vst.msk [vmem:[#allocation3 + $0x20] sm:$0xff] %vm2640, 0.0
      %2647 = vst.msk [vmem:[#allocation3 + $0x28] sm:$0x3] %vm2643, 0.0
      %2648 = vst.msk [vmem:[#allocation3 + $0x30] sm:$0xff] %vm2640, 0.0
      %2649 = vst.msk [vmem:[#allocation3 + $0x38] sm:$0xff] %vm2640, 0.0
      %2650 = vst.msk [vmem:[#allocation3 + $0x40] sm:$0x3] %vm2643, 0.0
      %2651 = vst.msk [vmem:[#allocation3 + $0x48] sm:$0xff] %vm2640, 0.0
      %2652 = vst.msk [vmem:[#allocation3 + $0x50] sm:$0xff] %vm2640, 0.0
      %2653 = vst.msk [vmem:[#allocation3 + $0x58] sm:$0x3] %vm2643, 0.0
      %2654 = vst.msk [vmem:[#allocation3 + $0x60] sm:$0xff] %vm2640, 0.0
      %2655 = vst.msk [vmem:[#allocation3 + $0x68] sm:$0xff] %vm2640, 0.0
      %2656 = vst.msk [vmem:[#allocation3 + $0x70] sm:$0x3] %vm2643, 0.0
      %2657 = vst.msk [vmem:[#allocation3 + $0x78] sm:$0xff] %vm2640, 0.0
      %2658 = vst.msk [vmem:[#allocation3 + $0x80] sm:$0xff] %vm2640, 0.0
      %2659 = vst.msk [vmem:[#allocation3 + $0x88] sm:$0x3] %vm2643, 0.0
      %2660 = vst.msk [vmem:[#allocation3 + $0x90] sm:$0xff] %vm2640, 0.0
      %2661 = vst.msk [vmem:[#allocation3 + $0x98] sm:$0xff] %vm2640, 0.0
      %2662 = vst.msk [vmem:[#allocation3 + $0xa0] sm:$0x3] %vm2643, 0.0
      %2663 = vst.msk [vmem:[#allocation3 + $0xa8] sm:$0xff] %vm2640, 0.0
      %2664 = vst.msk [vmem:[#allocation3 + $0xb0] sm:$0xff] %vm2640, 0.0
      %2665 = vst.msk [vmem:[#allocation3 + $0xb8] sm:$0x3] %vm2643, 0.0
      %2666 = vst.msk [vmem:[#allocation3 + $0xc0] sm:$0xff] %vm2640, 0.0
      %2667 = vst.msk [vmem:[#allocation3 + $0xc8] sm:$0xff] %vm2640, 0.0
      %2668 = vst.msk [vmem:[#allocation3 + $0xd0] sm:$0x3] %vm2643, 0.0
      %2669 = vst.msk [vmem:[#allocation3 + $0xd8] sm:$0xff] %vm2640, 0.0
      %2670 = vst.msk [vmem:[#allocation3 + $0xe0] sm:$0xff] %vm2640, 0.0
      %2671 = vst.msk [vmem:[#allocation3 + $0xe8] sm:$0x3] %vm2643, 0.0
      %2672 = vst.msk [vmem:[#allocation3 + $0xf0] sm:$0xff] %vm2640, 0.0
      %2673 = vst.msk [vmem:[#allocation3 + $0xf8] sm:$0xff] %vm2640, 0.0
      %2674 = vst.msk [vmem:[#allocation3 + $0x100] sm:$0x3] %vm2643, 0.0
      %2675 = vst.msk [vmem:[#allocation3 + $0x108] sm:$0xff] %vm2640, 0.0
      %2676 = vst.msk [vmem:[#allocation3 + $0x110] sm:$0xff] %vm2640, 0.0
      %2677 = vst.msk [vmem:[#allocation3 + $0x118] sm:$0x3] %vm2643, 0.0
      %2678 = vst.msk [vmem:[#allocation3 + $0x120] sm:$0xff] %vm2640, 0.0
      %2679 = vst.msk [vmem:[#allocation3 + $0x128] sm:$0xff] %vm2640, 0.0
      %2680 = vst.msk [vmem:[#allocation3 + $0x130] sm:$0x3] %vm2643, 0.0
      %2681 = vst.msk [vmem:[#allocation3 + $0x138] sm:$0xff] %vm2640, 0.0
      %2682 = vst.msk [vmem:[#allocation3 + $0x140] sm:$0xff] %vm2640, 0.0
      %2683 = vst.msk [vmem:[#allocation3 + $0x148] sm:$0x3] %vm2643, 0.0
      %2684 = vst.msk [vmem:[#allocation3 + $0x150] sm:$0xff] %vm2640, 0.0
      %2685 = vst.msk [vmem:[#allocation3 + $0x158] sm:$0xff] %vm2640, 0.0
      %2686 = vst.msk [vmem:[#allocation3 + $0x160] sm:$0x3] %vm2643, 0.0
      %2687 = vst.msk [vmem:[#allocation3 + $0x168] sm:$0xff] %vm2640, 0.0
      %2688 = vst.msk [vmem:[#allocation3 + $0x170] sm:$0xff] %vm2640, 0.0
      %2689 = vst.msk [vmem:[#allocation3 + $0x178] sm:$0x3] %vm2643, 0.0
      %2690 = vst.msk [vmem:[#allocation3 + $0x180] sm:$0xff] %vm2640, 0.0
      %2691 = vst.msk [vmem:[#allocation3 + $0x188] sm:$0xff] %vm2640, 0.0
      %2692 = vst.msk [vmem:[#allocation3 + $0x190] sm:$0x3] %vm2643, 0.0
      %2693 = vst.msk [vmem:[#allocation3 + $0x198] sm:$0xff] %vm2640, 0.0
      %2694 = vst.msk [vmem:[#allocation3 + $0x1a0] sm:$0xff] %vm2640, 0.0
      %2695 = vst.msk [vmem:[#allocation3 + $0x1a8] sm:$0x3] %vm2643, 0.0
      %s2696 = scalar_lea.vmem [#allocation3], 24
      %2697 = vst.msk [vmem:[%s2696 + $0x1] sm:$0xff] %vm2640, %v2608
      %2698 = vst.msk [vmem:[%s2696 + $0x9] sm:$0xff] %vm2640, %v2609
      %2699 = vst.msk [vmem:[%s2696 + $0x19] sm:$0xff] %vm2640, %v2610
      %2700 = vst.msk [vmem:[%s2696 + $0x21] sm:$0xff] %vm2640, %v2611
      %2701 = vst.msk [vmem:[%s2696 + $0x31] sm:$0xff] %vm2640, %v2612
      %2702 = vst.msk [vmem:[%s2696 + $0x39] sm:$0xff] %vm2640, %v2613
      %2703 = vst.msk [vmem:[%s2696 + $0x49] sm:$0xff] %vm2640, %v2614
      %2704 = vst.msk [vmem:[%s2696 + $0x51] sm:$0xff] %vm2640, %v2615
      %2705 = vst.msk [vmem:[%s2696 + $0x61] sm:$0xff] %vm2640, %v2616
      %2706 = vst.msk [vmem:[%s2696 + $0x69] sm:$0xff] %vm2640, %v2617
      %2707 = vst.msk [vmem:[%s2696 + $0x79] sm:$0xff] %vm2640, %v2618
      %2708 = vst.msk [vmem:[%s2696 + $0x81] sm:$0xff] %vm2640, %v2619
      %2709 = vst.msk [vmem:[%s2696 + $0x91] sm:$0xff] %vm2640, %v2620
      %2710 = vst.msk [vmem:[%s2696 + $0x99] sm:$0xff] %vm2640, %v2621
      %2711 = vst.msk [vmem:[%s2696 + $0xa9] sm:$0xff] %vm2640, %v2622
      %2712 = vst.msk [vmem:[%s2696 + $0xb1] sm:$0xff] %vm2640, %v2623
      %2713 = vst.msk [vmem:[%s2696 + $0xc1] sm:$0xff] %vm2640, %v2624
      %2714 = vst.msk [vmem:[%s2696 + $0xc9] sm:$0xff] %vm2640, %v2625
      %2715 = vst.msk [vmem:[%s2696 + $0xd9] sm:$0xff] %vm2640, %v2626
      %2716 = vst.msk [vmem:[%s2696 + $0xe1] sm:$0xff] %vm2640, %v2627
      %2717 = vst.msk [vmem:[%s2696 + $0xf1] sm:$0xff] %vm2640, %v2628
      %2718 = vst.msk [vmem:[%s2696 + $0xf9] sm:$0xff] %vm2640, %v2629
      %2719 = vst.msk [vmem:[%s2696 + $0x109] sm:$0xff] %vm2640, %v2630
      %2720 = vst.msk [vmem:[%s2696 + $0x111] sm:$0xff] %vm2640, %v2631
      %2721 = vst.msk [vmem:[%s2696 + $0x121] sm:$0xff] %vm2640, %v2632
      %2722 = vst.msk [vmem:[%s2696 + $0x129] sm:$0xff] %vm2640, %v2633
      %2723 = vst.msk [vmem:[%s2696 + $0x139] sm:$0xff] %vm2640, %v2634
      %2724 = vst.msk [vmem:[%s2696 + $0x141] sm:$0xff] %vm2640, %v2635
      %2725 = vst.msk [vmem:[%s2696 + $0x151] sm:$0xff] %vm2640, %v2636
      %2726 = vst.msk [vmem:[%s2696 + $0x159] sm:$0xff] %vm2640, %v2637
      %2727 = vst.msk [vmem:[%s2696 + $0x169] sm:$0xff] %vm2640, %v2638
      %2728 = vst.msk [vmem:[%s2696 + $0x171] sm:$0xff] %vm2640, %v2639
      %v2729 = vld [vmem:[#allocation3] sm:$0xff]
      %v2730 = vld [vmem:[#allocation3 + $0x8] sm:$0xff]
      %v2731 = vld [vmem:[#allocation3 + $0x10] sm:$0x3]
      %v2732 = vld [vmem:[#allocation3 + $0x18] sm:$0xff]
      %v2733 = vld [vmem:[#allocation3 + $0x20] sm:$0xff]
      %v2734 = vld [vmem:[#allocation3 + $0x28] sm:$0x3]
      %v2735 = vld [vmem:[#allocation3 + $0x30] sm:$0xff]
      %v2736 = vld [vmem:[#allocation3 + $0x38] sm:$0xff]
      %v2737 = vld [vmem:[#allocation3 + $0x40] sm:$0x3]
      %v2738 = vld [vmem:[#allocation3 + $0x48] sm:$0xff]
      %v2739 = vld [vmem:[#allocation3 + $0x50] sm:$0xff]
      %v2740 = vld [vmem:[#allocation3 + $0x58] sm:$0x3]
      %v2741 = vld [vmem:[#allocation3 + $0x60] sm:$0xff]
      %v2742 = vld [vmem:[#allocation3 + $0x68] sm:$0xff]
      %v2743 = vld [vmem:[#allocation3 + $0x70] sm:$0x3]
      %v2744 = vld [vmem:[#allocation3 + $0x78] sm:$0xff]
      %v2745 = vld [vmem:[#allocation3 + $0x80] sm:$0xff]
      %v2746 = vld [vmem:[#allocation3 + $0x88] sm:$0x3]
      %v2747 = vld [vmem:[#allocation3 + $0x90] sm:$0xff]
      %v2748 = vld [vmem:[#allocation3 + $0x98] sm:$0xff]
      %v2749 = vld [vmem:[#allocation3 + $0xa0] sm:$0x3]
      %v2750 = vld [vmem:[#allocation3 + $0xa8] sm:$0xff]
      %v2751 = vld [vmem:[#allocation3 + $0xb0] sm:$0xff]
      %v2752 = vld [vmem:[#allocation3 + $0xb8] sm:$0x3]
      %v2753 = vld [vmem:[#allocation3 + $0xc0] sm:$0xff]
      %v2754 = vld [vmem:[#allocation3 + $0xc8] sm:$0xff]
      %v2755 = vld [vmem:[#allocation3 + $0xd0] sm:$0x3]
      %v2756 = vld [vmem:[#allocation3 + $0xd8] sm:$0xff]
      %v2757 = vld [vmem:[#allocation3 + $0xe0] sm:$0xff]
      %v2758 = vld [vmem:[#allocation3 + $0xe8] sm:$0x3]
      %v2759 = vld [vmem:[#allocation3 + $0xf0] sm:$0xff]
      %v2760 = vld [vmem:[#allocation3 + $0xf8] sm:$0xff]
      %v2761 = vld [vmem:[#allocation3 + $0x100] sm:$0x3]
      %v2762 = vld [vmem:[#allocation3 + $0x108] sm:$0xff]
      %v2763 = vld [vmem:[#allocation3 + $0x110] sm:$0xff]
      %v2764 = vld [vmem:[#allocation3 + $0x118] sm:$0x3]
      %v2765 = vld [vmem:[#allocation3 + $0x120] sm:$0xff]
      %v2766 = vld [vmem:[#allocation3 + $0x128] sm:$0xff]
      %v2767 = vld [vmem:[#allocation3 + $0x130] sm:$0x3]
      %v2768 = vld [vmem:[#allocation3 + $0x138] sm:$0xff]
      %v2769 = vld [vmem:[#allocation3 + $0x140] sm:$0xff]
      %v2770 = vld [vmem:[#allocation3 + $0x148] sm:$0x3]
      %v2771 = vld [vmem:[#allocation3 + $0x150] sm:$0xff]
      %v2772 = vld [vmem:[#allocation3 + $0x158] sm:$0xff]
      %v2773 = vld [vmem:[#allocation3 + $0x160] sm:$0x3]
      %v2774 = vld [vmem:[#allocation3 + $0x168] sm:$0xff]
      %v2775 = vld [vmem:[#allocation3 + $0x170] sm:$0xff]
      %v2776 = vld [vmem:[#allocation3 + $0x178] sm:$0x3]
      %v2777 = vld [vmem:[#allocation3 + $0x180] sm:$0xff]
      %v2778 = vld [vmem:[#allocation3 + $0x188] sm:$0xff]
      %v2779 = vld [vmem:[#allocation3 + $0x190] sm:$0x3]
      %v2780 = vld [vmem:[#allocation3 + $0x198] sm:$0xff]
      %v2781 = vld [vmem:[#allocation3 + $0x1a0] sm:$0xff]
      %v2782 = vld [vmem:[#allocation3 + $0x1a8] sm:$0x3]
      %v2783 = vpack.c.bf16 %v2730, %v2729
      %v2784 = vpack.c.bf16 %v2733, %v2732
      %v2785 = vpack.c.bf16 %v2736, %v2735
      %v2786 = vpack.c.bf16 %v2739, %v2738
      %v2787 = vpack.c.bf16 %v2742, %v2741
      %v2788 = vpack.c.bf16 %v2745, %v2744
      %v2789 = vpack.c.bf16 %v2748, %v2747
      %v2790 = vpack.c.bf16 %v2751, %v2750
      %v2791 = vpack.c.bf16 %v2754, %v2753
      %v2792 = vpack.c.bf16 %v2757, %v2756
      %v2793 = vpack.c.bf16 %v2760, %v2759
      %v2794 = vpack.c.bf16 %v2763, %v2762
      %v2795 = vpack.c.bf16 %v2766, %v2765
      %v2796 = vpack.c.bf16 %v2769, %v2768
      %v2797 = vpack.c.bf16 %v2772, %v2771
      %v2798 = vpack.c.bf16 %v2775, %v2774
      %v2815 = vunpack.c.l.b16 %v2783
      %v2816 = vunpack.c.h.b16 %v2783
      %v2817 = vunpack.c.l.b16 %v2784
      %v2818 = vunpack.c.h.b16 %v2784
      %v2819 = vunpack.c.l.b16 %v2785
      %v2820 = vunpack.c.h.b16 %v2785
      %v2821 = vunpack.c.l.b16 %v2786
      %v2822 = vunpack.c.h.b16 %v2786
      %v2823 = vunpack.c.l.b16 %v2787
      %v2824 = vunpack.c.h.b16 %v2787
      %v2825 = vunpack.c.l.b16 %v2788
      %v2826 = vunpack.c.h.b16 %v2788
      %v2827 = vunpack.c.l.b16 %v2789
      %v2828 = vunpack.c.h.b16 %v2789
      %v2829 = vunpack.c.l.b16 %v2790
      %v2830 = vunpack.c.h.b16 %v2790
      %v2831 = vunpack.c.l.b16 %v2791
      %v2832 = vunpack.c.h.b16 %v2791
      %v2833 = vunpack.c.l.b16 %v2792
      %v2834 = vunpack.c.h.b16 %v2792
      %v2835 = vunpack.c.l.b16 %v2793
      %v2836 = vunpack.c.h.b16 %v2793
      %v2837 = vunpack.c.l.b16 %v2794
      %v2838 = vunpack.c.h.b16 %v2794
      %v2839 = vunpack.c.l.b16 %v2795
      %v2840 = vunpack.c.h.b16 %v2795
      %v2841 = vunpack.c.l.b16 %v2796
      %v2842 = vunpack.c.h.b16 %v2796
      %v2843 = vunpack.c.l.b16 %v2797
      %v2844 = vunpack.c.h.b16 %v2797
      %v2845 = vunpack.c.l.b16 %v2798
      %v2846 = vunpack.c.h.b16 %v2798
      %v2847 = vpack.c.b16 %v2815, %v2815
      %v2848 = vpack.c.b16 %v2816, %v2816
      %v2849 = vpack.c.b16 %v2817, %v2817
      %v2850 = vpack.c.b16 %v2818, %v2818
      %v2851 = vpack.c.b16 %v2819, %v2819
      %v2852 = vpack.c.b16 %v2820, %v2820
      %v2853 = vpack.c.b16 %v2821, %v2821
      %v2854 = vpack.c.b16 %v2822, %v2822
      %v2855 = vpack.c.b16 %v2823, %v2823
      %v2856 = vpack.c.b16 %v2824, %v2824
      %v2857 = vpack.c.b16 %v2825, %v2825
      %v2858 = vpack.c.b16 %v2826, %v2826
      %v2859 = vpack.c.b16 %v2827, %v2827
      %v2860 = vpack.c.b16 %v2828, %v2828
      %v2861 = vpack.c.b16 %v2829, %v2829
      %v2862 = vpack.c.b16 %v2830, %v2830
      %v2863 = vpack.c.b16 %v2831, %v2831
      %v2864 = vpack.c.b16 %v2832, %v2832
      %v2865 = vpack.c.b16 %v2833, %v2833
      %v2866 = vpack.c.b16 %v2834, %v2834
      %v2867 = vpack.c.b16 %v2835, %v2835
      %v2868 = vpack.c.b16 %v2836, %v2836
      %v2869 = vpack.c.b16 %v2837, %v2837
      %v2870 = vpack.c.b16 %v2838, %v2838
      %v2871 = vpack.c.b16 %v2839, %v2839
      %v2872 = vpack.c.b16 %v2840, %v2840
      %v2873 = vpack.c.b16 %v2841, %v2841
      %v2874 = vpack.c.b16 %v2842, %v2842
      %v2875 = vpack.c.b16 %v2843, %v2843
      %v2876 = vpack.c.b16 %v2844, %v2844
      %v2877 = vpack.c.b16 %v2845, %v2845
      %v2878 = vpack.c.b16 %v2846, %v2846
      %vm2911 = vcmask 60416
      %2912 = vst.msk [vmem:[#allocation5] sm:$0xf] %vm2911, %v2847
      %2913 = vst.msk [vmem:[#allocation5 + $0x4] sm:$0xf] %vm2911, %v2848
      %2914 = vst.msk [vmem:[#allocation5 + $0x8] sm:$0xf] %vm2911, %v2849
      %2915 = vst.msk [vmem:[#allocation5 + $0xc] sm:$0xf] %vm2911, %v2850
      %2916 = vst.msk [vmem:[#allocation5 + $0x10] sm:$0xf] %vm2911, %v2851
      %2917 = vst.msk [vmem:[#allocation5 + $0x14] sm:$0xf] %vm2911, %v2852
      %2918 = vst.msk [vmem:[#allocation5 + $0x18] sm:$0xf] %vm2911, %v2853
      %2919 = vst.msk [vmem:[#allocation5 + $0x1c] sm:$0xf] %vm2911, %v2854
      %2920 = vst.msk [vmem:[#allocation5 + $0x20] sm:$0xf] %vm2911, %v2855
      %2921 = vst.msk [vmem:[#allocation5 + $0x24] sm:$0xf] %vm2911, %v2856
      %2922 = vst.msk [vmem:[#allocation5 + $0x28] sm:$0xf] %vm2911, %v2857
      %2923 = vst.msk [vmem:[#allocation5 + $0x2c] sm:$0xf] %vm2911, %v2858
      %2924 = vst.msk [vmem:[#allocation5 + $0x30] sm:$0xf] %vm2911, %v2859
      %2925 = vst.msk [vmem:[#allocation5 + $0x34] sm:$0xf] %vm2911, %v2860
      %2926 = vst.msk [vmem:[#allocation5 + $0x38] sm:$0xf] %vm2911, %v2861
      %2927 = vst.msk [vmem:[#allocation5 + $0x3c] sm:$0xf] %vm2911, %v2862
      %2928 = vst.msk [vmem:[#allocation5 + $0x40] sm:$0xf] %vm2911, %v2863
      %2929 = vst.msk [vmem:[#allocation5 + $0x44] sm:$0xf] %vm2911, %v2864
      %2930 = vst.msk [vmem:[#allocation5 + $0x48] sm:$0xf] %vm2911, %v2865
      %2931 = vst.msk [vmem:[#allocation5 + $0x4c] sm:$0xf] %vm2911, %v2866
      %2932 = vst.msk [vmem:[#allocation5 + $0x50] sm:$0xf] %vm2911, %v2867
      %2933 = vst.msk [vmem:[#allocation5 + $0x54] sm:$0xf] %vm2911, %v2868
      %2934 = vst.msk [vmem:[#allocation5 + $0x58] sm:$0xf] %vm2911, %v2869
      %2935 = vst.msk [vmem:[#allocation5 + $0x5c] sm:$0xf] %vm2911, %v2870
      %2936 = vst.msk [vmem:[#allocation5 + $0x60] sm:$0xf] %vm2911, %v2871
      %2937 = vst.msk [vmem:[#allocation5 + $0x64] sm:$0xf] %vm2911, %v2872
      %2938 = vst.msk [vmem:[#allocation5 + $0x68] sm:$0xf] %vm2911, %v2873
      %2939 = vst.msk [vmem:[#allocation5 + $0x6c] sm:$0xf] %vm2911, %v2874
      %2940 = vst.msk [vmem:[#allocation5 + $0x70] sm:$0xf] %vm2911, %v2875
      %2941 = vst.msk [vmem:[#allocation5 + $0x74] sm:$0xf] %vm2911, %v2876
      %2942 = vst.msk [vmem:[#allocation5 + $0x78] sm:$0xf] %vm2911, %v2877
      %2943 = vst.msk [vmem:[#allocation5 + $0x7c] sm:$0xf] %vm2911, %v2878
      %v2992 = vrot.slane %v2729, 1
      %v2993 = vrot.slane %v2730, 1
      %v2994 = vsel %vm664, %v2992, %v2993
      %v2995 = vrot.slane %v2731, 1
      %v2996 = vsel %vm664, %v2993, %v2995
      %v2997 = vrot.slane %v2732, 1
      %v2998 = vrot.slane %v2733, 1
      %v2999 = vsel %vm664, %v2997, %v2998
      %v3000 = vrot.slane %v2734, 1
      %v3001 = vsel %vm664, %v2998, %v3000
      %v3002 = vrot.slane %v2735, 1
      %v3003 = vrot.slane %v2736, 1
      %v3004 = vsel %vm664, %v3002, %v3003
      %v3005 = vrot.slane %v2737, 1
      %v3006 = vsel %vm664, %v3003, %v3005
      %v3007 = vrot.slane %v2738, 1
      %v3008 = vrot.slane %v2739, 1
      %v3009 = vsel %vm664, %v3007, %v3008
      %v3010 = vrot.slane %v2740, 1
      %v3011 = vsel %vm664, %v3008, %v3010
      %v3012 = vrot.slane %v2741, 1
      %v3013 = vrot.slane %v2742, 1
      %v3014 = vsel %vm664, %v3012, %v3013
      %v3015 = vrot.slane %v2743, 1
      %v3016 = vsel %vm664, %v3013, %v3015
      %v3017 = vrot.slane %v2744, 1
      %v3018 = vrot.slane %v2745, 1
      %v3019 = vsel %vm664, %v3017, %v3018
      %v3020 = vrot.slane %v2746, 1
      %v3021 = vsel %vm664, %v3018, %v3020
      %v3022 = vrot.slane %v2747, 1
      %v3023 = vrot.slane %v2748, 1
      %v3024 = vsel %vm664, %v3022, %v3023
      %v3025 = vrot.slane %v2749, 1
      %v3026 = vsel %vm664, %v3023, %v3025
      %v3027 = vrot.slane %v2750, 1
      %v3028 = vrot.slane %v2751, 1
      %v3029 = vsel %vm664, %v3027, %v3028
      %v3030 = vrot.slane %v2752, 1
      %v3031 = vsel %vm664, %v3028, %v3030
      %v3032 = vrot.slane %v2753, 1
      %v3033 = vrot.slane %v2754, 1
      %v3034 = vsel %vm664, %v3032, %v3033
      %v3035 = vrot.slane %v2755, 1
      %v3036 = vsel %vm664, %v3033, %v3035
      %v3037 = vrot.slane %v2756, 1
      %v3038 = vrot.slane %v2757, 1
      %v3039 = vsel %vm664, %v3037, %v3038
      %v3040 = vrot.slane %v2758, 1
      %v3041 = vsel %vm664, %v3038, %v3040
      %v3042 = vrot.slane %v2759, 1
      %v3043 = vrot.slane %v2760, 1
      %v3044 = vsel %vm664, %v3042, %v3043
      %v3045 = vrot.slane %v2761, 1
      %v3046 = vsel %vm664, %v3043, %v3045
      %v3047 = vrot.slane %v2762, 1
      %v3048 = vrot.slane %v2763, 1
      %v3049 = vsel %vm664, %v3047, %v3048
      %v3050 = vrot.slane %v2764, 1
      %v3051 = vsel %vm664, %v3048, %v3050
      %v3052 = vrot.slane %v2765, 1
      %v3053 = vrot.slane %v2766, 1
      %v3054 = vsel %vm664, %v3052, %v3053
      %v3055 = vrot.slane %v2767, 1
      %v3056 = vsel %vm664, %v3053, %v3055
      %v3057 = vrot.slane %v2768, 1
      %v3058 = vrot.slane %v2769, 1
      %v3059 = vsel %vm664, %v3057, %v3058
      %v3060 = vrot.slane %v2770, 1
      %v3061 = vsel %vm664, %v3058, %v3060
      %v3062 = vrot.slane %v2771, 1
      %v3063 = vrot.slane %v2772, 1
      %v3064 = vsel %vm664, %v3062, %v3063
      %v3065 = vrot.slane %v2773, 1
      %v3066 = vsel %vm664, %v3063, %v3065
      %v3067 = vrot.slane %v2774, 1
      %v3068 = vrot.slane %v2775, 1
      %v3069 = vsel %vm664, %v3067, %v3068
      %v3070 = vrot.slane %v2776, 1
      %v3071 = vsel %vm664, %v3068, %v3070
      %v3104 = vpack.c.bf16 %v2996, %v2994
      %v3105 = vpack.c.bf16 %v3001, %v2999
      %v3106 = vpack.c.bf16 %v3006, %v3004
      %v3107 = vpack.c.bf16 %v3011, %v3009
      %v3108 = vpack.c.bf16 %v3016, %v3014
      %v3109 = vpack.c.bf16 %v3021, %v3019
      %v3110 = vpack.c.bf16 %v3026, %v3024
      %v3111 = vpack.c.bf16 %v3031, %v3029
      %v3112 = vpack.c.bf16 %v3036, %v3034
      %v3113 = vpack.c.bf16 %v3041, %v3039
      %v3114 = vpack.c.bf16 %v3046, %v3044
      %v3115 = vpack.c.bf16 %v3051, %v3049
      %v3116 = vpack.c.bf16 %v3056, %v3054
      %v3117 = vpack.c.bf16 %v3061, %v3059
      %v3118 = vpack.c.bf16 %v3066, %v3064
      %v3119 = vpack.c.bf16 %v3071, %v3069
      %v3136 = vunpack.c.l.b16 %v3104
      %v3137 = vunpack.c.h.b16 %v3104
      %v3138 = vunpack.c.l.b16 %v3105
      %v3139 = vunpack.c.h.b16 %v3105
      %v3140 = vunpack.c.l.b16 %v3106
      %v3141 = vunpack.c.h.b16 %v3106
      %v3142 = vunpack.c.l.b16 %v3107
      %v3143 = vunpack.c.h.b16 %v3107
      %v3144 = vunpack.c.l.b16 %v3108
      %v3145 = vunpack.c.h.b16 %v3108
      %v3146 = vunpack.c.l.b16 %v3109
      %v3147 = vunpack.c.h.b16 %v3109
      %v3148 = vunpack.c.l.b16 %v3110
      %v3149 = vunpack.c.h.b16 %v3110
      %v3150 = vunpack.c.l.b16 %v3111
      %v3151 = vunpack.c.h.b16 %v3111
      %v3152 = vunpack.c.l.b16 %v3112
      %v3153 = vunpack.c.h.b16 %v3112
      %v3154 = vunpack.c.l.b16 %v3113
      %v3155 = vunpack.c.h.b16 %v3113
      %v3156 = vunpack.c.l.b16 %v3114
      %v3157 = vunpack.c.h.b16 %v3114
      %v3158 = vunpack.c.l.b16 %v3115
      %v3159 = vunpack.c.h.b16 %v3115
      %v3160 = vunpack.c.l.b16 %v3116
      %v3161 = vunpack.c.h.b16 %v3116
      %v3162 = vunpack.c.l.b16 %v3117
      %v3163 = vunpack.c.h.b16 %v3117
      %v3164 = vunpack.c.l.b16 %v3118
      %v3165 = vunpack.c.h.b16 %v3118
      %v3166 = vunpack.c.l.b16 %v3119
      %v3167 = vunpack.c.h.b16 %v3119
      %v3168 = vpack.c.b16 %v3136, %v3136
      %v3169 = vpack.c.b16 %v3137, %v3137
      %v3170 = vpack.c.b16 %v3138, %v3138
      %v3171 = vpack.c.b16 %v3139, %v3139
      %v3172 = vpack.c.b16 %v3140, %v3140
      %v3173 = vpack.c.b16 %v3141, %v3141
      %v3174 = vpack.c.b16 %v3142, %v3142
      %v3175 = vpack.c.b16 %v3143, %v3143
      %v3176 = vpack.c.b16 %v3144, %v3144
      %v3177 = vpack.c.b16 %v3145, %v3145
      %v3178 = vpack.c.b16 %v3146, %v3146
      %v3179 = vpack.c.b16 %v3147, %v3147
      %v3180 = vpack.c.b16 %v3148, %v3148
      %v3181 = vpack.c.b16 %v3149, %v3149
      %v3182 = vpack.c.b16 %v3150, %v3150
      %v3183 = vpack.c.b16 %v3151, %v3151
      %v3184 = vpack.c.b16 %v3152, %v3152
      %v3185 = vpack.c.b16 %v3153, %v3153
      %v3186 = vpack.c.b16 %v3154, %v3154
      %v3187 = vpack.c.b16 %v3155, %v3155
      %v3188 = vpack.c.b16 %v3156, %v3156
      %v3189 = vpack.c.b16 %v3157, %v3157
      %v3190 = vpack.c.b16 %v3158, %v3158
      %v3191 = vpack.c.b16 %v3159, %v3159
      %v3192 = vpack.c.b16 %v3160, %v3160
      %v3193 = vpack.c.b16 %v3161, %v3161
      %v3194 = vpack.c.b16 %v3162, %v3162
      %v3195 = vpack.c.b16 %v3163, %v3163
      %v3196 = vpack.c.b16 %v3164, %v3164
      %v3197 = vpack.c.b16 %v3165, %v3165
      %v3198 = vpack.c.b16 %v3166, %v3166
      %v3199 = vpack.c.b16 %v3167, %v3167
      %3200 = vrot.lane.b32.xlu0 %v3168, 8
      %v3201 = vpop.permute.xlu0 %3200
      %3202 = vrot.lane.b32.xlu0 %v3169, 8
      %v3203 = vpop.permute.xlu0 %3202
      %3204 = vrot.lane.b32.xlu0 %v3170, 8
      %v3205 = vpop.permute.xlu0 %3204
      %3206 = vrot.lane.b32.xlu0 %v3171, 8
      %v3207 = vpop.permute.xlu0 %3206
      %3208 = vrot.lane.b32.xlu0 %v3172, 8
      %v3209 = vpop.permute.xlu0 %3208
      %3210 = vrot.lane.b32.xlu0 %v3173, 8
      %v3211 = vpop.permute.xlu0 %3210
      %3212 = vrot.lane.b32.xlu0 %v3174, 8
      %v3213 = vpop.permute.xlu0 %3212
      %3214 = vrot.lane.b32.xlu0 %v3175, 8
      %v3215 = vpop.permute.xlu0 %3214
      %3216 = vrot.lane.b32.xlu0 %v3176, 8
      %v3217 = vpop.permute.xlu0 %3216
      %3218 = vrot.lane.b32.xlu0 %v3177, 8
      %v3219 = vpop.permute.xlu0 %3218
      %3220 = vrot.lane.b32.xlu0 %v3178, 8
      %v3221 = vpop.permute.xlu0 %3220
      %3222 = vrot.lane.b32.xlu0 %v3179, 8
      %v3223 = vpop.permute.xlu0 %3222
      %3224 = vrot.lane.b32.xlu0 %v3180, 8
      %v3225 = vpop.permute.xlu0 %3224
      %3226 = vrot.lane.b32.xlu0 %v3181, 8
      %v3227 = vpop.permute.xlu0 %3226
      %3228 = vrot.lane.b32.xlu0 %v3182, 8
      %v3229 = vpop.permute.xlu0 %3228
      %3230 = vrot.lane.b32.xlu0 %v3183, 8
      %v3231 = vpop.permute.xlu0 %3230
      %3232 = vrot.lane.b32.xlu0 %v3184, 8
      %v3233 = vpop.permute.xlu0 %3232
      %3234 = vrot.lane.b32.xlu0 %v3185, 8
      %v3235 = vpop.permute.xlu0 %3234
      %3236 = vrot.lane.b32.xlu0 %v3186, 8
      %v3237 = vpop.permute.xlu0 %3236
      %3238 = vrot.lane.b32.xlu0 %v3187, 8
      %v3239 = vpop.permute.xlu0 %3238
      %3240 = vrot.lane.b32.xlu0 %v3188, 8
      %v3241 = vpop.permute.xlu0 %3240
      %3242 = vrot.lane.b32.xlu0 %v3189, 8
      %v3243 = vpop.permute.xlu0 %3242
      %3244 = vrot.lane.b32.xlu0 %v3190, 8
      %v3245 = vpop.permute.xlu0 %3244
      %3246 = vrot.lane.b32.xlu0 %v3191, 8
      %v3247 = vpop.permute.xlu0 %3246
      %3248 = vrot.lane.b32.xlu0 %v3192, 8
      %v3249 = vpop.permute.xlu0 %3248
      %3250 = vrot.lane.b32.xlu0 %v3193, 8
      %v3251 = vpop.permute.xlu0 %3250
      %3252 = vrot.lane.b32.xlu0 %v3194, 8
      %v3253 = vpop.permute.xlu0 %3252
      %3254 = vrot.lane.b32.xlu0 %v3195, 8
      %v3255 = vpop.permute.xlu0 %3254
      %3256 = vrot.lane.b32.xlu0 %v3196, 8
      %v3257 = vpop.permute.xlu0 %3256
      %3258 = vrot.lane.b32.xlu0 %v3197, 8
      %v3259 = vpop.permute.xlu0 %3258
      %3260 = vrot.lane.b32.xlu0 %v3198, 8
      %v3261 = vpop.permute.xlu0 %3260
      %3262 = vrot.lane.b32.xlu0 %v3199, 8
      %v3263 = vpop.permute.xlu0 %3262
      %vm3296 = vcmask 126016
      %3297 = vst.msk [vmem:[#allocation5] sm:$0xf] %vm3296, %v3201
      %3298 = vst.msk [vmem:[#allocation5 + $0x4] sm:$0xf] %vm3296, %v3203
      %3299 = vst.msk [vmem:[#allocation5 + $0x8] sm:$0xf] %vm3296, %v3205
      %3300 = vst.msk [vmem:[#allocation5 + $0xc] sm:$0xf] %vm3296, %v3207
      %3301 = vst.msk [vmem:[#allocation5 + $0x10] sm:$0xf] %vm3296, %v3209
      %3302 = vst.msk [vmem:[#allocation5 + $0x14] sm:$0xf] %vm3296, %v3211
      %3303 = vst.msk [vmem:[#allocation5 + $0x18] sm:$0xf] %vm3296, %v3213
      %3304 = vst.msk [vmem:[#allocation5 + $0x1c] sm:$0xf] %vm3296, %v3215
      %3305 = vst.msk [vmem:[#allocation5 + $0x20] sm:$0xf] %vm3296, %v3217
      %3306 = vst.msk [vmem:[#allocation5 + $0x24] sm:$0xf] %vm3296, %v3219
      %3307 = vst.msk [vmem:[#allocation5 + $0x28] sm:$0xf] %vm3296, %v3221
      %3308 = vst.msk [vmem:[#allocation5 + $0x2c] sm:$0xf] %vm3296, %v3223
      %3309 = vst.msk [vmem:[#allocation5 + $0x30] sm:$0xf] %vm3296, %v3225
      %3310 = vst.msk [vmem:[#allocation5 + $0x34] sm:$0xf] %vm3296, %v3227
      %3311 = vst.msk [vmem:[#allocation5 + $0x38] sm:$0xf] %vm3296, %v3229
      %3312 = vst.msk [vmem:[#allocation5 + $0x3c] sm:$0xf] %vm3296, %v3231
      %3313 = vst.msk [vmem:[#allocation5 + $0x40] sm:$0xf] %vm3296, %v3233
      %3314 = vst.msk [vmem:[#allocation5 + $0x44] sm:$0xf] %vm3296, %v3235
      %3315 = vst.msk [vmem:[#allocation5 + $0x48] sm:$0xf] %vm3296, %v3237
      %3316 = vst.msk [vmem:[#allocation5 + $0x4c] sm:$0xf] %vm3296, %v3239
      %3317 = vst.msk [vmem:[#allocation5 + $0x50] sm:$0xf] %vm3296, %v3241
      %3318 = vst.msk [vmem:[#allocation5 + $0x54] sm:$0xf] %vm3296, %v3243
      %3319 = vst.msk [vmem:[#allocation5 + $0x58] sm:$0xf] %vm3296, %v3245
      %3320 = vst.msk [vmem:[#allocation5 + $0x5c] sm:$0xf] %vm3296, %v3247
      %3321 = vst.msk [vmem:[#allocation5 + $0x60] sm:$0xf] %vm3296, %v3249
      %3322 = vst.msk [vmem:[#allocation5 + $0x64] sm:$0xf] %vm3296, %v3251
      %3323 = vst.msk [vmem:[#allocation5 + $0x68] sm:$0xf] %vm3296, %v3253
      %3324 = vst.msk [vmem:[#allocation5 + $0x6c] sm:$0xf] %vm3296, %v3255
      %3325 = vst.msk [vmem:[#allocation5 + $0x70] sm:$0xf] %vm3296, %v3257
      %3326 = vst.msk [vmem:[#allocation5 + $0x74] sm:$0xf] %vm3296, %v3259
      %3327 = vst.msk [vmem:[#allocation5 + $0x78] sm:$0xf] %vm3296, %v3261
      %3328 = vst.msk [vmem:[#allocation5 + $0x7c] sm:$0xf] %vm3296, %v3263
      %v3329 = vrot.slane %v2729, 2
      %v3330 = vrot.slane %v2730, 2
      %v3331 = vsel %vm1002, %v3329, %v3330
      %v3332 = vrot.slane %v2731, 2
      %v3333 = vsel %vm1002, %v3330, %v3332
      %v3334 = vrot.slane %v2732, 2
      %v3335 = vrot.slane %v2733, 2
      %v3336 = vsel %vm1002, %v3334, %v3335
      %v3337 = vrot.slane %v2734, 2
      %v3338 = vsel %vm1002, %v3335, %v3337
      %v3339 = vrot.slane %v2735, 2
      %v3340 = vrot.slane %v2736, 2
      %v3341 = vsel %vm1002, %v3339, %v3340
      %v3342 = vrot.slane %v2737, 2
      %v3343 = vsel %vm1002, %v3340, %v3342
      %v3344 = vrot.slane %v2738, 2
      %v3345 = vrot.slane %v2739, 2
      %v3346 = vsel %vm1002, %v3344, %v3345
      %v3347 = vrot.slane %v2740, 2
      %v3348 = vsel %vm1002, %v3345, %v3347
      %v3349 = vrot.slane %v2741, 2
      %v3350 = vrot.slane %v2742, 2
      %v3351 = vsel %vm1002, %v3349, %v3350
      %v3352 = vrot.slane %v2743, 2
      %v3353 = vsel %vm1002, %v3350, %v3352
      %v3354 = vrot.slane %v2744, 2
      %v3355 = vrot.slane %v2745, 2
      %v3356 = vsel %vm1002, %v3354, %v3355
      %v3357 = vrot.slane %v2746, 2
      %v3358 = vsel %vm1002, %v3355, %v3357
      %v3359 = vrot.slane %v2747, 2
      %v3360 = vrot.slane %v2748, 2
      %v3361 = vsel %vm1002, %v3359, %v3360
      %v3362 = vrot.slane %v2749, 2
      %v3363 = vsel %vm1002, %v3360, %v3362
      %v3364 = vrot.slane %v2750, 2
      %v3365 = vrot.slane %v2751, 2
      %v3366 = vsel %vm1002, %v3364, %v3365
      %v3367 = vrot.slane %v2752, 2
      %v3368 = vsel %vm1002, %v3365, %v3367
      %v3369 = vrot.slane %v2753, 2
      %v3370 = vrot.slane %v2754, 2
      %v3371 = vsel %vm1002, %v3369, %v3370
      %v3372 = vrot.slane %v2755, 2
      %v3373 = vsel %vm1002, %v3370, %v3372
      %v3374 = vrot.slane %v2756, 2
      %v3375 = vrot.slane %v2757, 2
      %v3376 = vsel %vm1002, %v3374, %v3375
      %v3377 = vrot.slane %v2758, 2
      %v3378 = vsel %vm1002, %v3375, %v3377
      %v3379 = vrot.slane %v2759, 2
      %v3380 = vrot.slane %v2760, 2
      %v3381 = vsel %vm1002, %v3379, %v3380
      %v3382 = vrot.slane %v2761, 2
      %v3383 = vsel %vm1002, %v3380, %v3382
      %v3384 = vrot.slane %v2762, 2
      %v3385 = vrot.slane %v2763, 2
      %v3386 = vsel %vm1002, %v3384, %v3385
      %v3387 = vrot.slane %v2764, 2
      %v3388 = vsel %vm1002, %v3385, %v3387
      %v3389 = vrot.slane %v2765, 2
      %v3390 = vrot.slane %v2766, 2
      %v3391 = vsel %vm1002, %v3389, %v3390
      %v3392 = vrot.slane %v2767, 2
      %v3393 = vsel %vm1002, %v3390, %v3392
      %v3394 = vrot.slane %v2768, 2
      %v3395 = vrot.slane %v2769, 2
      %v3396 = vsel %vm1002, %v3394, %v3395
      %v3397 = vrot.slane %v2770, 2
      %v3398 = vsel %vm1002, %v3395, %v3397
      %v3399 = vrot.slane %v2771, 2
      %v3400 = vrot.slane %v2772, 2
      %v3401 = vsel %vm1002, %v3399, %v3400
      %v3402 = vrot.slane %v2773, 2
      %v3403 = vsel %vm1002, %v3400, %v3402
      %v3404 = vrot.slane %v2774, 2
      %v3405 = vrot.slane %v2775, 2
      %v3406 = vsel %vm1002, %v3404, %v3405
      %v3407 = vrot.slane %v2776, 2
      %v3408 = vsel %vm1002, %v3405, %v3407
      %v3441 = vpack.c.bf16 %v3333, %v3331
      %v3442 = vpack.c.bf16 %v3338, %v3336
      %v3443 = vpack.c.bf16 %v3343, %v3341
      %v3444 = vpack.c.bf16 %v3348, %v3346
      %v3445 = vpack.c.bf16 %v3353, %v3351
      %v3446 = vpack.c.bf16 %v3358, %v3356
      %v3447 = vpack.c.bf16 %v3363, %v3361
      %v3448 = vpack.c.bf16 %v3368, %v3366
      %v3449 = vpack.c.bf16 %v3373, %v3371
      %v3450 = vpack.c.bf16 %v3378, %v3376
      %v3451 = vpack.c.bf16 %v3383, %v3381
      %v3452 = vpack.c.bf16 %v3388, %v3386
      %v3453 = vpack.c.bf16 %v3393, %v3391
      %v3454 = vpack.c.bf16 %v3398, %v3396
      %v3455 = vpack.c.bf16 %v3403, %v3401
      %v3456 = vpack.c.bf16 %v3408, %v3406
      %v3473 = vunpack.c.l.b16 %v3441
      %v3474 = vunpack.c.h.b16 %v3441
      %v3475 = vunpack.c.l.b16 %v3442
      %v3476 = vunpack.c.h.b16 %v3442
      %v3477 = vunpack.c.l.b16 %v3443
      %v3478 = vunpack.c.h.b16 %v3443
      %v3479 = vunpack.c.l.b16 %v3444
      %v3480 = vunpack.c.h.b16 %v3444
      %v3481 = vunpack.c.l.b16 %v3445
      %v3482 = vunpack.c.h.b16 %v3445
      %v3483 = vunpack.c.l.b16 %v3446
      %v3484 = vunpack.c.h.b16 %v3446
      %v3485 = vunpack.c.l.b16 %v3447
      %v3486 = vunpack.c.h.b16 %v3447
      %v3487 = vunpack.c.l.b16 %v3448
      %v3488 = vunpack.c.h.b16 %v3448
      %v3489 = vunpack.c.l.b16 %v3449
      %v3490 = vunpack.c.h.b16 %v3449
      %v3491 = vunpack.c.l.b16 %v3450
      %v3492 = vunpack.c.h.b16 %v3450
      %v3493 = vunpack.c.l.b16 %v3451
      %v3494 = vunpack.c.h.b16 %v3451
      %v3495 = vunpack.c.l.b16 %v3452
      %v3496 = vunpack.c.h.b16 %v3452
      %v3497 = vunpack.c.l.b16 %v3453
      %v3498 = vunpack.c.h.b16 %v3453
      %v3499 = vunpack.c.l.b16 %v3454
      %v3500 = vunpack.c.h.b16 %v3454
      %v3501 = vunpack.c.l.b16 %v3455
      %v3502 = vunpack.c.h.b16 %v3455
      %v3503 = vunpack.c.l.b16 %v3456
      %v3504 = vunpack.c.h.b16 %v3456
      %v3505 = vpack.c.b16 %v3473, %v3473
      %v3506 = vpack.c.b16 %v3474, %v3474
      %v3507 = vpack.c.b16 %v3475, %v3475
      %v3508 = vpack.c.b16 %v3476, %v3476
      %v3509 = vpack.c.b16 %v3477, %v3477
      %v3510 = vpack.c.b16 %v3478, %v3478
      %v3511 = vpack.c.b16 %v3479, %v3479
      %v3512 = vpack.c.b16 %v3480, %v3480
      %v3513 = vpack.c.b16 %v3481, %v3481
      %v3514 = vpack.c.b16 %v3482, %v3482
      %v3515 = vpack.c.b16 %v3483, %v3483
      %v3516 = vpack.c.b16 %v3484, %v3484
      %v3517 = vpack.c.b16 %v3485, %v3485
      %v3518 = vpack.c.b16 %v3486, %v3486
      %v3519 = vpack.c.b16 %v3487, %v3487
      %v3520 = vpack.c.b16 %v3488, %v3488
      %v3521 = vpack.c.b16 %v3489, %v3489
      %v3522 = vpack.c.b16 %v3490, %v3490
      %v3523 = vpack.c.b16 %v3491, %v3491
      %v3524 = vpack.c.b16 %v3492, %v3492
      %v3525 = vpack.c.b16 %v3493, %v3493
      %v3526 = vpack.c.b16 %v3494, %v3494
      %v3527 = vpack.c.b16 %v3495, %v3495
      %v3528 = vpack.c.b16 %v3496, %v3496
      %v3529 = vpack.c.b16 %v3497, %v3497
      %v3530 = vpack.c.b16 %v3498, %v3498
      %v3531 = vpack.c.b16 %v3499, %v3499
      %v3532 = vpack.c.b16 %v3500, %v3500
      %v3533 = vpack.c.b16 %v3501, %v3501
      %v3534 = vpack.c.b16 %v3502, %v3502
      %v3535 = vpack.c.b16 %v3503, %v3503
      %v3536 = vpack.c.b16 %v3504, %v3504
      %3537 = vrot.lane.b32.xlu0 %v3505, 16
      %v3538 = vpop.permute.xlu0 %3537
      %3539 = vrot.lane.b32.xlu0 %v3506, 16
      %v3540 = vpop.permute.xlu0 %3539
      %3541 = vrot.lane.b32.xlu0 %v3507, 16
      %v3542 = vpop.permute.xlu0 %3541
      %3543 = vrot.lane.b32.xlu0 %v3508, 16
      %v3544 = vpop.permute.xlu0 %3543
      %3545 = vrot.lane.b32.xlu0 %v3509, 16
      %v3546 = vpop.permute.xlu0 %3545
      %3547 = vrot.lane.b32.xlu0 %v3510, 16
      %v3548 = vpop.permute.xlu0 %3547
      %3549 = vrot.lane.b32.xlu0 %v3511, 16
      %v3550 = vpop.permute.xlu0 %3549
      %3551 = vrot.lane.b32.xlu0 %v3512, 16
      %v3552 = vpop.permute.xlu0 %3551
      %3553 = vrot.lane.b32.xlu0 %v3513, 16
      %v3554 = vpop.permute.xlu0 %3553
      %3555 = vrot.lane.b32.xlu0 %v3514, 16
      %v3556 = vpop.permute.xlu0 %3555
      %3557 = vrot.lane.b32.xlu0 %v3515, 16
      %v3558 = vpop.permute.xlu0 %3557
      %3559 = vrot.lane.b32.xlu0 %v3516, 16
      %v3560 = vpop.permute.xlu0 %3559
      %3561 = vrot.lane.b32.xlu0 %v3517, 16
      %v3562 = vpop.permute.xlu0 %3561
      %3563 = vrot.lane.b32.xlu0 %v3518, 16
      %v3564 = vpop.permute.xlu0 %3563
      %3565 = vrot.lane.b32.xlu0 %v3519, 16
      %v3566 = vpop.permute.xlu0 %3565
      %3567 = vrot.lane.b32.xlu0 %v3520, 16
      %v3568 = vpop.permute.xlu0 %3567
      %3569 = vrot.lane.b32.xlu0 %v3521, 16
      %v3570 = vpop.permute.xlu0 %3569
      %3571 = vrot.lane.b32.xlu0 %v3522, 16
      %v3572 = vpop.permute.xlu0 %3571
      %3573 = vrot.lane.b32.xlu0 %v3523, 16
      %v3574 = vpop.permute.xlu0 %3573
      %3575 = vrot.lane.b32.xlu0 %v3524, 16
      %v3576 = vpop.permute.xlu0 %3575
      %3577 = vrot.lane.b32.xlu0 %v3525, 16
      %v3578 = vpop.permute.xlu0 %3577
      %3579 = vrot.lane.b32.xlu0 %v3526, 16
      %v3580 = vpop.permute.xlu0 %3579
      %3581 = vrot.lane.b32.xlu0 %v3527, 16
      %v3582 = vpop.permute.xlu0 %3581
      %3583 = vrot.lane.b32.xlu0 %v3528, 16
      %v3584 = vpop.permute.xlu0 %3583
      %3585 = vrot.lane.b32.xlu0 %v3529, 16
      %v3586 = vpop.permute.xlu0 %3585
      %3587 = vrot.lane.b32.xlu0 %v3530, 16
      %v3588 = vpop.permute.xlu0 %3587
      %3589 = vrot.lane.b32.xlu0 %v3531, 16
      %v3590 = vpop.permute.xlu0 %3589
      %3591 = vrot.lane.b32.xlu0 %v3532, 16
      %v3592 = vpop.permute.xlu0 %3591
      %3593 = vrot.lane.b32.xlu0 %v3533, 16
      %v3594 = vpop.permute.xlu0 %3593
      %3595 = vrot.lane.b32.xlu0 %v3534, 16
      %v3596 = vpop.permute.xlu0 %3595
      %3597 = vrot.lane.b32.xlu0 %v3535, 16
      %v3598 = vpop.permute.xlu0 %3597
      %3599 = vrot.lane.b32.xlu0 %v3536, 16
      %v3600 = vpop.permute.xlu0 %3599
      %vm3633 = vcmask 191616
      %3634 = vst.msk [vmem:[#allocation5] sm:$0xf] %vm3633, %v3538
      %3635 = vst.msk [vmem:[#allocation5 + $0x4] sm:$0xf] %vm3633, %v3540
      %3636 = vst.msk [vmem:[#allocation5 + $0x8] sm:$0xf] %vm3633, %v3542
      %3637 = vst.msk [vmem:[#allocation5 + $0xc] sm:$0xf] %vm3633, %v3544
      %3638 = vst.msk [vmem:[#allocation5 + $0x10] sm:$0xf] %vm3633, %v3546
      %3639 = vst.msk [vmem:[#allocation5 + $0x14] sm:$0xf] %vm3633, %v3548
      %3640 = vst.msk [vmem:[#allocation5 + $0x18] sm:$0xf] %vm3633, %v3550
      %3641 = vst.msk [vmem:[#allocation5 + $0x1c] sm:$0xf] %vm3633, %v3552
      %3642 = vst.msk [vmem:[#allocation5 + $0x20] sm:$0xf] %vm3633, %v3554
      %3643 = vst.msk [vmem:[#allocation5 + $0x24] sm:$0xf] %vm3633, %v3556
      %3644 = vst.msk [vmem:[#allocation5 + $0x28] sm:$0xf] %vm3633, %v3558
      %3645 = vst.msk [vmem:[#allocation5 + $0x2c] sm:$0xf] %vm3633, %v3560
      %3646 = vst.msk [vmem:[#allocation5 + $0x30] sm:$0xf] %vm3633, %v3562
      %3647 = vst.msk [vmem:[#allocation5 + $0x34] sm:$0xf] %vm3633, %v3564
      %3648 = vst.msk [vmem:[#allocation5 + $0x38] sm:$0xf] %vm3633, %v3566
      %3649 = vst.msk [vmem:[#allocation5 + $0x3c] sm:$0xf] %vm3633, %v3568
      %3650 = vst.msk [vmem:[#allocation5 + $0x40] sm:$0xf] %vm3633, %v3570
      %3651 = vst.msk [vmem:[#allocation5 + $0x44] sm:$0xf] %vm3633, %v3572
      %3652 = vst.msk [vmem:[#allocation5 + $0x48] sm:$0xf] %vm3633, %v3574
      %3653 = vst.msk [vmem:[#allocation5 + $0x4c] sm:$0xf] %vm3633, %v3576
      %3654 = vst.msk [vmem:[#allocation5 + $0x50] sm:$0xf] %vm3633, %v3578
      %3655 = vst.msk [vmem:[#allocation5 + $0x54] sm:$0xf] %vm3633, %v3580
      %3656 = vst.msk [vmem:[#allocation5 + $0x58] sm:$0xf] %vm3633, %v3582
      %3657 = vst.msk [vmem:[#allocation5 + $0x5c] sm:$0xf] %vm3633, %v3584
      %3658 = vst.msk [vmem:[#allocation5 + $0x60] sm:$0xf] %vm3633, %v3586
      %3659 = vst.msk [vmem:[#allocation5 + $0x64] sm:$0xf] %vm3633, %v3588
      %3660 = vst.msk [vmem:[#allocation5 + $0x68] sm:$0xf] %vm3633, %v3590
      %3661 = vst.msk [vmem:[#allocation5 + $0x6c] sm:$0xf] %vm3633, %v3592
      %3662 = vst.msk [vmem:[#allocation5 + $0x70] sm:$0xf] %vm3633, %v3594
      %3663 = vst.msk [vmem:[#allocation5 + $0x74] sm:$0xf] %vm3633, %v3596
      %3664 = vst.msk [vmem:[#allocation5 + $0x78] sm:$0xf] %vm3633, %v3598
      %3665 = vst.msk [vmem:[#allocation5 + $0x7c] sm:$0xf] %vm3633, %v3600
      %v3666 = vpack.c.bf16 %v2778, %v2777
      %v3668 = vunpack.c.l.b16 %v3666
      %v3669 = vunpack.c.h.b16 %v3666
      %v3670 = vpack.c.b16 %v3668, %v3668
      %v3671 = vpack.c.b16 %v3669, %v3669
      %3672 = vrot.lane.b32.xlu0 %v2849, 24
      %v3673 = vpop.permute.xlu0 %3672
      %3674 = vrot.lane.b32.xlu0 %v2850, 24
      %v3675 = vpop.permute.xlu0 %3674
      %3676 = vrot.lane.b32.xlu0 %v2851, 24
      %v3677 = vpop.permute.xlu0 %3676
      %3678 = vrot.lane.b32.xlu0 %v2852, 24
      %v3679 = vpop.permute.xlu0 %3678
      %3680 = vrot.lane.b32.xlu0 %v2853, 24
      %v3681 = vpop.permute.xlu0 %3680
      %3682 = vrot.lane.b32.xlu0 %v2854, 24
      %v3683 = vpop.permute.xlu0 %3682
      %3684 = vrot.lane.b32.xlu0 %v2855, 24
      %v3685 = vpop.permute.xlu0 %3684
      %3686 = vrot.lane.b32.xlu0 %v2856, 24
      %v3687 = vpop.permute.xlu0 %3686
      %3688 = vrot.lane.b32.xlu0 %v2857, 24
      %v3689 = vpop.permute.xlu0 %3688
      %3690 = vrot.lane.b32.xlu0 %v2858, 24
      %v3691 = vpop.permute.xlu0 %3690
      %3692 = vrot.lane.b32.xlu0 %v2859, 24
      %v3693 = vpop.permute.xlu0 %3692
      %3694 = vrot.lane.b32.xlu0 %v2860, 24
      %v3695 = vpop.permute.xlu0 %3694
      %3696 = vrot.lane.b32.xlu0 %v2861, 24
      %v3697 = vpop.permute.xlu0 %3696
      %3698 = vrot.lane.b32.xlu0 %v2862, 24
      %v3699 = vpop.permute.xlu0 %3698
      %3700 = vrot.lane.b32.xlu0 %v2863, 24
      %v3701 = vpop.permute.xlu0 %3700
      %3702 = vrot.lane.b32.xlu0 %v2864, 24
      %v3703 = vpop.permute.xlu0 %3702
      %3704 = vrot.lane.b32.xlu0 %v2865, 24
      %v3705 = vpop.permute.xlu0 %3704
      %3706 = vrot.lane.b32.xlu0 %v2866, 24
      %v3707 = vpop.permute.xlu0 %3706
      %3708 = vrot.lane.b32.xlu0 %v2867, 24
      %v3709 = vpop.permute.xlu0 %3708
      %3710 = vrot.lane.b32.xlu0 %v2868, 24
      %v3711 = vpop.permute.xlu0 %3710
      %3712 = vrot.lane.b32.xlu0 %v2869, 24
      %v3713 = vpop.permute.xlu0 %3712
      %3714 = vrot.lane.b32.xlu0 %v2870, 24
      %v3715 = vpop.permute.xlu0 %3714
      %3716 = vrot.lane.b32.xlu0 %v2871, 24
      %v3717 = vpop.permute.xlu0 %3716
      %3718 = vrot.lane.b32.xlu0 %v2872, 24
      %v3719 = vpop.permute.xlu0 %3718
      %3720 = vrot.lane.b32.xlu0 %v2873, 24
      %v3721 = vpop.permute.xlu0 %3720
      %3722 = vrot.lane.b32.xlu0 %v2874, 24
      %v3723 = vpop.permute.xlu0 %3722
      %3724 = vrot.lane.b32.xlu0 %v2875, 24
      %v3725 = vpop.permute.xlu0 %3724
      %3726 = vrot.lane.b32.xlu0 %v2876, 24
      %v3727 = vpop.permute.xlu0 %3726
      %3728 = vrot.lane.b32.xlu0 %v2877, 24
      %v3729 = vpop.permute.xlu0 %3728
      %3730 = vrot.lane.b32.xlu0 %v2878, 24
      %v3731 = vpop.permute.xlu0 %3730
      %3732 = vrot.lane.b32.xlu0 %v3670, 24
      %v3733 = vpop.permute.xlu0 %3732
      %3734 = vrot.lane.b32.xlu0 %v3671, 24
      %v3735 = vpop.permute.xlu0 %3734
      %vm3768 = vcmask 257216
      %3769 = vst.msk [vmem:[#allocation5] sm:$0xf] %vm3768, %v3673
      %3770 = vst.msk [vmem:[#allocation5 + $0x4] sm:$0xf] %vm3768, %v3675
      %3771 = vst.msk [vmem:[#allocation5 + $0x8] sm:$0xf] %vm3768, %v3677
      %3772 = vst.msk [vmem:[#allocation5 + $0xc] sm:$0xf] %vm3768, %v3679
      %3773 = vst.msk [vmem:[#allocation5 + $0x10] sm:$0xf] %vm3768, %v3681
      %3774 = vst.msk [vmem:[#allocation5 + $0x14] sm:$0xf] %vm3768, %v3683
      %3775 = vst.msk [vmem:[#allocation5 + $0x18] sm:$0xf] %vm3768, %v3685
      %3776 = vst.msk [vmem:[#allocation5 + $0x1c] sm:$0xf] %vm3768, %v3687
      %3777 = vst.msk [vmem:[#allocation5 + $0x20] sm:$0xf] %vm3768, %v3689
      %3778 = vst.msk [vmem:[#allocation5 + $0x24] sm:$0xf] %vm3768, %v3691
      %3779 = vst.msk [vmem:[#allocation5 + $0x28] sm:$0xf] %vm3768, %v3693
      %3780 = vst.msk [vmem:[#allocation5 + $0x2c] sm:$0xf] %vm3768, %v3695
      %3781 = vst.msk [vmem:[#allocation5 + $0x30] sm:$0xf] %vm3768, %v3697
      %3782 = vst.msk [vmem:[#allocation5 + $0x34] sm:$0xf] %vm3768, %v3699
      %3783 = vst.msk [vmem:[#allocation5 + $0x38] sm:$0xf] %vm3768, %v3701
      %3784 = vst.msk [vmem:[#allocation5 + $0x3c] sm:$0xf] %vm3768, %v3703
      %3785 = vst.msk [vmem:[#allocation5 + $0x40] sm:$0xf] %vm3768, %v3705
      %3786 = vst.msk [vmem:[#allocation5 + $0x44] sm:$0xf] %vm3768, %v3707
      %3787 = vst.msk [vmem:[#allocation5 + $0x48] sm:$0xf] %vm3768, %v3709
      %3788 = vst.msk [vmem:[#allocation5 + $0x4c] sm:$0xf] %vm3768, %v3711
      %3789 = vst.msk [vmem:[#allocation5 + $0x50] sm:$0xf] %vm3768, %v3713
      %3790 = vst.msk [vmem:[#allocation5 + $0x54] sm:$0xf] %vm3768, %v3715
      %3791 = vst.msk [vmem:[#allocation5 + $0x58] sm:$0xf] %vm3768, %v3717
      %3792 = vst.msk [vmem:[#allocation5 + $0x5c] sm:$0xf] %vm3768, %v3719
      %3793 = vst.msk [vmem:[#allocation5 + $0x60] sm:$0xf] %vm3768, %v3721
      %3794 = vst.msk [vmem:[#allocation5 + $0x64] sm:$0xf] %vm3768, %v3723
      %3795 = vst.msk [vmem:[#allocation5 + $0x68] sm:$0xf] %vm3768, %v3725
      %3796 = vst.msk [vmem:[#allocation5 + $0x6c] sm:$0xf] %vm3768, %v3727
      %3797 = vst.msk [vmem:[#allocation5 + $0x70] sm:$0xf] %vm3768, %v3729
      %3798 = vst.msk [vmem:[#allocation5 + $0x74] sm:$0xf] %vm3768, %v3731
      %3799 = vst.msk [vmem:[#allocation5 + $0x78] sm:$0xf] %vm3768, %v3733
      %3800 = vst.msk [vmem:[#allocation5 + $0x7c] sm:$0xf] %vm3768, %v3735
      %v3804 = vrot.slane %v2777, 1
      %v3805 = vrot.slane %v2778, 1
      %v3806 = vsel %vm664, %v3804, %v3805
      %v3807 = vrot.slane %v2779, 1
      %v3808 = vsel %vm664, %v3805, %v3807
      %v3811 = vpack.c.bf16 %v3808, %v3806
      %v3813 = vunpack.c.l.b16 %v3811
      %v3814 = vunpack.c.h.b16 %v3811
      %v3815 = vpack.c.b16 %v3813, %v3813
      %v3816 = vpack.c.b16 %v3814, %v3814
      %3817 = vrot.lane.b32.xlu0 %v3170, 32
      %v3818 = vpop.permute.xlu0 %3817
      %3819 = vrot.lane.b32.xlu0 %v3171, 32
      %v3820 = vpop.permute.xlu0 %3819
      %3821 = vrot.lane.b32.xlu0 %v3172, 32
      %v3822 = vpop.permute.xlu0 %3821
      %3823 = vrot.lane.b32.xlu0 %v3173, 32
      %v3824 = vpop.permute.xlu0 %3823
      %3825 = vrot.lane.b32.xlu0 %v3174, 32
      %v3826 = vpop.permute.xlu0 %3825
      %3827 = vrot.lane.b32.xlu0 %v3175, 32
      %v3828 = vpop.permute.xlu0 %3827
      %3829 = vrot.lane.b32.xlu0 %v3176, 32
      %v3830 = vpop.permute.xlu0 %3829
      %3831 = vrot.lane.b32.xlu0 %v3177, 32
      %v3832 = vpop.permute.xlu0 %3831
      %3833 = vrot.lane.b32.xlu0 %v3178, 32
      %v3834 = vpop.permute.xlu0 %3833
      %3835 = vrot.lane.b32.xlu0 %v3179, 32
      %v3836 = vpop.permute.xlu0 %3835
      %3837 = vrot.lane.b32.xlu0 %v3180, 32
      %v3838 = vpop.permute.xlu0 %3837
      %3839 = vrot.lane.b32.xlu0 %v3181, 32
      %v3840 = vpop.permute.xlu0 %3839
      %3841 = vrot.lane.b32.xlu0 %v3182, 32
      %v3842 = vpop.permute.xlu0 %3841
      %3843 = vrot.lane.b32.xlu0 %v3183, 32
      %v3844 = vpop.permute.xlu0 %3843
      %3845 = vrot.lane.b32.xlu0 %v3184, 32
      %v3846 = vpop.permute.xlu0 %3845
      %3847 = vrot.lane.b32.xlu0 %v3185, 32
      %v3848 = vpop.permute.xlu0 %3847
      %3849 = vrot.lane.b32.xlu0 %v3186, 32
      %v3850 = vpop.permute.xlu0 %3849
      %3851 = vrot.lane.b32.xlu0 %v3187, 32
      %v3852 = vpop.permute.xlu0 %3851
      %3853 = vrot.lane.b32.xlu0 %v3188, 32
      %v3854 = vpop.permute.xlu0 %3853
      %3855 = vrot.lane.b32.xlu0 %v3189, 32
      %v3856 = vpop.permute.xlu0 %3855
      %3857 = vrot.lane.b32.xlu0 %v3190, 32
      %v3858 = vpop.permute.xlu0 %3857
      %3859 = vrot.lane.b32.xlu0 %v3191, 32
      %v3860 = vpop.permute.xlu0 %3859
      %3861 = vrot.lane.b32.xlu0 %v3192, 32
      %v3862 = vpop.permute.xlu0 %3861
      %3863 = vrot.lane.b32.xlu0 %v3193, 32
      %v3864 = vpop.permute.xlu0 %3863
      %3865 = vrot.lane.b32.xlu0 %v3194, 32
      %v3866 = vpop.permute.xlu0 %3865
      %3867 = vrot.lane.b32.xlu0 %v3195, 32
      %v3868 = vpop.permute.xlu0 %3867
      %3869 = vrot.lane.b32.xlu0 %v3196, 32
      %v3870 = vpop.permute.xlu0 %3869
      %3871 = vrot.lane.b32.xlu0 %v3197, 32
      %v3872 = vpop.permute.xlu0 %3871
      %3873 = vrot.lane.b32.xlu0 %v3198, 32
      %v3874 = vpop.permute.xlu0 %3873
      %3875 = vrot.lane.b32.xlu0 %v3199, 32
      %v3876 = vpop.permute.xlu0 %3875
      %3877 = vrot.lane.b32.xlu0 %v3815, 32
      %v3878 = vpop.permute.xlu0 %3877
      %3879 = vrot.lane.b32.xlu0 %v3816, 32
      %v3880 = vpop.permute.xlu0 %3879
      %vm3913 = vcmask 322816
      %3914 = vst.msk [vmem:[#allocation5] sm:$0xf] %vm3913, %v3818
      %3915 = vst.msk [vmem:[#allocation5 + $0x4] sm:$0xf] %vm3913, %v3820
      %3916 = vst.msk [vmem:[#allocation5 + $0x8] sm:$0xf] %vm3913, %v3822
      %3917 = vst.msk [vmem:[#allocation5 + $0xc] sm:$0xf] %vm3913, %v3824
      %3918 = vst.msk [vmem:[#allocation5 + $0x10] sm:$0xf] %vm3913, %v3826
      %3919 = vst.msk [vmem:[#allocation5 + $0x14] sm:$0xf] %vm3913, %v3828
      %3920 = vst.msk [vmem:[#allocation5 + $0x18] sm:$0xf] %vm3913, %v3830
      %3921 = vst.msk [vmem:[#allocation5 + $0x1c] sm:$0xf] %vm3913, %v3832
      %3922 = vst.msk [vmem:[#allocation5 + $0x20] sm:$0xf] %vm3913, %v3834
      %3923 = vst.msk [vmem:[#allocation5 + $0x24] sm:$0xf] %vm3913, %v3836
      %3924 = vst.msk [vmem:[#allocation5 + $0x28] sm:$0xf] %vm3913, %v3838
      %3925 = vst.msk [vmem:[#allocation5 + $0x2c] sm:$0xf] %vm3913, %v3840
      %3926 = vst.msk [vmem:[#allocation5 + $0x30] sm:$0xf] %vm3913, %v3842
      %3927 = vst.msk [vmem:[#allocation5 + $0x34] sm:$0xf] %vm3913, %v3844
      %3928 = vst.msk [vmem:[#allocation5 + $0x38] sm:$0xf] %vm3913, %v3846
      %3929 = vst.msk [vmem:[#allocation5 + $0x3c] sm:$0xf] %vm3913, %v3848
      %3930 = vst.msk [vmem:[#allocation5 + $0x40] sm:$0xf] %vm3913, %v3850
      %3931 = vst.msk [vmem:[#allocation5 + $0x44] sm:$0xf] %vm3913, %v3852
      %3932 = vst.msk [vmem:[#allocation5 + $0x48] sm:$0xf] %vm3913, %v3854
      %3933 = vst.msk [vmem:[#allocation5 + $0x4c] sm:$0xf] %vm3913, %v3856
      %3934 = vst.msk [vmem:[#allocation5 + $0x50] sm:$0xf] %vm3913, %v3858
      %3935 = vst.msk [vmem:[#allocation5 + $0x54] sm:$0xf] %vm3913, %v3860
      %3936 = vst.msk [vmem:[#allocation5 + $0x58] sm:$0xf] %vm3913, %v3862
      %3937 = vst.msk [vmem:[#allocation5 + $0x5c] sm:$0xf] %vm3913, %v3864
      %3938 = vst.msk [vmem:[#allocation5 + $0x60] sm:$0xf] %vm3913, %v3866
      %3939 = vst.msk [vmem:[#allocation5 + $0x64] sm:$0xf] %vm3913, %v3868
      %3940 = vst.msk [vmem:[#allocation5 + $0x68] sm:$0xf] %vm3913, %v3870
      %3941 = vst.msk [vmem:[#allocation5 + $0x6c] sm:$0xf] %vm3913, %v3872
      %3942 = vst.msk [vmem:[#allocation5 + $0x70] sm:$0xf] %vm3913, %v3874
      %3943 = vst.msk [vmem:[#allocation5 + $0x74] sm:$0xf] %vm3913, %v3876
      %3944 = vst.msk [vmem:[#allocation5 + $0x78] sm:$0xf] %vm3913, %v3878
      %3945 = vst.msk [vmem:[#allocation5 + $0x7c] sm:$0xf] %vm3913, %v3880
      %v3946 = vrot.slane %v2777, 2
      %v3947 = vrot.slane %v2778, 2
      %v3948 = vsel %vm1002, %v3946, %v3947
      %v3949 = vrot.slane %v2779, 2
      %v3950 = vsel %vm1002, %v3947, %v3949
      %v3953 = vpack.c.bf16 %v3950, %v3948
      %v3955 = vunpack.c.l.b16 %v3953
      %v3956 = vunpack.c.h.b16 %v3953
      %v3957 = vpack.c.b16 %v3955, %v3955
      %v3958 = vpack.c.b16 %v3956, %v3956
      %3959 = vrot.lane.b32.xlu0 %v3507, 40
      %v3960 = vpop.permute.xlu0 %3959
      %3961 = vrot.lane.b32.xlu0 %v3508, 40
      %v3962 = vpop.permute.xlu0 %3961
      %3963 = vrot.lane.b32.xlu0 %v3509, 40
      %v3964 = vpop.permute.xlu0 %3963
      %3965 = vrot.lane.b32.xlu0 %v3510, 40
      %v3966 = vpop.permute.xlu0 %3965
      %3967 = vrot.lane.b32.xlu0 %v3511, 40
      %v3968 = vpop.permute.xlu0 %3967
      %3969 = vrot.lane.b32.xlu0 %v3512, 40
      %v3970 = vpop.permute.xlu0 %3969
      %3971 = vrot.lane.b32.xlu0 %v3513, 40
      %v3972 = vpop.permute.xlu0 %3971
      %3973 = vrot.lane.b32.xlu0 %v3514, 40
      %v3974 = vpop.permute.xlu0 %3973
      %3975 = vrot.lane.b32.xlu0 %v3515, 40
      %v3976 = vpop.permute.xlu0 %3975
      %3977 = vrot.lane.b32.xlu0 %v3516, 40
      %v3978 = vpop.permute.xlu0 %3977
      %3979 = vrot.lane.b32.xlu0 %v3517, 40
      %v3980 = vpop.permute.xlu0 %3979
      %3981 = vrot.lane.b32.xlu0 %v3518, 40
      %v3982 = vpop.permute.xlu0 %3981
      %3983 = vrot.lane.b32.xlu0 %v3519, 40
      %v3984 = vpop.permute.xlu0 %3983
      %3985 = vrot.lane.b32.xlu0 %v3520, 40
      %v3986 = vpop.permute.xlu0 %3985
      %3987 = vrot.lane.b32.xlu0 %v3521, 40
      %v3988 = vpop.permute.xlu0 %3987
      %3989 = vrot.lane.b32.xlu0 %v3522, 40
      %v3990 = vpop.permute.xlu0 %3989
      %3991 = vrot.lane.b32.xlu0 %v3523, 40
      %v3992 = vpop.permute.xlu0 %3991
      %3993 = vrot.lane.b32.xlu0 %v3524, 40
      %v3994 = vpop.permute.xlu0 %3993
      %3995 = vrot.lane.b32.xlu0 %v3525, 40
      %v3996 = vpop.permute.xlu0 %3995
      %3997 = vrot.lane.b32.xlu0 %v3526, 40
      %v3998 = vpop.permute.xlu0 %3997
      %3999 = vrot.lane.b32.xlu0 %v3527, 40
      %v4000 = vpop.permute.xlu0 %3999
      %4001 = vrot.lane.b32.xlu0 %v3528, 40
      %v4002 = vpop.permute.xlu0 %4001
      %4003 = vrot.lane.b32.xlu0 %v3529, 40
      %v4004 = vpop.permute.xlu0 %4003
      %4005 = vrot.lane.b32.xlu0 %v3530, 40
      %v4006 = vpop.permute.xlu0 %4005
      %4007 = vrot.lane.b32.xlu0 %v3531, 40
      %v4008 = vpop.permute.xlu0 %4007
      %4009 = vrot.lane.b32.xlu0 %v3532, 40
      %v4010 = vpop.permute.xlu0 %4009
      %4011 = vrot.lane.b32.xlu0 %v3533, 40
      %v4012 = vpop.permute.xlu0 %4011
      %4013 = vrot.lane.b32.xlu0 %v3534, 40
      %v4014 = vpop.permute.xlu0 %4013
      %4015 = vrot.lane.b32.xlu0 %v3535, 40
      %v4016 = vpop.permute.xlu0 %4015
      %4017 = vrot.lane.b32.xlu0 %v3536, 40
      %v4018 = vpop.permute.xlu0 %4017
      %4019 = vrot.lane.b32.xlu0 %v3957, 40
      %v4020 = vpop.permute.xlu0 %4019
      %4021 = vrot.lane.b32.xlu0 %v3958, 40
      %v4022 = vpop.permute.xlu0 %4021
      %vm4055 = vcmask 388416
      %4056 = vst.msk [vmem:[#allocation5] sm:$0xf] %vm4055, %v3960
      %4057 = vst.msk [vmem:[#allocation5 + $0x4] sm:$0xf] %vm4055, %v3962
      %4058 = vst.msk [vmem:[#allocation5 + $0x8] sm:$0xf] %vm4055, %v3964
      %4059 = vst.msk [vmem:[#allocation5 + $0xc] sm:$0xf] %vm4055, %v3966
      %4060 = vst.msk [vmem:[#allocation5 + $0x10] sm:$0xf] %vm4055, %v3968
      %4061 = vst.msk [vmem:[#allocation5 + $0x14] sm:$0xf] %vm4055, %v3970
      %4062 = vst.msk [vmem:[#allocation5 + $0x18] sm:$0xf] %vm4055, %v3972
      %4063 = vst.msk [vmem:[#allocation5 + $0x1c] sm:$0xf] %vm4055, %v3974
      %4064 = vst.msk [vmem:[#allocation5 + $0x20] sm:$0xf] %vm4055, %v3976
      %4065 = vst.msk [vmem:[#allocation5 + $0x24] sm:$0xf] %vm4055, %v3978
      %4066 = vst.msk [vmem:[#allocation5 + $0x28] sm:$0xf] %vm4055, %v3980
      %4067 = vst.msk [vmem:[#allocation5 + $0x2c] sm:$0xf] %vm4055, %v3982
      %4068 = vst.msk [vmem:[#allocation5 + $0x30] sm:$0xf] %vm4055, %v3984
      %4069 = vst.msk [vmem:[#allocation5 + $0x34] sm:$0xf] %vm4055, %v3986
      %4070 = vst.msk [vmem:[#allocation5 + $0x38] sm:$0xf] %vm4055, %v3988
      %4071 = vst.msk [vmem:[#allocation5 + $0x3c] sm:$0xf] %vm4055, %v3990
      %4072 = vst.msk [vmem:[#allocation5 + $0x40] sm:$0xf] %vm4055, %v3992
      %4073 = vst.msk [vmem:[#allocation5 + $0x44] sm:$0xf] %vm4055, %v3994
      %4074 = vst.msk [vmem:[#allocation5 + $0x48] sm:$0xf] %vm4055, %v3996
      %4075 = vst.msk [vmem:[#allocation5 + $0x4c] sm:$0xf] %vm4055, %v3998
      %4076 = vst.msk [vmem:[#allocation5 + $0x50] sm:$0xf] %vm4055, %v4000
      %4077 = vst.msk [vmem:[#allocation5 + $0x54] sm:$0xf] %vm4055, %v4002
      %4078 = vst.msk [vmem:[#allocation5 + $0x58] sm:$0xf] %vm4055, %v4004
      %4079 = vst.msk [vmem:[#allocation5 + $0x5c] sm:$0xf] %vm4055, %v4006
      %4080 = vst.msk [vmem:[#allocation5 + $0x60] sm:$0xf] %vm4055, %v4008
      %4081 = vst.msk [vmem:[#allocation5 + $0x64] sm:$0xf] %vm4055, %v4010
      %4082 = vst.msk [vmem:[#allocation5 + $0x68] sm:$0xf] %vm4055, %v4012
      %4083 = vst.msk [vmem:[#allocation5 + $0x6c] sm:$0xf] %vm4055, %v4014
      %4084 = vst.msk [vmem:[#allocation5 + $0x70] sm:$0xf] %vm4055, %v4016
      %4085 = vst.msk [vmem:[#allocation5 + $0x74] sm:$0xf] %vm4055, %v4018
      %4086 = vst.msk [vmem:[#allocation5 + $0x78] sm:$0xf] %vm4055, %v4020
      %4087 = vst.msk [vmem:[#allocation5 + $0x7c] sm:$0xf] %vm4055, %v4022
      %v4088 = vpack.c.bf16 %v2781, %v2780
      %v4090 = vunpack.c.l.b16 %v4088
      %v4091 = vunpack.c.h.b16 %v4088
      %v4092 = vpack.c.b16 %v4090, %v4090
      %v4093 = vpack.c.b16 %v4091, %v4091
      %4094 = vrot.lane.b32.xlu0 %v2851, 48
      %v4095 = vpop.permute.xlu0 %4094
      %4096 = vrot.lane.b32.xlu0 %v2852, 48
      %v4097 = vpop.permute.xlu0 %4096
      %4098 = vrot.lane.b32.xlu0 %v2853, 48
      %v4099 = vpop.permute.xlu0 %4098
      %4100 = vrot.lane.b32.xlu0 %v2854, 48
      %v4101 = vpop.permute.xlu0 %4100
      %4102 = vrot.lane.b32.xlu0 %v2855, 48
      %v4103 = vpop.permute.xlu0 %4102
      %4104 = vrot.lane.b32.xlu0 %v2856, 48
      %v4105 = vpop.permute.xlu0 %4104
      %4106 = vrot.lane.b32.xlu0 %v2857, 48
      %v4107 = vpop.permute.xlu0 %4106
      %4108 = vrot.lane.b32.xlu0 %v2858, 48
      %v4109 = vpop.permute.xlu0 %4108
      %4110 = vrot.lane.b32.xlu0 %v2859, 48
      %v4111 = vpop.permute.xlu0 %4110
      %4112 = vrot.lane.b32.xlu0 %v2860, 48
      %v4113 = vpop.permute.xlu0 %4112
      %4114 = vrot.lane.b32.xlu0 %v2861, 48
      %v4115 = vpop.permute.xlu0 %4114
      %4116 = vrot.lane.b32.xlu0 %v2862, 48
      %v4117 = vpop.permute.xlu0 %4116
      %4118 = vrot.lane.b32.xlu0 %v2863, 48
      %v4119 = vpop.permute.xlu0 %4118
      %4120 = vrot.lane.b32.xlu0 %v2864, 48
      %v4121 = vpop.permute.xlu0 %4120
      %4122 = vrot.lane.b32.xlu0 %v2865, 48
      %v4123 = vpop.permute.xlu0 %4122
      %4124 = vrot.lane.b32.xlu0 %v2866, 48
      %v4125 = vpop.permute.xlu0 %4124
      %4126 = vrot.lane.b32.xlu0 %v2867, 48
      %v4127 = vpop.permute.xlu0 %4126
      %4128 = vrot.lane.b32.xlu0 %v2868, 48
      %v4129 = vpop.permute.xlu0 %4128
      %4130 = vrot.lane.b32.xlu0 %v2869, 48
      %v4131 = vpop.permute.xlu0 %4130
      %4132 = vrot.lane.b32.xlu0 %v2870, 48
      %v4133 = vpop.permute.xlu0 %4132
      %4134 = vrot.lane.b32.xlu0 %v2871, 48
      %v4135 = vpop.permute.xlu0 %4134
      %4136 = vrot.lane.b32.xlu0 %v2872, 48
      %v4137 = vpop.permute.xlu0 %4136
      %4138 = vrot.lane.b32.xlu0 %v2873, 48
      %v4139 = vpop.permute.xlu0 %4138
      %4140 = vrot.lane.b32.xlu0 %v2874, 48
      %v4141 = vpop.permute.xlu0 %4140
      %4142 = vrot.lane.b32.xlu0 %v2875, 48
      %v4143 = vpop.permute.xlu0 %4142
      %4144 = vrot.lane.b32.xlu0 %v2876, 48
      %v4145 = vpop.permute.xlu0 %4144
      %4146 = vrot.lane.b32.xlu0 %v2877, 48
      %v4147 = vpop.permute.xlu0 %4146
      %4148 = vrot.lane.b32.xlu0 %v2878, 48
      %v4149 = vpop.permute.xlu0 %4148
      %4150 = vrot.lane.b32.xlu0 %v3670, 48
      %v4151 = vpop.permute.xlu0 %4150
      %4152 = vrot.lane.b32.xlu0 %v3671, 48
      %v4153 = vpop.permute.xlu0 %4152
      %4154 = vrot.lane.b32.xlu0 %v4092, 48
      %v4155 = vpop.permute.xlu0 %4154
      %4156 = vrot.lane.b32.xlu0 %v4093, 48
      %v4157 = vpop.permute.xlu0 %4156
      %vm4190 = vcmask 454016
      %4191 = vst.msk [vmem:[#allocation5] sm:$0xf] %vm4190, %v4095
      %4192 = vst.msk [vmem:[#allocation5 + $0x4] sm:$0xf] %vm4190, %v4097
      %4193 = vst.msk [vmem:[#allocation5 + $0x8] sm:$0xf] %vm4190, %v4099
      %4194 = vst.msk [vmem:[#allocation5 + $0xc] sm:$0xf] %vm4190, %v4101
      %4195 = vst.msk [vmem:[#allocation5 + $0x10] sm:$0xf] %vm4190, %v4103
      %4196 = vst.msk [vmem:[#allocation5 + $0x14] sm:$0xf] %vm4190, %v4105
      %4197 = vst.msk [vmem:[#allocation5 + $0x18] sm:$0xf] %vm4190, %v4107
      %4198 = vst.msk [vmem:[#allocation5 + $0x1c] sm:$0xf] %vm4190, %v4109
      %4199 = vst.msk [vmem:[#allocation5 + $0x20] sm:$0xf] %vm4190, %v4111
      %4200 = vst.msk [vmem:[#allocation5 + $0x24] sm:$0xf] %vm4190, %v4113
      %4201 = vst.msk [vmem:[#allocation5 + $0x28] sm:$0xf] %vm4190, %v4115
      %4202 = vst.msk [vmem:[#allocation5 + $0x2c] sm:$0xf] %vm4190, %v4117
      %4203 = vst.msk [vmem:[#allocation5 + $0x30] sm:$0xf] %vm4190, %v4119
      %4204 = vst.msk [vmem:[#allocation5 + $0x34] sm:$0xf] %vm4190, %v4121
      %4205 = vst.msk [vmem:[#allocation5 + $0x38] sm:$0xf] %vm4190, %v4123
      %4206 = vst.msk [vmem:[#allocation5 + $0x3c] sm:$0xf] %vm4190, %v4125
      %4207 = vst.msk [vmem:[#allocation5 + $0x40] sm:$0xf] %vm4190, %v4127
      %4208 = vst.msk [vmem:[#allocation5 + $0x44] sm:$0xf] %vm4190, %v4129
      %4209 = vst.msk [vmem:[#allocation5 + $0x48] sm:$0xf] %vm4190, %v4131
      %4210 = vst.msk [vmem:[#allocation5 + $0x4c] sm:$0xf] %vm4190, %v4133
      %4211 = vst.msk [vmem:[#allocation5 + $0x50] sm:$0xf] %vm4190, %v4135
      %4212 = vst.msk [vmem:[#allocation5 + $0x54] sm:$0xf] %vm4190, %v4137
      %4213 = vst.msk [vmem:[#allocation5 + $0x58] sm:$0xf] %vm4190, %v4139
      %4214 = vst.msk [vmem:[#allocation5 + $0x5c] sm:$0xf] %vm4190, %v4141
      %4215 = vst.msk [vmem:[#allocation5 + $0x60] sm:$0xf] %vm4190, %v4143
      %4216 = vst.msk [vmem:[#allocation5 + $0x64] sm:$0xf] %vm4190, %v4145
      %4217 = vst.msk [vmem:[#allocation5 + $0x68] sm:$0xf] %vm4190, %v4147
      %4218 = vst.msk [vmem:[#allocation5 + $0x6c] sm:$0xf] %vm4190, %v4149
      %4219 = vst.msk [vmem:[#allocation5 + $0x70] sm:$0xf] %vm4190, %v4151
      %4220 = vst.msk [vmem:[#allocation5 + $0x74] sm:$0xf] %vm4190, %v4153
      %4221 = vst.msk [vmem:[#allocation5 + $0x78] sm:$0xf] %vm4190, %v4155
      %4222 = vst.msk [vmem:[#allocation5 + $0x7c] sm:$0xf] %vm4190, %v4157
      %v4226 = vrot.slane %v2780, 1
      %v4227 = vrot.slane %v2781, 1
      %v4228 = vsel %vm664, %v4226, %v4227
      %v4229 = vrot.slane %v2782, 1
      %v4230 = vsel %vm664, %v4227, %v4229
      %v4233 = vpack.c.bf16 %v4230, %v4228
      %v4235 = vunpack.c.l.b16 %v4233
      %v4236 = vunpack.c.h.b16 %v4233
      %v4237 = vpack.c.b16 %v4235, %v4235
      %v4238 = vpack.c.b16 %v4236, %v4236
      %4239 = vrot.lane.b32.xlu0 %v3172, 56
      %v4240 = vpop.permute.xlu0 %4239
      %4241 = vrot.lane.b32.xlu0 %v3173, 56
      %v4242 = vpop.permute.xlu0 %4241
      %4243 = vrot.lane.b32.xlu0 %v3174, 56
      %v4244 = vpop.permute.xlu0 %4243
      %4245 = vrot.lane.b32.xlu0 %v3175, 56
      %v4246 = vpop.permute.xlu0 %4245
      %4247 = vrot.lane.b32.xlu0 %v3176, 56
      %v4248 = vpop.permute.xlu0 %4247
      %4249 = vrot.lane.b32.xlu0 %v3177, 56
      %v4250 = vpop.permute.xlu0 %4249
      %4251 = vrot.lane.b32.xlu0 %v3178, 56
      %v4252 = vpop.permute.xlu0 %4251
      %4253 = vrot.lane.b32.xlu0 %v3179, 56
      %v4254 = vpop.permute.xlu0 %4253
      %4255 = vrot.lane.b32.xlu0 %v3180, 56
      %v4256 = vpop.permute.xlu0 %4255
      %4257 = vrot.lane.b32.xlu0 %v3181, 56
      %v4258 = vpop.permute.xlu0 %4257
      %4259 = vrot.lane.b32.xlu0 %v3182, 56
      %v4260 = vpop.permute.xlu0 %4259
      %4261 = vrot.lane.b32.xlu0 %v3183, 56
      %v4262 = vpop.permute.xlu0 %4261
      %4263 = vrot.lane.b32.xlu0 %v3184, 56
      %v4264 = vpop.permute.xlu0 %4263
      %4265 = vrot.lane.b32.xlu0 %v3185, 56
      %v4266 = vpop.permute.xlu0 %4265
      %4267 = vrot.lane.b32.xlu0 %v3186, 56
      %v4268 = vpop.permute.xlu0 %4267
      %4269 = vrot.lane.b32.xlu0 %v3187, 56
      %v4270 = vpop.permute.xlu0 %4269
      %4271 = vrot.lane.b32.xlu0 %v3188, 56
      %v4272 = vpop.permute.xlu0 %4271
      %4273 = vrot.lane.b32.xlu0 %v3189, 56
      %v4274 = vpop.permute.xlu0 %4273
      %4275 = vrot.lane.b32.xlu0 %v3190, 56
      %v4276 = vpop.permute.xlu0 %4275
      %4277 = vrot.lane.b32.xlu0 %v3191, 56
      %v4278 = vpop.permute.xlu0 %4277
      %4279 = vrot.lane.b32.xlu0 %v3192, 56
      %v4280 = vpop.permute.xlu0 %4279
      %4281 = vrot.lane.b32.xlu0 %v3193, 56
      %v4282 = vpop.permute.xlu0 %4281
      %4283 = vrot.lane.b32.xlu0 %v3194, 56
      %v4284 = vpop.permute.xlu0 %4283
      %4285 = vrot.lane.b32.xlu0 %v3195, 56
      %v4286 = vpop.permute.xlu0 %4285
      %4287 = vrot.lane.b32.xlu0 %v3196, 56
      %v4288 = vpop.permute.xlu0 %4287
      %4289 = vrot.lane.b32.xlu0 %v3197, 56
      %v4290 = vpop.permute.xlu0 %4289
      %4291 = vrot.lane.b32.xlu0 %v3198, 56
      %v4292 = vpop.permute.xlu0 %4291
      %4293 = vrot.lane.b32.xlu0 %v3199, 56
      %v4294 = vpop.permute.xlu0 %4293
      %4295 = vrot.lane.b32.xlu0 %v3815, 56
      %v4296 = vpop.permute.xlu0 %4295
      %4297 = vrot.lane.b32.xlu0 %v3816, 56
      %v4298 = vpop.permute.xlu0 %4297
      %4299 = vrot.lane.b32.xlu0 %v4237, 56
      %v4300 = vpop.permute.xlu0 %4299
      %4301 = vrot.lane.b32.xlu0 %v4238, 56
      %v4302 = vpop.permute.xlu0 %4301
      %vm4335 = vcmask 519616
      %4336 = vst.msk [vmem:[#allocation5] sm:$0xf] %vm4335, %v4240
      %4337 = vst.msk [vmem:[#allocation5 + $0x4] sm:$0xf] %vm4335, %v4242
      %4338 = vst.msk [vmem:[#allocation5 + $0x8] sm:$0xf] %vm4335, %v4244
      %4339 = vst.msk [vmem:[#allocation5 + $0xc] sm:$0xf] %vm4335, %v4246
      %4340 = vst.msk [vmem:[#allocation5 + $0x10] sm:$0xf] %vm4335, %v4248
      %4341 = vst.msk [vmem:[#allocation5 + $0x14] sm:$0xf] %vm4335, %v4250
      %4342 = vst.msk [vmem:[#allocation5 + $0x18] sm:$0xf] %vm4335, %v4252
      %4343 = vst.msk [vmem:[#allocation5 + $0x1c] sm:$0xf] %vm4335, %v4254
      %4344 = vst.msk [vmem:[#allocation5 + $0x20] sm:$0xf] %vm4335, %v4256
      %4345 = vst.msk [vmem:[#allocation5 + $0x24] sm:$0xf] %vm4335, %v4258
      %4346 = vst.msk [vmem:[#allocation5 + $0x28] sm:$0xf] %vm4335, %v4260
      %4347 = vst.msk [vmem:[#allocation5 + $0x2c] sm:$0xf] %vm4335, %v4262
      %4348 = vst.msk [vmem:[#allocation5 + $0x30] sm:$0xf] %vm4335, %v4264
      %4349 = vst.msk [vmem:[#allocation5 + $0x34] sm:$0xf] %vm4335, %v4266
      %4350 = vst.msk [vmem:[#allocation5 + $0x38] sm:$0xf] %vm4335, %v4268
      %4351 = vst.msk [vmem:[#allocation5 + $0x3c] sm:$0xf] %vm4335, %v4270
      %4352 = vst.msk [vmem:[#allocation5 + $0x40] sm:$0xf] %vm4335, %v4272
      %4353 = vst.msk [vmem:[#allocation5 + $0x44] sm:$0xf] %vm4335, %v4274
      %4354 = vst.msk [vmem:[#allocation5 + $0x48] sm:$0xf] %vm4335, %v4276
      %4355 = vst.msk [vmem:[#allocation5 + $0x4c] sm:$0xf] %vm4335, %v4278
      %4356 = vst.msk [vmem:[#allocation5 + $0x50] sm:$0xf] %vm4335, %v4280
      %4357 = vst.msk [vmem:[#allocation5 + $0x54] sm:$0xf] %vm4335, %v4282
      %4358 = vst.msk [vmem:[#allocation5 + $0x58] sm:$0xf] %vm4335, %v4284
      %4359 = vst.msk [vmem:[#allocation5 + $0x5c] sm:$0xf] %vm4335, %v4286
      %4360 = vst.msk [vmem:[#allocation5 + $0x60] sm:$0xf] %vm4335, %v4288
      %4361 = vst.msk [vmem:[#allocation5 + $0x64] sm:$0xf] %vm4335, %v4290
      %4362 = vst.msk [vmem:[#allocation5 + $0x68] sm:$0xf] %vm4335, %v4292
      %4363 = vst.msk [vmem:[#allocation5 + $0x6c] sm:$0xf] %vm4335, %v4294
      %4364 = vst.msk [vmem:[#allocation5 + $0x70] sm:$0xf] %vm4335, %v4296
      %4365 = vst.msk [vmem:[#allocation5 + $0x74] sm:$0xf] %vm4335, %v4298
      %4366 = vst.msk [vmem:[#allocation5 + $0x78] sm:$0xf] %vm4335, %v4300
      %4367 = vst.msk [vmem:[#allocation5 + $0x7c] sm:$0xf] %vm4335, %v4302
      %v4368 = vrot.slane %v2780, 2
      %v4369 = vrot.slane %v2781, 2
      %v4370 = vsel %vm1002, %v4368, %v4369
      %v4371 = vrot.slane %v2782, 2
      %v4372 = vsel %vm1002, %v4369, %v4371
      %v4375 = vpack.c.bf16 %v4372, %v4370
      %v4377 = vunpack.c.l.b16 %v4375
      %v4378 = vunpack.c.h.b16 %v4375
      %v4379 = vpack.c.b16 %v4377, %v4377
      %v4380 = vpack.c.b16 %v4378, %v4378
      %4381 = vrot.lane.b32.xlu0 %v3509, 64
      %v4382 = vpop.permute.xlu0 %4381
      %4383 = vrot.lane.b32.xlu0 %v3510, 64
      %v4384 = vpop.permute.xlu0 %4383
      %4385 = vrot.lane.b32.xlu0 %v3511, 64
      %v4386 = vpop.permute.xlu0 %4385
      %4387 = vrot.lane.b32.xlu0 %v3512, 64
      %v4388 = vpop.permute.xlu0 %4387
      %4389 = vrot.lane.b32.xlu0 %v3513, 64
      %v4390 = vpop.permute.xlu0 %4389
      %4391 = vrot.lane.b32.xlu0 %v3514, 64
      %v4392 = vpop.permute.xlu0 %4391
      %4393 = vrot.lane.b32.xlu0 %v3515, 64
      %v4394 = vpop.permute.xlu0 %4393
      %4395 = vrot.lane.b32.xlu0 %v3516, 64
      %v4396 = vpop.permute.xlu0 %4395
      %4397 = vrot.lane.b32.xlu0 %v3517, 64
      %v4398 = vpop.permute.xlu0 %4397
      %4399 = vrot.lane.b32.xlu0 %v3518, 64
      %v4400 = vpop.permute.xlu0 %4399
      %4401 = vrot.lane.b32.xlu0 %v3519, 64
      %v4402 = vpop.permute.xlu0 %4401
      %4403 = vrot.lane.b32.xlu0 %v3520, 64
      %v4404 = vpop.permute.xlu0 %4403
      %4405 = vrot.lane.b32.xlu0 %v3521, 64
      %v4406 = vpop.permute.xlu0 %4405
      %4407 = vrot.lane.b32.xlu0 %v3522, 64
      %v4408 = vpop.permute.xlu0 %4407
      %4409 = vrot.lane.b32.xlu0 %v3523, 64
      %v4410 = vpop.permute.xlu0 %4409
      %4411 = vrot.lane.b32.xlu0 %v3524, 64
      %v4412 = vpop.permute.xlu0 %4411
      %4413 = vrot.lane.b32.xlu0 %v3525, 64
      %v4414 = vpop.permute.xlu0 %4413
      %4415 = vrot.lane.b32.xlu0 %v3526, 64
      %v4416 = vpop.permute.xlu0 %4415
      %4417 = vrot.lane.b32.xlu0 %v3527, 64
      %v4418 = vpop.permute.xlu0 %4417
      %4419 = vrot.lane.b32.xlu0 %v3528, 64
      %v4420 = vpop.permute.xlu0 %4419
      %4421 = vrot.lane.b32.xlu0 %v3529, 64
      %v4422 = vpop.permute.xlu0 %4421
      %4423 = vrot.lane.b32.xlu0 %v3530, 64
      %v4424 = vpop.permute.xlu0 %4423
      %4425 = vrot.lane.b32.xlu0 %v3531, 64
      %v4426 = vpop.permute.xlu0 %4425
      %4427 = vrot.lane.b32.xlu0 %v3532, 64
      %v4428 = vpop.permute.xlu0 %4427
      %4429 = vrot.lane.b32.xlu0 %v3533, 64
      %v4430 = vpop.permute.xlu0 %4429
      %4431 = vrot.lane.b32.xlu0 %v3534, 64
      %v4432 = vpop.permute.xlu0 %4431
      %4433 = vrot.lane.b32.xlu0 %v3535, 64
      %v4434 = vpop.permute.xlu0 %4433
      %4435 = vrot.lane.b32.xlu0 %v3536, 64
      %v4436 = vpop.permute.xlu0 %4435
      %4437 = vrot.lane.b32.xlu0 %v3957, 64
      %v4438 = vpop.permute.xlu0 %4437
      %4439 = vrot.lane.b32.xlu0 %v3958, 64
      %v4440 = vpop.permute.xlu0 %4439
      %4441 = vrot.lane.b32.xlu0 %v4379, 64
      %v4442 = vpop.permute.xlu0 %4441
      %4443 = vrot.lane.b32.xlu0 %v4380, 64
      %v4444 = vpop.permute.xlu0 %4443
      %vm4477 = vcmask 585216
      %4478 = vst.msk [vmem:[#allocation5] sm:$0xf] %vm4477, %v4382
      %4479 = vst.msk [vmem:[#allocation5 + $0x4] sm:$0xf] %vm4477, %v4384
      %4480 = vst.msk [vmem:[#allocation5 + $0x8] sm:$0xf] %vm4477, %v4386
      %4481 = vst.msk [vmem:[#allocation5 + $0xc] sm:$0xf] %vm4477, %v4388
      %4482 = vst.msk [vmem:[#allocation5 + $0x10] sm:$0xf] %vm4477, %v4390
      %4483 = vst.msk [vmem:[#allocation5 + $0x14] sm:$0xf] %vm4477, %v4392
      %4484 = vst.msk [vmem:[#allocation5 + $0x18] sm:$0xf] %vm4477, %v4394
      %4485 = vst.msk [vmem:[#allocation5 + $0x1c] sm:$0xf] %vm4477, %v4396
      %4486 = vst.msk [vmem:[#allocation5 + $0x20] sm:$0xf] %vm4477, %v4398
      %4487 = vst.msk [vmem:[#allocation5 + $0x24] sm:$0xf] %vm4477, %v4400
      %4488 = vst.msk [vmem:[#allocation5 + $0x28] sm:$0xf] %vm4477, %v4402
      %4489 = vst.msk [vmem:[#allocation5 + $0x2c] sm:$0xf] %vm4477, %v4404
      %4490 = vst.msk [vmem:[#allocation5 + $0x30] sm:$0xf] %vm4477, %v4406
      %4491 = vst.msk [vmem:[#allocation5 + $0x34] sm:$0xf] %vm4477, %v4408
      %4492 = vst.msk [vmem:[#allocation5 + $0x38] sm:$0xf] %vm4477, %v4410
      %4493 = vst.msk [vmem:[#allocation5 + $0x3c] sm:$0xf] %vm4477, %v4412
      %4494 = vst.msk [vmem:[#allocation5 + $0x40] sm:$0xf] %vm4477, %v4414
      %4495 = vst.msk [vmem:[#allocation5 + $0x44] sm:$0xf] %vm4477, %v4416
      %4496 = vst.msk [vmem:[#allocation5 + $0x48] sm:$0xf] %vm4477, %v4418
      %4497 = vst.msk [vmem:[#allocation5 + $0x4c] sm:$0xf] %vm4477, %v4420
      %4498 = vst.msk [vmem:[#allocation5 + $0x50] sm:$0xf] %vm4477, %v4422
      %4499 = vst.msk [vmem:[#allocation5 + $0x54] sm:$0xf] %vm4477, %v4424
      %4500 = vst.msk [vmem:[#allocation5 + $0x58] sm:$0xf] %vm4477, %v4426
      %4501 = vst.msk [vmem:[#allocation5 + $0x5c] sm:$0xf] %vm4477, %v4428
      %4502 = vst.msk [vmem:[#allocation5 + $0x60] sm:$0xf] %vm4477, %v4430
      %4503 = vst.msk [vmem:[#allocation5 + $0x64] sm:$0xf] %vm4477, %v4432
      %4504 = vst.msk [vmem:[#allocation5 + $0x68] sm:$0xf] %vm4477, %v4434
      %4505 = vst.msk [vmem:[#allocation5 + $0x6c] sm:$0xf] %vm4477, %v4436
      %4506 = vst.msk [vmem:[#allocation5 + $0x70] sm:$0xf] %vm4477, %v4438
      %4507 = vst.msk [vmem:[#allocation5 + $0x74] sm:$0xf] %vm4477, %v4440
      %4508 = vst.msk [vmem:[#allocation5 + $0x78] sm:$0xf] %vm4477, %v4442
      %4509 = vst.msk [vmem:[#allocation5 + $0x7c] sm:$0xf] %vm4477, %v4444
      %v4510 = vld [vmem:[#allocation5] sm:$0xf]
      %v4511 = vld [vmem:[#allocation5 + $0x4] sm:$0xf]
      %v4512 = vld [vmem:[#allocation5 + $0x8] sm:$0xf]
      %v4513 = vld [vmem:[#allocation5 + $0xc] sm:$0xf]
      %v4514 = vld [vmem:[#allocation5 + $0x10] sm:$0xf]
      %v4515 = vld [vmem:[#allocation5 + $0x14] sm:$0xf]
      %v4516 = vld [vmem:[#allocation5 + $0x18] sm:$0xf]
      %v4517 = vld [vmem:[#allocation5 + $0x1c] sm:$0xf]
      %v4518 = vld [vmem:[#allocation5 + $0x20] sm:$0xf]
      %v4519 = vld [vmem:[#allocation5 + $0x24] sm:$0xf]
      %v4520 = vld [vmem:[#allocation5 + $0x28] sm:$0xf]
      %v4521 = vld [vmem:[#allocation5 + $0x2c] sm:$0xf]
      %v4522 = vld [vmem:[#allocation5 + $0x30] sm:$0xf]
      %v4523 = vld [vmem:[#allocation5 + $0x34] sm:$0xf]
      %v4524 = vld [vmem:[#allocation5 + $0x38] sm:$0xf]
      %v4525 = vld [vmem:[#allocation5 + $0x3c] sm:$0xf]
      %v4526 = vld [vmem:[#allocation5 + $0x40] sm:$0xf]
      %v4527 = vld [vmem:[#allocation5 + $0x44] sm:$0xf]
      %v4528 = vld [vmem:[#allocation5 + $0x48] sm:$0xf]
      %v4529 = vld [vmem:[#allocation5 + $0x4c] sm:$0xf]
      %v4530 = vld [vmem:[#allocation5 + $0x50] sm:$0xf]
      %v4531 = vld [vmem:[#allocation5 + $0x54] sm:$0xf]
      %v4532 = vld [vmem:[#allocation5 + $0x58] sm:$0xf]
      %v4533 = vld [vmem:[#allocation5 + $0x5c] sm:$0xf]
      %v4534 = vld [vmem:[#allocation5 + $0x60] sm:$0xf]
      %v4535 = vld [vmem:[#allocation5 + $0x64] sm:$0xf]
      %v4536 = vld [vmem:[#allocation5 + $0x68] sm:$0xf]
      %v4537 = vld [vmem:[#allocation5 + $0x6c] sm:$0xf]
      %v4538 = vld [vmem:[#allocation5 + $0x70] sm:$0xf]
      %v4539 = vld [vmem:[#allocation5 + $0x74] sm:$0xf]
      %v4540 = vld [vmem:[#allocation5 + $0x78] sm:$0xf]
      %v4541 = vld [vmem:[#allocation5 + $0x7c] sm:$0xf]
      %v4542 = vld [vmem:[%s4] sm:$0xf]
      %v4543 = vld [vmem:[%s4 + $0x4] sm:$0xf]
      %v4544 = vld [vmem:[%s4 + $0x8] sm:$0xf]
      %v4545 = vld [vmem:[%s4 + $0xc] sm:$0xf]
      %v4546 = vld [vmem:[%s4 + $0x10] sm:$0xf]
      %v4547 = vld [vmem:[%s4 + $0x14] sm:$0xf]
      %v4548 = vld [vmem:[%s4 + $0x18] sm:$0xf]
      %v4549 = vld [vmem:[%s4 + $0x1c] sm:$0xf]
      %v4550 = vld [vmem:[%s4 + $0x20] sm:$0xf]
      %v4583 = vunpack.c.l.b16 %v4510
      %v4584 = vunpack.c.l.b16 %v4511
      %v4585 = vunpack.c.l.b16 %v4512
      %v4586 = vunpack.c.l.b16 %v4513
      %v4587 = vunpack.c.l.b16 %v4514
      %v4588 = vunpack.c.l.b16 %v4515
      %v4589 = vunpack.c.l.b16 %v4516
      %v4590 = vunpack.c.l.b16 %v4517
      %v4591 = vunpack.c.l.b16 %v4518
      %v4592 = vunpack.c.l.b16 %v4519
      %v4593 = vunpack.c.l.b16 %v4520
      %v4594 = vunpack.c.l.b16 %v4521
      %v4595 = vunpack.c.l.b16 %v4522
      %v4596 = vunpack.c.l.b16 %v4523
      %v4597 = vunpack.c.l.b16 %v4524
      %v4598 = vunpack.c.l.b16 %v4525
      %v4599 = vunpack.c.l.b16 %v4526
      %v4600 = vunpack.c.l.b16 %v4527
      %v4601 = vunpack.c.l.b16 %v4528
      %v4602 = vunpack.c.l.b16 %v4529
      %v4603 = vunpack.c.l.b16 %v4530
      %v4604 = vunpack.c.l.b16 %v4531
      %v4605 = vunpack.c.l.b16 %v4532
      %v4606 = vunpack.c.l.b16 %v4533
      %v4607 = vunpack.c.l.b16 %v4534
      %v4608 = vunpack.c.l.b16 %v4535
      %v4609 = vunpack.c.l.b16 %v4536
      %v4610 = vunpack.c.l.b16 %v4537
      %v4611 = vunpack.c.l.b16 %v4538
      %v4612 = vunpack.c.l.b16 %v4539
      %v4613 = vunpack.c.l.b16 %v4540
      %v4614 = vunpack.c.l.b16 %v4541
      %v4615 = vpack.c.b16 %v4584, %v4583
      %v4616 = vpack.c.b16 %v4586, %v4585
      %v4617 = vpack.c.b16 %v4588, %v4587
      %v4618 = vpack.c.b16 %v4590, %v4589
      %v4619 = vpack.c.b16 %v4592, %v4591
      %v4620 = vpack.c.b16 %v4594, %v4593
      %v4621 = vpack.c.b16 %v4596, %v4595
      %v4622 = vpack.c.b16 %v4598, %v4597
      %v4623 = vpack.c.b16 %v4600, %v4599
      %v4624 = vpack.c.b16 %v4602, %v4601
      %v4625 = vpack.c.b16 %v4604, %v4603
      %v4626 = vpack.c.b16 %v4606, %v4605
      %v4627 = vpack.c.b16 %v4608, %v4607
      %v4628 = vpack.c.b16 %v4610, %v4609
      %v4629 = vpack.c.b16 %v4612, %v4611
      %v4630 = vpack.c.b16 %v4614, %v4613
      %v4640 = vunpack.c.l.b16 %v4542
      %v4641 = vunpack.c.l.b16 %v4543
      %v4642 = vunpack.c.l.b16 %v4544
      %v4643 = vunpack.c.l.b16 %v4545
      %v4644 = vunpack.c.l.b16 %v4546
      %v4645 = vunpack.c.l.b16 %v4547
      %v4646 = vunpack.c.l.b16 %v4548
      %v4647 = vunpack.c.l.b16 %v4549
      %v4648 = vunpack.c.l.b16 %v4550
      %v4649 = vpack.c.b16 %v4641, %v4640
      %v4650 = vpack.c.b16 %v4643, %v4642
      %v4651 = vpack.c.b16 %v4645, %v4644
      %v4652 = vpack.c.b16 %v4647, %v4646
      %v4653 = vpack.c.b16 %v4648, %v4648
      %vm4658 = vcmask 588800
      %v4660 = vsel %vm4658, %v4615, 0
      %v4663 = vsel %vm4658, %v4616, 0
      %v4666 = vsel %vm4658, %v4617, 0
      %v4669 = vsel %vm4658, %v4618, 0
      %v4672 = vsel %vm4658, %v4619, 0
      %v4675 = vsel %vm4658, %v4620, 0
      %v4678 = vsel %vm4658, %v4621, 0
      %v4681 = vsel %vm4658, %v4622, 0
      %v4684 = vsel %vm4658, %v4623, 0
      %v4687 = vsel %vm4658, %v4624, 0
      %v4690 = vsel %vm4658, %v4625, 0
      %v4693 = vsel %vm4658, %v4626, 0
      %v4696 = vsel %vm4658, %v4627, 0
      %v4699 = vsel %vm4658, %v4628, 0
      %v4702 = vsel %vm4658, %v4629, 0
      %v4705 = vsel %vm4658, %v4630, 0
      %vm4707 = vcmask 1043456
      %v4709 = vsel %vm4707, %v4653, 0
      %4711 = vmatprep.subr.bf16.mxu0 0
      %4712 = vmatpush1.bf16.msra.mxu0 0
      %4713 = vmatprep.subr.bf16.mxu0 0
      %4714 = vmatpush1.bf16.msra.mxu0 0
      %4715 = vmatprep.subr.bf16.mxu0 0
      %4716 = vmatpush1.bf16.msra.mxu0 0
      %4717 = vmatprep.subr.bf16.mxu0 0
      %4718 = vmatpush1.bf16.msra.mxu0 %v4709
      %4719 = vmatprep.subr.bf16.mxu0 0
      %4720 = vmatpush1.bf16.msra.mxu0 %v4652
      %4721 = vmatprep.subr.bf16.mxu0 0
      %4722 = vmatpush1.bf16.msra.mxu0 %v4651
      %4723 = vmatprep.subr.bf16.mxu0 0
      %4724 = vmatpush1.bf16.msra.mxu0 %v4650
      %4725 = vmatprep.subr.bf16.mxu0 0
      %4726 = vmatpush1.bf16.msra.mxu0 %v4649
      %4727 = vmatprep.subr.bf16.mxu0 0
      %4728 = vmatpush2.bf16.msra.mxu0 0
      %4729 = vmatprep.subr.bf16.mxu0 0
      %4730 = vmatpush2.bf16.msra.mxu0 0
      %4731 = vmatprep.subr.bf16.mxu0 0
      %4732 = vmatpush2.bf16.msra.mxu0 0
      %4733 = vmatprep.subr.bf16.mxu0 0
      %4734 = vmatpush2.bf16.msra.mxu0 0
      %4735 = vmatprep.subr.bf16.mxu0 0
      %4736 = vmatpush2.bf16.msra.mxu0 0
      %4737 = vmatprep.subr.bf16.mxu0 0
      %4738 = vmatpush2.bf16.msra.mxu0 0
      %4739 = vmatprep.subr.bf16.mxu0 0
      %4740 = vmatpush2.bf16.msra.mxu0 0
      %4741 = vmatprep.subr.bf16.mxu0 0
      %4742 = vmatpush2.bf16.msra.mxu0 0
      %4743 = vmatprep.mubr.bf16.mxu0 0
      %4744 = vmatmul.mubr.bf16.gmra.mxu0 %v4660
      %v4745 = vpop.f32.mrf.mxu0
      %v4746 = vadd.f32 0.0, %v4745
      %v4747 = vpop.f32.mrf.mxu0
      %v4748 = vpop.f32.mrf.mxu0
      %v4749 = vadd.f32 0.0, %v4748
      %v4750 = vpop.f32.mrf.mxu0
      %4751 = vmatprep.mubr.bf16.mxu0 0
      %4752 = vmatmul.mubr.bf16.gmra.mxu0 %v4663
      %v4753 = vpop.f32.mrf.mxu0
      %v4754 = vadd.f32 0.0, %v4753
      %v4755 = vpop.f32.mrf.mxu0
      %v4756 = vpop.f32.mrf.mxu0
      %v4757 = vadd.f32 0.0, %v4756
      %v4758 = vpop.f32.mrf.mxu0
      %4759 = vmatprep.mubr.bf16.mxu0 0
      %4760 = vmatmul.mubr.bf16.gmra.mxu0 %v4666
      %v4761 = vpop.f32.mrf.mxu0
      %v4762 = vadd.f32 0.0, %v4761
      %v4763 = vpop.f32.mrf.mxu0
      %v4764 = vpop.f32.mrf.mxu0
      %v4765 = vadd.f32 0.0, %v4764
      %v4766 = vpop.f32.mrf.mxu0
      %4767 = vmatprep.mubr.bf16.mxu0 0
      %4768 = vmatmul.mubr.bf16.gmra.mxu0 %v4669
      %v4769 = vpop.f32.mrf.mxu0
      %v4770 = vadd.f32 0.0, %v4769
      %v4771 = vpop.f32.mrf.mxu0
      %v4772 = vpop.f32.mrf.mxu0
      %v4773 = vadd.f32 0.0, %v4772
      %v4774 = vpop.f32.mrf.mxu0
      %4775 = vmatprep.mubr.bf16.mxu0 0
      %4776 = vmatmul.mubr.bf16.gmra.mxu0 %v4672
      %v4777 = vpop.f32.mrf.mxu0
      %v4778 = vadd.f32 0.0, %v4777
      %v4779 = vpop.f32.mrf.mxu0
      %v4780 = vpop.f32.mrf.mxu0
      %v4781 = vadd.f32 0.0, %v4780
      %v4782 = vpop.f32.mrf.mxu0
      %4783 = vmatprep.mubr.bf16.mxu0 0
      %4784 = vmatmul.mubr.bf16.gmra.mxu0 %v4675
      %v4785 = vpop.f32.mrf.mxu0
      %v4786 = vadd.f32 0.0, %v4785
      %v4787 = vpop.f32.mrf.mxu0
      %v4788 = vpop.f32.mrf.mxu0
      %v4789 = vadd.f32 0.0, %v4788
      %v4790 = vpop.f32.mrf.mxu0
      %4791 = vmatprep.mubr.bf16.mxu0 0
      %4792 = vmatmul.mubr.bf16.gmra.mxu0 %v4678
      %v4793 = vpop.f32.mrf.mxu0
      %v4794 = vadd.f32 0.0, %v4793
      %v4795 = vpop.f32.mrf.mxu0
      %v4796 = vpop.f32.mrf.mxu0
      %v4797 = vadd.f32 0.0, %v4796
      %v4798 = vpop.f32.mrf.mxu0
      %4799 = vmatprep.mubr.bf16.mxu0 0
      %4800 = vmatmul.mubr.bf16.gmra.mxu0 %v4681
      %v4801 = vpop.f32.mrf.mxu0
      %v4802 = vadd.f32 0.0, %v4801
      %v4803 = vpop.f32.mrf.mxu0
      %v4804 = vpop.f32.mrf.mxu0
      %v4805 = vadd.f32 0.0, %v4804
      %v4806 = vpop.f32.mrf.mxu0
      %4807 = vmatprep.mubr.bf16.mxu0 0
      %4808 = vmatmul.mubr.bf16.gmra.mxu0 %v4684
      %v4809 = vpop.f32.mrf.mxu0
      %v4810 = vadd.f32 0.0, %v4809
      %v4811 = vpop.f32.mrf.mxu0
      %v4812 = vpop.f32.mrf.mxu0
      %v4813 = vadd.f32 0.0, %v4812
      %v4814 = vpop.f32.mrf.mxu0
      %4815 = vmatprep.mubr.bf16.mxu0 0
      %4816 = vmatmul.mubr.bf16.gmra.mxu0 %v4687
      %v4817 = vpop.f32.mrf.mxu0
      %v4818 = vadd.f32 0.0, %v4817
      %v4819 = vpop.f32.mrf.mxu0
      %v4820 = vpop.f32.mrf.mxu0
      %v4821 = vadd.f32 0.0, %v4820
      %v4822 = vpop.f32.mrf.mxu0
      %4823 = vmatprep.mubr.bf16.mxu0 0
      %4824 = vmatmul.mubr.bf16.gmra.mxu0 %v4690
      %v4825 = vpop.f32.mrf.mxu0
      %v4826 = vadd.f32 0.0, %v4825
      %v4827 = vpop.f32.mrf.mxu0
      %v4828 = vpop.f32.mrf.mxu0
      %v4829 = vadd.f32 0.0, %v4828
      %v4830 = vpop.f32.mrf.mxu0
      %4831 = vmatprep.mubr.bf16.mxu0 0
      %4832 = vmatmul.mubr.bf16.gmra.mxu0 %v4693
      %v4833 = vpop.f32.mrf.mxu0
      %v4834 = vadd.f32 0.0, %v4833
      %v4835 = vpop.f32.mrf.mxu0
      %v4836 = vpop.f32.mrf.mxu0
      %v4837 = vadd.f32 0.0, %v4836
      %v4838 = vpop.f32.mrf.mxu0
      %4839 = vmatprep.mubr.bf16.mxu0 0
      %4840 = vmatmul.mubr.bf16.gmra.mxu0 %v4696
      %v4841 = vpop.f32.mrf.mxu0
      %v4842 = vadd.f32 0.0, %v4841
      %v4843 = vpop.f32.mrf.mxu0
      %v4844 = vpop.f32.mrf.mxu0
      %v4845 = vadd.f32 0.0, %v4844
      %v4846 = vpop.f32.mrf.mxu0
      %4847 = vmatprep.mubr.bf16.mxu0 0
      %4848 = vmatmul.mubr.bf16.gmra.mxu0 %v4699
      %v4849 = vpop.f32.mrf.mxu0
      %v4850 = vadd.f32 0.0, %v4849
      %v4851 = vpop.f32.mrf.mxu0
      %v4852 = vpop.f32.mrf.mxu0
      %v4853 = vadd.f32 0.0, %v4852
      %v4854 = vpop.f32.mrf.mxu0
      %4855 = vmatprep.mubr.bf16.mxu0 0
      %4856 = vmatmul.mubr.bf16.gmra.mxu0 %v4702
      %v4857 = vpop.f32.mrf.mxu0
      %v4858 = vadd.f32 0.0, %v4857
      %v4859 = vpop.f32.mrf.mxu0
      %v4860 = vpop.f32.mrf.mxu0
      %v4861 = vadd.f32 0.0, %v4860
      %v4862 = vpop.f32.mrf.mxu0
      %4863 = vmatprep.mubr.bf16.mxu0 0
      %4864 = vmatmul.mubr.bf16.gmra.mxu0 %v4705
      %v4865 = vpop.f32.mrf.mxu0
      %v4866 = vadd.f32 0.0, %v4865
      %v4867 = vpop.f32.mrf.mxu0
      %v4868 = vpop.f32.mrf.mxu0
      %v4869 = vadd.f32 0.0, %v4868
      %v4870 = vpop.f32.mrf.mxu0
      %4871 = vdwg.mxu0
      %v4872 = vld [vmem:[%s5] sm:$0x1]
      %v4874 = vlaneseq
      %v4875 = vshrl.u32 %v4874, 7
      %v4876 = vsub.s32 0, %v4875
      %v4877 = vrot.slane %v4872, %v4876
      %v4879 = vmul.f32 %v4746, %v4877
      %v4880 = vmul.f32 %v4749, %v4877
      %v4881 = vmul.f32 %v4754, %v4877
      %v4882 = vmul.f32 %v4757, %v4877
      %v4883 = vmul.f32 %v4762, %v4877
      %v4884 = vmul.f32 %v4765, %v4877
      %v4885 = vmul.f32 %v4770, %v4877
      %v4886 = vmul.f32 %v4773, %v4877
      %v4887 = vmul.f32 %v4778, %v4877
      %v4888 = vmul.f32 %v4781, %v4877
      %v4889 = vmul.f32 %v4786, %v4877
      %v4890 = vmul.f32 %v4789, %v4877
      %v4891 = vmul.f32 %v4794, %v4877
      %v4892 = vmul.f32 %v4797, %v4877
      %v4893 = vmul.f32 %v4802, %v4877
      %v4894 = vmul.f32 %v4805, %v4877
      %v4895 = vmul.f32 %v4810, %v4877
      %v4896 = vmul.f32 %v4813, %v4877
      %v4897 = vmul.f32 %v4818, %v4877
      %v4898 = vmul.f32 %v4821, %v4877
      %v4899 = vmul.f32 %v4826, %v4877
      %v4900 = vmul.f32 %v4829, %v4877
      %v4901 = vmul.f32 %v4834, %v4877
      %v4902 = vmul.f32 %v4837, %v4877
      %v4903 = vmul.f32 %v4842, %v4877
      %v4904 = vmul.f32 %v4845, %v4877
      %v4905 = vmul.f32 %v4850, %v4877
      %v4906 = vmul.f32 %v4853, %v4877
      %v4907 = vmul.f32 %v4858, %v4877
      %v4908 = vmul.f32 %v4861, %v4877
      %v4909 = vmul.f32 %v4866, %v4877
      %v4910 = vmul.f32 %v4869, %v4877
      %v4911 = vld [vmem:[%s6] sm:$0x1]
      %v4913 = vlaneseq
      %v4914 = vshrl.u32 %v4913, 7
      %v4915 = vsub.s32 0, %v4914
      %v4916 = vrot.slane %v4911, %v4915
      %v4918 = vadd.f32 %v4879, %v4916
      %v4919 = vadd.f32 %v4880, %v4916
      %v4920 = vadd.f32 %v4881, %v4916
      %v4921 = vadd.f32 %v4882, %v4916
      %v4922 = vadd.f32 %v4883, %v4916
      %v4923 = vadd.f32 %v4884, %v4916
      %v4924 = vadd.f32 %v4885, %v4916
      %v4925 = vadd.f32 %v4886, %v4916
      %v4926 = vadd.f32 %v4887, %v4916
      %v4927 = vadd.f32 %v4888, %v4916
      %v4928 = vadd.f32 %v4889, %v4916
      %v4929 = vadd.f32 %v4890, %v4916
      %v4930 = vadd.f32 %v4891, %v4916
      %v4931 = vadd.f32 %v4892, %v4916
      %v4932 = vadd.f32 %v4893, %v4916
      %v4933 = vadd.f32 %v4894, %v4916
      %v4934 = vadd.f32 %v4895, %v4916
      %v4935 = vadd.f32 %v4896, %v4916
      %v4936 = vadd.f32 %v4897, %v4916
      %v4937 = vadd.f32 %v4898, %v4916
      %v4938 = vadd.f32 %v4899, %v4916
      %v4939 = vadd.f32 %v4900, %v4916
      %v4940 = vadd.f32 %v4901, %v4916
      %v4941 = vadd.f32 %v4902, %v4916
      %v4942 = vadd.f32 %v4903, %v4916
      %v4943 = vadd.f32 %v4904, %v4916
      %v4944 = vadd.f32 %v4905, %v4916
      %v4945 = vadd.f32 %v4906, %v4916
      %v4946 = vadd.f32 %v4907, %v4916
      %v4947 = vadd.f32 %v4908, %v4916
      %v4948 = vadd.f32 %v4909, %v4916
      %v4949 = vadd.f32 %v4910, %v4916
      %v4950 = vmax.f32 %v4918, 0.0
      %v4951 = vmax.f32 %v4919, 0.0
      %v4952 = vmax.f32 %v4920, 0.0
      %v4953 = vmax.f32 %v4921, 0.0
      %v4954 = vmax.f32 %v4922, 0.0
      %v4955 = vmax.f32 %v4923, 0.0
      %v4956 = vmax.f32 %v4924, 0.0
      %v4957 = vmax.f32 %v4925, 0.0
      %v4958 = vmax.f32 %v4926, 0.0
      %v4959 = vmax.f32 %v4927, 0.0
      %v4960 = vmax.f32 %v4928, 0.0
      %v4961 = vmax.f32 %v4929, 0.0
      %v4962 = vmax.f32 %v4930, 0.0
      %v4963 = vmax.f32 %v4931, 0.0
      %v4964 = vmax.f32 %v4932, 0.0
      %v4965 = vmax.f32 %v4933, 0.0
      %v4966 = vmax.f32 %v4934, 0.0
      %v4967 = vmax.f32 %v4935, 0.0
      %v4968 = vmax.f32 %v4936, 0.0
      %v4969 = vmax.f32 %v4937, 0.0
      %v4970 = vmax.f32 %v4938, 0.0
      %v4971 = vmax.f32 %v4939, 0.0
      %v4972 = vmax.f32 %v4940, 0.0
      %v4973 = vmax.f32 %v4941, 0.0
      %v4974 = vmax.f32 %v4942, 0.0
      %v4975 = vmax.f32 %v4943, 0.0
      %v4976 = vmax.f32 %v4944, 0.0
      %v4977 = vmax.f32 %v4945, 0.0
      %v4978 = vmax.f32 %v4946, 0.0
      %v4979 = vmax.f32 %v4947, 0.0
      %v4980 = vmax.f32 %v4948, 0.0
      %v4981 = vmax.f32 %v4949, 0.0
      %4982 = vst.msk [vmem:[%s278] sm:$0xff] %vm2640, %v4950
      %4983 = vst.msk [vmem:[%s278 + $0x8] sm:$0xff] %vm2640, %v4951
      %4984 = vst.msk [vmem:[%s278 + $0x10] sm:$0xff] %vm2640, %v4952
      %4985 = vst.msk [vmem:[%s278 + $0x18] sm:$0xff] %vm2640, %v4953
      %4986 = vst.msk [vmem:[%s278 + $0x20] sm:$0xff] %vm2640, %v4954
      %4987 = vst.msk [vmem:[%s278 + $0x28] sm:$0xff] %vm2640, %v4955
      %4988 = vst.msk [vmem:[%s278 + $0x30] sm:$0xff] %vm2640, %v4956
      %4989 = vst.msk [vmem:[%s278 + $0x38] sm:$0xff] %vm2640, %v4957
      %4990 = vst.msk [vmem:[%s278 + $0x40] sm:$0xff] %vm2640, %v4958
      %4991 = vst.msk [vmem:[%s278 + $0x48] sm:$0xff] %vm2640, %v4959
      %4992 = vst.msk [vmem:[%s278 + $0x50] sm:$0xff] %vm2640, %v4960
      %4993 = vst.msk [vmem:[%s278 + $0x58] sm:$0xff] %vm2640, %v4961
      %4994 = vst.msk [vmem:[%s278 + $0x60] sm:$0xff] %vm2640, %v4962
      %4995 = vst.msk [vmem:[%s278 + $0x68] sm:$0xff] %vm2640, %v4963
      %4996 = vst.msk [vmem:[%s278 + $0x70] sm:$0xff] %vm2640, %v4964
      %4997 = vst.msk [vmem:[%s278 + $0x78] sm:$0xff] %vm2640, %v4965
      %4998 = vst.msk [vmem:[%s278 + $0x80] sm:$0xff] %vm2640, %v4966
      %4999 = vst.msk [vmem:[%s278 + $0x88] sm:$0xff] %vm2640, %v4967
      %5000 = vst.msk [vmem:[%s278 + $0x90] sm:$0xff] %vm2640, %v4968
      %5001 = vst.msk [vmem:[%s278 + $0x98] sm:$0xff] %vm2640, %v4969
      %5002 = vst.msk [vmem:[%s278 + $0xa0] sm:$0xff] %vm2640, %v4970
      %5003 = vst.msk [vmem:[%s278 + $0xa8] sm:$0xff] %vm2640, %v4971
      %5004 = vst.msk [vmem:[%s278 + $0xb0] sm:$0xff] %vm2640, %v4972
      %5005 = vst.msk [vmem:[%s278 + $0xb8] sm:$0xff] %vm2640, %v4973
      %5006 = vst.msk [vmem:[%s278 + $0xc0] sm:$0xff] %vm2640, %v4974
      %5007 = vst.msk [vmem:[%s278 + $0xc8] sm:$0xff] %vm2640, %v4975
      %5008 = vst.msk [vmem:[%s278 + $0xd0] sm:$0xff] %vm2640, %v4976
      %5009 = vst.msk [vmem:[%s278 + $0xd8] sm:$0xff] %vm2640, %v4977
      %5010 = vst.msk [vmem:[%s278 + $0xe0] sm:$0xff] %vm2640, %v4978
      %5011 = vst.msk [vmem:[%s278 + $0xe8] sm:$0xff] %vm2640, %v4979
      %5012 = vst.msk [vmem:[%s278 + $0xf0] sm:$0xff] %vm2640, %v4980
      %5013 = vst.msk [vmem:[%s278 + $0xf8] sm:$0xff] %vm2640, %v4981
      %p5014 = scmp.lt.s32.totalorder %s18, 1
      %s5015 = scalar_select %p5014, %s18, 1
      %s5016 = smul.addr %s5015, 32
      %s5017 = smul.addr %s5016, 8
      %s5018 = scalar_lea.vmem %s7, %s5017
      // Predicated region
      $region49: #{double_conv_forward.1} parent=47 // pred_check
        %p5019 = pneg %p188
      $region50: #{double_conv_forward.1} parent=47 // pred_check_branch
        %5021 = sbr.rel (%p5019) target = $region52
      $region51: #{double_conv_forward.1} parent=47 // pred_region
        _
      $region52: #{double_conv_forward.1} parent=47 // pred_fallthru
        _
    $region48: #{double_conv_forward.1} parent=5 // pred_fallthru
      _
    %p5022 = scmp.le.s32.totalorder 2, %s13
    // Predicated region
    $region53: #{double_conv_forward.1} parent=5 // pred_check
      %p5023 = pneg %p5022
    $region54: #{double_conv_forward.1} parent=5 // pred_check_branch
      %5025 = sbr.rel (%p5023) target = $region56
    $region55: #{double_conv_forward.1} parent=5 // pred_region
      %s5026 = ssub.s32 %s13, 2
      // Predicated region
      $region57: #{double_conv_forward.1} parent=55 // pred_check
        %p5027 = pneg %p194
      $region58: #{double_conv_forward.1} parent=55 // pred_check_branch
        %5029 = sbr.rel (%p5027) target = $region60
      $region59: #{double_conv_forward.1} parent=55 // pred_region
        %p5030 = scmp.lt.s32.totalorder %s19, 1
        %s5031 = scalar_select %p5030, %s19, 1
        %s5032 = smul.addr %s5031, 32
        %s5033 = smul.addr %s5032, 8
        %s5034 = scalar_lea.vmem %s7, %s5033
      $region60: #{double_conv_forward.1} parent=55 // pred_fallthru
        _
    $region56: #{double_conv_forward.1} parent=5 // pred_fallthru
      _
  $region6: #{double_conv_forward.1} parent=0 // loop_footer
    %s17 = sadd.s32 1, %s13
  $region7: #{double_conv_forward.1} parent=0 // loop_footer_branch
    %12 = sbr.rel target = $region3
  $region8: #{double_conv_forward.1} parent=0 // loop_exit
    _

</llo_original>
